<compile_context>
chip_gen: v6e
topology: v6e:2x2x1
jax: 0.10.0
libtpu: 0.0.40
codegen_flags: <defaults>
</compile_context>

<pallas_src>
import math

import jax
import jax.numpy as jnp
import numpy as np
from jax.experimental import pallas as pl
from jax.experimental.pallas import tpu as pltpu


# ----------------------------------------------------------------------------
# Single fused kernel: (self-attn + BN1 + res) then (cross-attn + BN2 + res)
# for both spin streams, all intermediates kept in vregs/VMEM.
# ----------------------------------------------------------------------------
def make_fused_kernel(*, num_heads, head_dim, eps):
    E = num_heads * head_dim
    scale = 1.0 / math.sqrt(head_dim)

    def kernel(x_ref, bias_ref,
               wqkv1_ref, bqkv1_ref, wo1_ref, bo1_ref, g1_ref, bt1_ref,
               wqkv2_ref, bqkv2_ref, wo2_ref, bo2_ref, g2_ref, bt2_ref,
               o_ref):
        N = x_ref.shape[1]                      # N = B*S rows per stream
        inv_n = 1.0 / N
        bias = bias_ref[...]                    # [N, N] block-diag additive mask

        # Per-head full-lane-width masks, built once and reused by all four
        # attention calls.  The 1/sqrt(head_dim) scale is folded in here.
        lane = jax.lax.broadcasted_iota(jnp.int32, (1, E), 1)
        hmask, hmask_scaled = [], []
        for h in range(num_heads):
            m = ((lane >= h * head_dim) & (lane < (h + 1) * head_dim)
                 ).astype(jnp.float32)          # [1, E]
            hmask.append(m)
            hmask_scaled.append(m * scale)

        def mha(xq, xkv, wqkv, bqkv, wo, bo):
            # fused QKV projection: one MXU push with 3E output columns
            qkv_q = jnp.dot(xq, wqkv, preferred_element_type=jnp.float32) + bqkv
            if xkv is None:                     # self-attention: one projection
                qkv_kv = qkv_q
            else:
                qkv_kv = jnp.dot(xkv, wqkv,
                                 preferred_element_type=jnp.float32) + bqkv
            Q = qkv_q[:, 0:E]
            K = qkv_kv[:, E:2 * E]
            V = qkv_kv[:, 2 * E:3 * E]

            attn = jnp.zeros((N, E), jnp.float32)
            for h in range(num_heads):          # static loop (num_heads = 2)
                # Q K^T via dot_general on last dims (no explicit transpose);
                # scale already folded into the mask.
                s = jax.lax.dot_general(
                    Q * hmask_scaled[h], K, (((1,), (1,)), ((), ())),
                    preferred_element_type=jnp.float32) + bias
                s = s - jnp.max(s, axis=-1, keepdims=True)
                p = jnp.exp(s)
                p = p / jnp.sum(p, axis=-1, keepdims=True)   # exact reciprocal
                attn = attn + jnp.dot(p, V,
                                      preferred_element_type=jnp.float32) * hmask[h]
            return jnp.dot(attn, wo, preferred_element_type=jnp.float32) + bo

        def bn_res(y, res, gamma, beta):
            # Training-mode BatchNorm1d over the N = B*S rows, one-pass stats,
            # fused with the residual add (residual = pre-attention input).
            mean = jnp.sum(y, axis=0, keepdims=True) * inv_n
            meansq = jnp.sum(y * y, axis=0, keepdims=True) * inv_n
            var = meansq - mean * mean                      # biased (PyTorch)
            sc = gamma / jnp.sqrt(var + eps)                # exact, not rsqrt-approx
            return (y - mean) * sc + (beta + res)

        x_up = x_ref[0].astype(jnp.float32)     # [N, E]
        x_dn = x_ref[1].astype(jnp.float32)

        # ---- stage 1: self-attention + BN1 + residual (both streams) ----
        h_up = bn_res(mha(x_up, None,
                          wqkv1_ref[0], bqkv1_ref[0], wo1_ref[0], bo1_ref[0]),
                      x_up, g1_ref[0], bt1_ref[0])
        h_dn = bn_res(mha(x_dn, None,
                          wqkv1_ref[1], bqkv1_ref[1], wo1_ref[1], bo1_ref[1]),
                      x_dn, g1_ref[1], bt1_ref[1])

        # ---- stage 2: cross-attention (kv = other stream) + BN2 + residual ----
        # up:   q = h_up, kv = h_dn  (cross_attention_from_down_to_up)
        # down: q = h_dn, kv = h_up  (cross_attention_from_up_to_down)
        y_up = bn_res(mha(h_up, h_dn,
                          wqkv2_ref[0], bqkv2_ref[0], wo2_ref[0], bo2_ref[0]),
                      h_up, g2_ref[0], bt2_ref[0])
        y_dn = bn_res(mha(h_dn, h_up,
                          wqkv2_ref[1], bqkv2_ref[1], wo2_ref[1], bo2_ref[1]),
                      h_dn, g2_ref[1], bt2_ref[1])

        o_ref[0] = y_up.astype(o_ref.dtype)
        o_ref[1] = y_dn.astype(o_ref.dtype)

    return kernel


# ----------------------------------------------------------------------------
# Forward: exactly ONE pallas_call, no grid (single block, everything in VMEM)
# ----------------------------------------------------------------------------
def attention_layer_forward(spin_up, spin_down, packed, *, num_heads=2, eps=1e-5):
    B, S, E = spin_up.shape
    N = B * S
    # Single-block design: (2,N,E) activations + (N,N) scores live entirely in
    # VMEM/vregs.  Fine at this size on v5e/v6e/v7x; for larger N or E switch
    # to flash-style 128-lane-aligned tiling (re-derive for 64 MiB VMEM on v7x).
    assert N <= 512 and E <= 128, "single-block kernel: tile for larger shapes"

    x = jnp.stack([spin_up.reshape(N, E), spin_down.reshape(N, E)], axis=0)  # [2,N,E]

    kernel = make_fused_kernel(num_heads=num_heads, head_dim=E // num_heads, eps=eps)
    y = pl.pallas_call(
        kernel,
        out_shape=jax.ShapeDtypeStruct((2, N, E), spin_up.dtype),
    )(x, packed["batch_bias"],
      packed["wqkv1"], packed["bqkv1"], packed["wo1"], packed["bo1"],
      packed["g1"], packed["bt1"],
      packed["wqkv2"], packed["bqkv2"], packed["wo2"], packed["bo2"],
      packed["g2"], packed["bt2"])

    return y[0].reshape(B, S, E), y[1].reshape(B, S, E)


# ----------------------------------------------------------------------------
# One-time parameter packing (outside jit): stack per-stream weights + build
# the block-diagonal batch mask.
# ----------------------------------------------------------------------------
def pack_params(params, B, S):
    def stack_attn(n0, n1, field):
        return jnp.stack([params[n0][field], params[n1][field]], axis=0)

    idx = np.arange(B * S) // S
    batch_bias = np.where(idx[:, None] == idx[None, :], 0.0, -1e30).astype(np.float32)

    return dict(
        batch_bias=jnp.asarray(batch_bias),                       # [N, N]
        # stage 1 (self-attn): stream 0 = up, stream 1 = down
        wqkv1=stack_attn("sa_up", "sa_down", "w_qkv"),            # [2, E, 3E]
        bqkv1=stack_attn("sa_up", "sa_down", "b_qkv"),            # [2, 1, 3E]
        wo1=stack_attn("sa_up", "sa_down", "w_o"),                # [2, E, E]
        bo1=stack_attn("sa_up", "sa_down", "b_o"),                # [2, 1, E]
        g1=jnp.stack([params["bn_up1"][0], params["bn_down1"][0]], axis=0),
        bt1=jnp.stack([params["bn_up1"][1], params["bn_down1"][1]], axis=0),
        # stage 2 (cross-attn): stream 0 uses ca_d2u (q=up, kv=down), stream 1 ca_u2d
        wqkv2=stack_attn("ca_d2u", "ca_u2d", "w_qkv"),
        bqkv2=stack_attn("ca_d2u", "ca_u2d", "b_qkv"),
        wo2=stack_attn("ca_d2u", "ca_u2d", "w_o"),
        bo2=stack_attn("ca_d2u", "ca_u2d", "b_o"),
        g2=jnp.stack([params["bn_up2"][0], params["bn_down2"][0]], axis=0),
        bt2=jnp.stack([params["bn_up2"][1], params["bn_down2"][1]], axis=0),
    )


# ----------------------------------------------------------------------------
# Pure-JAX reference (same math, no Pallas) for verification
# ----------------------------------------------------------------------------
def mha_ref(q, kv, p, num_heads=2):
    B, S, E = q.shape
    hd = E // num_heads
    w_qkv, b_qkv = p["w_qkv"], p["b_qkv"]
    Q = q @ w_qkv[:, :E] + b_qkv[:, :E]
    K = kv @ w_qkv[:, E:2 * E] + b_qkv[:, E:2 * E]
    V = kv @ w_qkv[:, 2 * E:] + b_qkv[:, 2 * E:]
    Qh = Q.reshape(B, S, num_heads, hd).transpose(0, 2, 1, 3)
    Kh = K.reshape(B, -1, num_heads, hd).transpose(0, 2, 1, 3)
    Vh = V.reshape(B, -1, num_heads, hd).transpose(0, 2, 1, 3)
    s = jnp.einsum("bhqd,bhkd->bhqk", Qh, Kh) / math.sqrt(hd)
    pr = jax.nn.softmax(s, axis=-1)
    o = jnp.einsum("bhqk,bhkd->bhqd", pr, Vh)
    o = o.transpose(0, 2, 1, 3).reshape(B, S, E)
    return o @ p["w_o"] + p["b_o"]


def bn_add_ref(x, res, gamma, beta, eps=1e-5):
    B, S, E = x.shape
    x2 = x.reshape(B * S, E)
    mean = x2.mean(axis=0, keepdims=True)
    var = ((x2 - mean) ** 2).mean(axis=0, keepdims=True)
    xn = (x2 - mean) / jnp.sqrt(var + eps)
    return (xn * gamma + beta).reshape(B, S, E) + res


def forward_ref(spin_up, spin_down, params):
    ru, rd = spin_up, spin_down
    su = mha_ref(spin_up, spin_up, params["sa_up"])
    sd = mha_ref(spin_down, spin_down, params["sa_down"])
    su = bn_add_ref(su, ru, *params["bn_up1"])
    sd = bn_add_ref(sd, rd, *params["bn_down1"])
    ru, rd = su, sd
    nu = mha_ref(su, sd, params["ca_d2u"])
    nd = mha_ref(sd, su, params["ca_u2d"])
    su = bn_add_ref(nu, ru, *params["bn_up2"])
    sd = bn_add_ref(nd, rd, *params["bn_down2"])
    return su, sd


# ----------------------------------------------------------------------------
# Deterministic parameter init (fused QKV layout)
# ----------------------------------------------------------------------------
def init_attn_params(key, E):
    ks = jax.random.split(key, 8)
    w = lambda k, shape: 0.2 * jax.random.normal(k, shape, jnp.float32)
    b = lambda k, shape: 0.05 * jax.random.normal(k, shape, jnp.float32)
    w_qkv = jnp.concatenate([w(ks[0], (E, E)), w(ks[1], (E, E)), w(ks[2], (E, E))], axis=1)
    b_qkv = jnp.concatenate([b(ks[4], (1, E)), b(ks[5], (1, E)), b(ks[6], (1, E))], axis=1)
    return dict(w_qkv=w_qkv, b_qkv=b_qkv, w_o=w(ks[3], (E, E)), b_o=b(ks[7], (1, E)))


def init_bn_params(key, E):
    k1, k2 = jax.random.split(key)
    gamma = 1.0 + 0.1 * jax.random.normal(k1, (1, E), jnp.float32)
    beta = 0.1 * jax.random.normal(k2, (1, E), jnp.float32)
    return (gamma, beta)


def init_params(key, E):
    ks = jax.random.split(key, 8)
    return dict(
        sa_up=init_attn_params(ks[0], E),
        sa_down=init_attn_params(ks[1], E),
        ca_d2u=init_attn_params(ks[2], E),
        ca_u2d=init_attn_params(ks[3], E),
        bn_up1=init_bn_params(ks[4], E),
        bn_up2=init_bn_params(ks[5], E),
        bn_down1=init_bn_params(ks[6], E),
        bn_down2=init_bn_params(ks[7], E),
    )


if __name__ == "__main__":
    B, S, E = 2, 8, 32          # batch, seq, emb_size (2 heads -> head_dim 16)
    key = jax.random.PRNGKey(0)
    k_up, k_dn, k_par = jax.random.split(key, 3)
    spin_up = jax.random.normal(k_up, (B, S, E), jnp.float32)
    spin_down = jax.random.normal(k_dn, (B, S, E), jnp.float32)
    params = init_params(k_par, E)
    packed = pack_params(params, B, S)          # packed ONCE, outside jit

    fwd = jax.jit(attention_layer_forward)
    out_up, out_down = fwd(spin_up, spin_down, packed)
    out_up = jax.block_until_ready(out_up)
    out_down = jax.block_until_ready(out_down)

    ref_up, ref_down = forward_ref(spin_up, spin_down, params)
    np.testing.assert_allclose(np.asarray(out_up), np.asarray(ref_up),
                               rtol=2e-3, atol=2e-3)
    np.testing.assert_allclose(np.asarray(out_down), np.asarray(ref_down),
                               rtol=2e-3, atol=2e-3)

    print("KERNEL_OK")
</pallas_src>

<mosaic_0001>
module attributes {stable_mosaic.version = 11 : i64} {
  func.func @kernel(%arg0: memref<2x16x32xf32, #tpu.memory_space<vmem>>, %arg1: memref<16x16xf32, #tpu.memory_space<vmem>>, %arg2: memref<2x32x96xf32, #tpu.memory_space<vmem>>, %arg3: memref<2x1x96xf32, #tpu.memory_space<vmem>>, %arg4: memref<2x32x32xf32, #tpu.memory_space<vmem>>, %arg5: memref<2x1x32xf32, #tpu.memory_space<vmem>>, %arg6: memref<2x1x32xf32, #tpu.memory_space<vmem>>, %arg7: memref<2x1x32xf32, #tpu.memory_space<vmem>>, %arg8: memref<2x32x96xf32, #tpu.memory_space<vmem>>, %arg9: memref<2x1x96xf32, #tpu.memory_space<vmem>>, %arg10: memref<2x32x32xf32, #tpu.memory_space<vmem>>, %arg11: memref<2x1x32xf32, #tpu.memory_space<vmem>>, %arg12: memref<2x1x32xf32, #tpu.memory_space<vmem>>, %arg13: memref<2x1x32xf32, #tpu.memory_space<vmem>>, %arg14: memref<2x16x32xf32, #tpu.memory_space<vmem>>) attributes {dimension_semantics = [], scalar_prefetch = 0 : i64, scratch_operands = 0 : i64, tpu.core_type = #tpu.core_type<tc>} {
    %c0 = arith.constant 0 : index
    %c0_0 = arith.constant 0 : index
    %0 = vector.load %arg1[%c0, %c0_0] : memref<16x16xf32, #tpu.memory_space<vmem>>, vector<16x16xf32>
    %1 = tpu.iota {dimensions = array<i32: 1>} : vector<1x32xi32>
    %c0_i32 = arith.constant 0 : i32
    %2 = vector.broadcast %c0_i32 : i32 to vector<1x32xi32>
    %3 = arith.cmpi sge, %1, %2 : vector<1x32xi32>
    %c16_i32 = arith.constant 16 : i32
    %4 = vector.broadcast %c16_i32 : i32 to vector<1x32xi32>
    %5 = arith.cmpi slt, %1, %4 : vector<1x32xi32>
    %6 = arith.andi %3, %5 : vector<1x32xi1>
    %7 = arith.extui %6 : vector<1x32xi1> to vector<1x32xi32>
    %8 = arith.sitofp %7 : vector<1x32xi32> to vector<1x32xf32>
    %cst = arith.constant 2.500000e-01 : f32
    %9 = vector.broadcast %cst : f32 to vector<1x32xf32>
    %10 = arith.mulf %8, %9 : vector<1x32xf32>
    %c16_i32_1 = arith.constant 16 : i32
    %11 = vector.broadcast %c16_i32_1 : i32 to vector<1x32xi32>
    %12 = arith.cmpi sge, %1, %11 : vector<1x32xi32>
    %c32_i32 = arith.constant 32 : i32
    %13 = vector.broadcast %c32_i32 : i32 to vector<1x32xi32>
    %14 = arith.cmpi slt, %1, %13 : vector<1x32xi32>
    %15 = arith.andi %12, %14 : vector<1x32xi1>
    %16 = arith.extui %15 : vector<1x32xi1> to vector<1x32xi32>
    %17 = arith.sitofp %16 : vector<1x32xi32> to vector<1x32xf32>
    %cst_2 = arith.constant 2.500000e-01 : f32
    %18 = vector.broadcast %cst_2 : f32 to vector<1x32xf32>
    %19 = arith.mulf %17, %18 : vector<1x32xf32>
    %c0_3 = arith.constant 0 : index
    %c0_4 = arith.constant 0 : index
    %c0_5 = arith.constant 0 : index
    %20 = vector.load %arg0[%c0_3, %c0_4, %c0_5] : memref<2x16x32xf32, #tpu.memory_space<vmem>>, vector<1x16x32xf32>
    %21 = vector.shape_cast %20 : vector<1x16x32xf32> to vector<16x32xf32>
    %c1 = arith.constant 1 : index
    %c0_6 = arith.constant 0 : index
    %c0_7 = arith.constant 0 : index
    %22 = vector.load %arg0[%c1, %c0_6, %c0_7] : memref<2x16x32xf32, #tpu.memory_space<vmem>>, vector<1x16x32xf32>
    %23 = vector.shape_cast %22 : vector<1x16x32xf32> to vector<16x32xf32>
    %c0_8 = arith.constant 0 : index
    %c0_9 = arith.constant 0 : index
    %c0_10 = arith.constant 0 : index
    %24 = vector.load %arg2[%c0_8, %c0_9, %c0_10] : memref<2x32x96xf32, #tpu.memory_space<vmem>>, vector<1x32x96xf32>
    %25 = vector.shape_cast %24 : vector<1x32x96xf32> to vector<32x96xf32>
    %c0_11 = arith.constant 0 : index
    %c0_12 = arith.constant 0 : index
    %c0_13 = arith.constant 0 : index
    %26 = vector.load %arg3[%c0_11, %c0_12, %c0_13] : memref<2x1x96xf32, #tpu.memory_space<vmem>>, vector<1x1x96xf32>
    %27 = vector.shape_cast %26 : vector<1x1x96xf32> to vector<1x96xf32>
    %c0_14 = arith.constant 0 : index
    %c0_15 = arith.constant 0 : index
    %c0_16 = arith.constant 0 : index
    %28 = vector.load %arg4[%c0_14, %c0_15, %c0_16] : memref<2x32x32xf32, #tpu.memory_space<vmem>>, vector<1x32x32xf32>
    %29 = vector.shape_cast %28 : vector<1x32x32xf32> to vector<32x32xf32>
    %c0_17 = arith.constant 0 : index
    %c0_18 = arith.constant 0 : index
    %c0_19 = arith.constant 0 : index
    %30 = vector.load %arg5[%c0_17, %c0_18, %c0_19] : memref<2x1x32xf32, #tpu.memory_space<vmem>>, vector<1x1x32xf32>
    %31 = vector.shape_cast %30 : vector<1x1x32xf32> to vector<1x32xf32>
    %cst_20 = arith.constant dense<0.000000e+00> : vector<16x96xf32>
    %32 = tpu.matmul %21, %25, %cst_20 {dimension_numbers = #tpu.dot_dimension_numbers<[1], [0], [0], [1], [0, 0, 1, 1], [], []>} : vector<16x32xf32>, vector<32x96xf32>, vector<16x96xf32> -> vector<16x96xf32>
    %33 = vector.broadcast %27 : vector<1x96xf32> to vector<16x96xf32>
    %34 = arith.addf %32, %33 : vector<16x96xf32>
    %35 = vector.extract_strided_slice %34 {offsets = [0, 0], sizes = [16, 32], strides = [1, 1]} : vector<16x96xf32> to vector<16x32xf32>
    %36 = vector.extract_strided_slice %34 {offsets = [0, 32], sizes = [16, 32], strides = [1, 1]} : vector<16x96xf32> to vector<16x32xf32>
    %37 = vector.extract_strided_slice %34 {offsets = [0, 64], sizes = [16, 32], strides = [1, 1]} : vector<16x96xf32> to vector<16x32xf32>
    %cst_21 = arith.constant 0.000000e+00 : f32
    %38 = vector.broadcast %cst_21 : f32 to vector<16x32xf32>
    %39 = vector.broadcast %10 : vector<1x32xf32> to vector<16x32xf32>
    %40 = arith.mulf %35, %39 : vector<16x32xf32>
    %cst_22 = arith.constant dense<0.000000e+00> : vector<16x16xf32>
    %41 = tpu.matmul %40, %36, %cst_22 {dimension_numbers = #tpu.dot_dimension_numbers<[1], [1], [0], [0], [0, 0, 1, 0], [], []>} : vector<16x32xf32>, vector<16x32xf32>, vector<16x16xf32> -> vector<16x16xf32>
    %42 = arith.addf %41, %0 : vector<16x16xf32>
    %cst_23 = arith.constant dense<0xFF800000> : vector<16xf32>
    %43 = vector.multi_reduction <maximumf>, %42, %cst_23 [1] : vector<16x16xf32> to vector<16xf32>
    %44 = vector.shape_cast %43 : vector<16xf32> to vector<16x1xf32>
    %45 = vector.broadcast %44 : vector<16x1xf32> to vector<16x16xf32>
    %46 = arith.subf %42, %45 : vector<16x16xf32>
    %47 = math.exp %46 : vector<16x16xf32>
    %cst_24 = arith.constant dense<0.000000e+00> : vector<16xf32>
    %48 = vector.multi_reduction <add>, %47, %cst_24 [1] : vector<16x16xf32> to vector<16xf32>
    %49 = vector.shape_cast %48 : vector<16xf32> to vector<16x1xf32>
    %50 = vector.broadcast %49 : vector<16x1xf32> to vector<16x16xf32>
    %51 = arith.divf %47, %50 : vector<16x16xf32>
    %cst_25 = arith.constant dense<0.000000e+00> : vector<16x32xf32>
    %52 = tpu.matmul %51, %37, %cst_25 {dimension_numbers = #tpu.dot_dimension_numbers<[1], [0], [0], [1], [0, 0, 1, 1], [], []>} : vector<16x16xf32>, vector<16x32xf32>, vector<16x32xf32> -> vector<16x32xf32>
    %53 = vector.broadcast %8 : vector<1x32xf32> to vector<16x32xf32>
    %54 = arith.mulf %52, %53 : vector<16x32xf32>
    %55 = arith.addf %38, %54 : vector<16x32xf32>
    %56 = vector.broadcast %19 : vector<1x32xf32> to vector<16x32xf32>
    %57 = arith.mulf %35, %56 : vector<16x32xf32>
    %cst_26 = arith.constant dense<0.000000e+00> : vector<16x16xf32>
    %58 = tpu.matmul %57, %36, %cst_26 {dimension_numbers = #tpu.dot_dimension_numbers<[1], [1], [0], [0], [0, 0, 1, 0], [], []>} : vector<16x32xf32>, vector<16x32xf32>, vector<16x16xf32> -> vector<16x16xf32>
    %59 = arith.addf %58, %0 : vector<16x16xf32>
    %cst_27 = arith.constant dense<0xFF800000> : vector<16xf32>
    %60 = vector.multi_reduction <maximumf>, %59, %cst_27 [1] : vector<16x16xf32> to vector<16xf32>
    %61 = vector.shape_cast %60 : vector<16xf32> to vector<16x1xf32>
    %62 = vector.broadcast %61 : vector<16x1xf32> to vector<16x16xf32>
    %63 = arith.subf %59, %62 : vector<16x16xf32>
    %64 = math.exp %63 : vector<16x16xf32>
    %cst_28 = arith.constant dense<0.000000e+00> : vector<16xf32>
    %65 = vector.multi_reduction <add>, %64, %cst_28 [1] : vector<16x16xf32> to vector<16xf32>
    %66 = vector.shape_cast %65 : vector<16xf32> to vector<16x1xf32>
    %67 = vector.broadcast %66 : vector<16x1xf32> to vector<16x16xf32>
    %68 = arith.divf %64, %67 : vector<16x16xf32>
    %cst_29 = arith.constant dense<0.000000e+00> : vector<16x32xf32>
    %69 = tpu.matmul %68, %37, %cst_29 {dimension_numbers = #tpu.dot_dimension_numbers<[1], [0], [0], [1], [0, 0, 1, 1], [], []>} : vector<16x16xf32>, vector<16x32xf32>, vector<16x32xf32> -> vector<16x32xf32>
    %70 = vector.broadcast %17 : vector<1x32xf32> to vector<16x32xf32>
    %71 = arith.mulf %69, %70 : vector<16x32xf32>
    %72 = arith.addf %55, %71 : vector<16x32xf32>
    %cst_30 = arith.constant dense<0.000000e+00> : vector<16x32xf32>
    %73 = tpu.matmul %72, %29, %cst_30 {dimension_numbers = #tpu.dot_dimension_numbers<[1], [0], [0], [1], [0, 0, 1, 1], [], []>} : vector<16x32xf32>, vector<32x32xf32>, vector<16x32xf32> -> vector<16x32xf32>
    %74 = vector.broadcast %31 : vector<1x32xf32> to vector<16x32xf32>
    %75 = arith.addf %73, %74 : vector<16x32xf32>
    %c0_31 = arith.constant 0 : index
    %c0_32 = arith.constant 0 : index
    %c0_33 = arith.constant 0 : index
    %76 = vector.load %arg6[%c0_31, %c0_32, %c0_33] : memref<2x1x32xf32, #tpu.memory_space<vmem>>, vector<1x1x32xf32>
    %77 = vector.shape_cast %76 : vector<1x1x32xf32> to vector<1x32xf32>
    %c0_34 = arith.constant 0 : index
    %c0_35 = arith.constant 0 : index
    %c0_36 = arith.constant 0 : index
    %78 = vector.load %arg7[%c0_34, %c0_35, %c0_36] : memref<2x1x32xf32, #tpu.memory_space<vmem>>, vector<1x1x32xf32>
    %79 = vector.shape_cast %78 : vector<1x1x32xf32> to vector<1x32xf32>
    %cst_37 = arith.constant dense<0.000000e+00> : vector<32xf32>
    %80 = vector.multi_reduction <add>, %75, %cst_37 [0] : vector<16x32xf32> to vector<32xf32>
    %81 = vector.shape_cast %80 : vector<32xf32> to vector<1x32xf32>
    %cst_38 = arith.constant 6.250000e-02 : f32
    %82 = vector.broadcast %cst_38 : f32 to vector<1x32xf32>
    %83 = arith.mulf %81, %82 : vector<1x32xf32>
    %84 = arith.mulf %75, %75 : vector<16x32xf32>
    %cst_39 = arith.constant dense<0.000000e+00> : vector<32xf32>
    %85 = vector.multi_reduction <add>, %84, %cst_39 [0] : vector<16x32xf32> to vector<32xf32>
    %86 = vector.shape_cast %85 : vector<32xf32> to vector<1x32xf32>
    %cst_40 = arith.constant 6.250000e-02 : f32
    %87 = vector.broadcast %cst_40 : f32 to vector<1x32xf32>
    %88 = arith.mulf %86, %87 : vector<1x32xf32>
    %89 = arith.mulf %83, %83 : vector<1x32xf32>
    %90 = arith.subf %88, %89 : vector<1x32xf32>
    %cst_41 = arith.constant 9.99999974E-6 : f32
    %91 = vector.broadcast %cst_41 : f32 to vector<1x32xf32>
    %92 = arith.addf %90, %91 : vector<1x32xf32>
    %93 = math.sqrt %92 : vector<1x32xf32>
    %94 = arith.divf %77, %93 : vector<1x32xf32>
    %95 = vector.broadcast %83 : vector<1x32xf32> to vector<16x32xf32>
    %96 = arith.subf %75, %95 : vector<16x32xf32>
    %97 = vector.broadcast %94 : vector<1x32xf32> to vector<16x32xf32>
    %98 = arith.mulf %96, %97 : vector<16x32xf32>
    %99 = vector.broadcast %79 : vector<1x32xf32> to vector<16x32xf32>
    %100 = arith.addf %99, %21 : vector<16x32xf32>
    %101 = arith.addf %98, %100 : vector<16x32xf32>
    %c1_42 = arith.constant 1 : index
    %c0_43 = arith.constant 0 : index
    %c0_44 = arith.constant 0 : index
    %102 = vector.load %arg2[%c1_42, %c0_43, %c0_44] : memref<2x32x96xf32, #tpu.memory_space<vmem>>, vector<1x32x96xf32>
    %103 = vector.shape_cast %102 : vector<1x32x96xf32> to vector<32x96xf32>
    %c1_45 = arith.constant 1 : index
    %c0_46 = arith.constant 0 : index
    %c0_47 = arith.constant 0 : index
    %104 = vector.load %arg3[%c1_45, %c0_46, %c0_47] : memref<2x1x96xf32, #tpu.memory_space<vmem>>, vector<1x1x96xf32>
    %105 = vector.shape_cast %104 : vector<1x1x96xf32> to vector<1x96xf32>
    %c1_48 = arith.constant 1 : index
    %c0_49 = arith.constant 0 : index
    %c0_50 = arith.constant 0 : index
    %106 = vector.load %arg4[%c1_48, %c0_49, %c0_50] : memref<2x32x32xf32, #tpu.memory_space<vmem>>, vector<1x32x32xf32>
    %107 = vector.shape_cast %106 : vector<1x32x32xf32> to vector<32x32xf32>
    %c1_51 = arith.constant 1 : index
    %c0_52 = arith.constant 0 : index
    %c0_53 = arith.constant 0 : index
    %108 = vector.load %arg5[%c1_51, %c0_52, %c0_53] : memref<2x1x32xf32, #tpu.memory_space<vmem>>, vector<1x1x32xf32>
    %109 = vector.shape_cast %108 : vector<1x1x32xf32> to vector<1x32xf32>
    %cst_54 = arith.constant dense<0.000000e+00> : vector<16x96xf32>
    %110 = tpu.matmul %23, %103, %cst_54 {dimension_numbers = #tpu.dot_dimension_numbers<[1], [0], [0], [1], [0, 0, 1, 1], [], []>} : vector<16x32xf32>, vector<32x96xf32>, vector<16x96xf32> -> vector<16x96xf32>
    %111 = vector.broadcast %105 : vector<1x96xf32> to vector<16x96xf32>
    %112 = arith.addf %110, %111 : vector<16x96xf32>
    %113 = vector.extract_strided_slice %112 {offsets = [0, 0], sizes = [16, 32], strides = [1, 1]} : vector<16x96xf32> to vector<16x32xf32>
    %114 = vector.extract_strided_slice %112 {offsets = [0, 32], sizes = [16, 32], strides = [1, 1]} : vector<16x96xf32> to vector<16x32xf32>
    %115 = vector.extract_strided_slice %112 {offsets = [0, 64], sizes = [16, 32], strides = [1, 1]} : vector<16x96xf32> to vector<16x32xf32>
    %cst_55 = arith.constant 0.000000e+00 : f32
    %116 = vector.broadcast %cst_55 : f32 to vector<16x32xf32>
    %117 = vector.broadcast %10 : vector<1x32xf32> to vector<16x32xf32>
    %118 = arith.mulf %113, %117 : vector<16x32xf32>
    %cst_56 = arith.constant dense<0.000000e+00> : vector<16x16xf32>
    %119 = tpu.matmul %118, %114, %cst_56 {dimension_numbers = #tpu.dot_dimension_numbers<[1], [1], [0], [0], [0, 0, 1, 0], [], []>} : vector<16x32xf32>, vector<16x32xf32>, vector<16x16xf32> -> vector<16x16xf32>
    %120 = arith.addf %119, %0 : vector<16x16xf32>
    %cst_57 = arith.constant dense<0xFF800000> : vector<16xf32>
    %121 = vector.multi_reduction <maximumf>, %120, %cst_57 [1] : vector<16x16xf32> to vector<16xf32>
    %122 = vector.shape_cast %121 : vector<16xf32> to vector<16x1xf32>
    %123 = vector.broadcast %122 : vector<16x1xf32> to vector<16x16xf32>
    %124 = arith.subf %120, %123 : vector<16x16xf32>
    %125 = math.exp %124 : vector<16x16xf32>
    %cst_58 = arith.constant dense<0.000000e+00> : vector<16xf32>
    %126 = vector.multi_reduction <add>, %125, %cst_58 [1] : vector<16x16xf32> to vector<16xf32>
    %127 = vector.shape_cast %126 : vector<16xf32> to vector<16x1xf32>
    %128 = vector.broadcast %127 : vector<16x1xf32> to vector<16x16xf32>
    %129 = arith.divf %125, %128 : vector<16x16xf32>
    %cst_59 = arith.constant dense<0.000000e+00> : vector<16x32xf32>
    %130 = tpu.matmul %129, %115, %cst_59 {dimension_numbers = #tpu.dot_dimension_numbers<[1], [0], [0], [1], [0, 0, 1, 1], [], []>} : vector<16x16xf32>, vector<16x32xf32>, vector<16x32xf32> -> vector<16x32xf32>
    %131 = vector.broadcast %8 : vector<1x32xf32> to vector<16x32xf32>
    %132 = arith.mulf %130, %131 : vector<16x32xf32>
    %133 = arith.addf %116, %132 : vector<16x32xf32>
    %134 = vector.broadcast %19 : vector<1x32xf32> to vector<16x32xf32>
    %135 = arith.mulf %113, %134 : vector<16x32xf32>
    %cst_60 = arith.constant dense<0.000000e+00> : vector<16x16xf32>
    %136 = tpu.matmul %135, %114, %cst_60 {dimension_numbers = #tpu.dot_dimension_numbers<[1], [1], [0], [0], [0, 0, 1, 0], [], []>} : vector<16x32xf32>, vector<16x32xf32>, vector<16x16xf32> -> vector<16x16xf32>
    %137 = arith.addf %136, %0 : vector<16x16xf32>
    %cst_61 = arith.constant dense<0xFF800000> : vector<16xf32>
    %138 = vector.multi_reduction <maximumf>, %137, %cst_61 [1] : vector<16x16xf32> to vector<16xf32>
    %139 = vector.shape_cast %138 : vector<16xf32> to vector<16x1xf32>
    %140 = vector.broadcast %139 : vector<16x1xf32> to vector<16x16xf32>
    %141 = arith.subf %137, %140 : vector<16x16xf32>
    %142 = math.exp %141 : vector<16x16xf32>
    %cst_62 = arith.constant dense<0.000000e+00> : vector<16xf32>
    %143 = vector.multi_reduction <add>, %142, %cst_62 [1] : vector<16x16xf32> to vector<16xf32>
    %144 = vector.shape_cast %143 : vector<16xf32> to vector<16x1xf32>
    %145 = vector.broadcast %144 : vector<16x1xf32> to vector<16x16xf32>
    %146 = arith.divf %142, %145 : vector<16x16xf32>
    %cst_63 = arith.constant dense<0.000000e+00> : vector<16x32xf32>
    %147 = tpu.matmul %146, %115, %cst_63 {dimension_numbers = #tpu.dot_dimension_numbers<[1], [0], [0], [1], [0, 0, 1, 1], [], []>} : vector<16x16xf32>, vector<16x32xf32>, vector<16x32xf32> -> vector<16x32xf32>
    %148 = vector.broadcast %17 : vector<1x32xf32> to vector<16x32xf32>
    %149 = arith.mulf %147, %148 : vector<16x32xf32>
    %150 = arith.addf %133, %149 : vector<16x32xf32>
    %cst_64 = arith.constant dense<0.000000e+00> : vector<16x32xf32>
    %151 = tpu.matmul %150, %107, %cst_64 {dimension_numbers = #tpu.dot_dimension_numbers<[1], [0], [0], [1], [0, 0, 1, 1], [], []>} : vector<16x32xf32>, vector<32x32xf32>, vector<16x32xf32> -> vector<16x32xf32>
    %152 = vector.broadcast %109 : vector<1x32xf32> to vector<16x32xf32>
    %153 = arith.addf %151, %152 : vector<16x32xf32>
    %c1_65 = arith.constant 1 : index
    %c0_66 = arith.constant 0 : index
    %c0_67 = arith.constant 0 : index
    %154 = vector.load %arg6[%c1_65, %c0_66, %c0_67] : memref<2x1x32xf32, #tpu.memory_space<vmem>>, vector<1x1x32xf32>
    %155 = vector.shape_cast %154 : vector<1x1x32xf32> to vector<1x32xf32>
    %c1_68 = arith.constant 1 : index
    %c0_69 = arith.constant 0 : index
    %c0_70 = arith.constant 0 : index
    %156 = vector.load %arg7[%c1_68, %c0_69, %c0_70] : memref<2x1x32xf32, #tpu.memory_space<vmem>>, vector<1x1x32xf32>
    %157 = vector.shape_cast %156 : vector<1x1x32xf32> to vector<1x32xf32>
    %cst_71 = arith.constant dense<0.000000e+00> : vector<32xf32>
    %158 = vector.multi_reduction <add>, %153, %cst_71 [0] : vector<16x32xf32> to vector<32xf32>
    %159 = vector.shape_cast %158 : vector<32xf32> to vector<1x32xf32>
    %cst_72 = arith.constant 6.250000e-02 : f32
    %160 = vector.broadcast %cst_72 : f32 to vector<1x32xf32>
    %161 = arith.mulf %159, %160 : vector<1x32xf32>
    %162 = arith.mulf %153, %153 : vector<16x32xf32>
    %cst_73 = arith.constant dense<0.000000e+00> : vector<32xf32>
    %163 = vector.multi_reduction <add>, %162, %cst_73 [0] : vector<16x32xf32> to vector<32xf32>
    %164 = vector.shape_cast %163 : vector<32xf32> to vector<1x32xf32>
    %cst_74 = arith.constant 6.250000e-02 : f32
    %165 = vector.broadcast %cst_74 : f32 to vector<1x32xf32>
    %166 = arith.mulf %164, %165 : vector<1x32xf32>
    %167 = arith.mulf %161, %161 : vector<1x32xf32>
    %168 = arith.subf %166, %167 : vector<1x32xf32>
    %cst_75 = arith.constant 9.99999974E-6 : f32
    %169 = vector.broadcast %cst_75 : f32 to vector<1x32xf32>
    %170 = arith.addf %168, %169 : vector<1x32xf32>
    %171 = math.sqrt %170 : vector<1x32xf32>
    %172 = arith.divf %155, %171 : vector<1x32xf32>
    %173 = vector.broadcast %161 : vector<1x32xf32> to vector<16x32xf32>
    %174 = arith.subf %153, %173 : vector<16x32xf32>
    %175 = vector.broadcast %172 : vector<1x32xf32> to vector<16x32xf32>
    %176 = arith.mulf %174, %175 : vector<16x32xf32>
    %177 = vector.broadcast %157 : vector<1x32xf32> to vector<16x32xf32>
    %178 = arith.addf %177, %23 : vector<16x32xf32>
    %179 = arith.addf %176, %178 : vector<16x32xf32>
    %c0_76 = arith.constant 0 : index
    %c0_77 = arith.constant 0 : index
    %c0_78 = arith.constant 0 : index
    %180 = vector.load %arg8[%c0_76, %c0_77, %c0_78] : memref<2x32x96xf32, #tpu.memory_space<vmem>>, vector<1x32x96xf32>
    %181 = vector.shape_cast %180 : vector<1x32x96xf32> to vector<32x96xf32>
    %c0_79 = arith.constant 0 : index
    %c0_80 = arith.constant 0 : index
    %c0_81 = arith.constant 0 : index
    %182 = vector.load %arg9[%c0_79, %c0_80, %c0_81] : memref<2x1x96xf32, #tpu.memory_space<vmem>>, vector<1x1x96xf32>
    %183 = vector.shape_cast %182 : vector<1x1x96xf32> to vector<1x96xf32>
    %c0_82 = arith.constant 0 : index
    %c0_83 = arith.constant 0 : index
    %c0_84 = arith.constant 0 : index
    %184 = vector.load %arg10[%c0_82, %c0_83, %c0_84] : memref<2x32x32xf32, #tpu.memory_space<vmem>>, vector<1x32x32xf32>
    %185 = vector.shape_cast %184 : vector<1x32x32xf32> to vector<32x32xf32>
    %c0_85 = arith.constant 0 : index
    %c0_86 = arith.constant 0 : index
    %c0_87 = arith.constant 0 : index
    %186 = vector.load %arg11[%c0_85, %c0_86, %c0_87] : memref<2x1x32xf32, #tpu.memory_space<vmem>>, vector<1x1x32xf32>
    %187 = vector.shape_cast %186 : vector<1x1x32xf32> to vector<1x32xf32>
    %cst_88 = arith.constant dense<0.000000e+00> : vector<16x96xf32>
    %188 = tpu.matmul %101, %181, %cst_88 {dimension_numbers = #tpu.dot_dimension_numbers<[1], [0], [0], [1], [0, 0, 1, 1], [], []>} : vector<16x32xf32>, vector<32x96xf32>, vector<16x96xf32> -> vector<16x96xf32>
    %189 = vector.broadcast %183 : vector<1x96xf32> to vector<16x96xf32>
    %190 = arith.addf %188, %189 : vector<16x96xf32>
    %cst_89 = arith.constant dense<0.000000e+00> : vector<16x96xf32>
    %191 = tpu.matmul %179, %181, %cst_89 {dimension_numbers = #tpu.dot_dimension_numbers<[1], [0], [0], [1], [0, 0, 1, 1], [], []>} : vector<16x32xf32>, vector<32x96xf32>, vector<16x96xf32> -> vector<16x96xf32>
    %192 = vector.broadcast %183 : vector<1x96xf32> to vector<16x96xf32>
    %193 = arith.addf %191, %192 : vector<16x96xf32>
    %194 = vector.extract_strided_slice %190 {offsets = [0, 0], sizes = [16, 32], strides = [1, 1]} : vector<16x96xf32> to vector<16x32xf32>
    %195 = vector.extract_strided_slice %193 {offsets = [0, 32], sizes = [16, 32], strides = [1, 1]} : vector<16x96xf32> to vector<16x32xf32>
    %196 = vector.extract_strided_slice %193 {offsets = [0, 64], sizes = [16, 32], strides = [1, 1]} : vector<16x96xf32> to vector<16x32xf32>
    %cst_90 = arith.constant 0.000000e+00 : f32
    %197 = vector.broadcast %cst_90 : f32 to vector<16x32xf32>
    %198 = vector.broadcast %10 : vector<1x32xf32> to vector<16x32xf32>
    %199 = arith.mulf %194, %198 : vector<16x32xf32>
    %cst_91 = arith.constant dense<0.000000e+00> : vector<16x16xf32>
    %200 = tpu.matmul %199, %195, %cst_91 {dimension_numbers = #tpu.dot_dimension_numbers<[1], [1], [0], [0], [0, 0, 1, 0], [], []>} : vector<16x32xf32>, vector<16x32xf32>, vector<16x16xf32> -> vector<16x16xf32>
    %201 = arith.addf %200, %0 : vector<16x16xf32>
    %cst_92 = arith.constant dense<0xFF800000> : vector<16xf32>
    %202 = vector.multi_reduction <maximumf>, %201, %cst_92 [1] : vector<16x16xf32> to vector<16xf32>
    %203 = vector.shape_cast %202 : vector<16xf32> to vector<16x1xf32>
    %204 = vector.broadcast %203 : vector<16x1xf32> to vector<16x16xf32>
    %205 = arith.subf %201, %204 : vector<16x16xf32>
    %206 = math.exp %205 : vector<16x16xf32>
    %cst_93 = arith.constant dense<0.000000e+00> : vector<16xf32>
    %207 = vector.multi_reduction <add>, %206, %cst_93 [1] : vector<16x16xf32> to vector<16xf32>
    %208 = vector.shape_cast %207 : vector<16xf32> to vector<16x1xf32>
    %209 = vector.broadcast %208 : vector<16x1xf32> to vector<16x16xf32>
    %210 = arith.divf %206, %209 : vector<16x16xf32>
    %cst_94 = arith.constant dense<0.000000e+00> : vector<16x32xf32>
    %211 = tpu.matmul %210, %196, %cst_94 {dimension_numbers = #tpu.dot_dimension_numbers<[1], [0], [0], [1], [0, 0, 1, 1], [], []>} : vector<16x16xf32>, vector<16x32xf32>, vector<16x32xf32> -> vector<16x32xf32>
    %212 = vector.broadcast %8 : vector<1x32xf32> to vector<16x32xf32>
    %213 = arith.mulf %211, %212 : vector<16x32xf32>
    %214 = arith.addf %197, %213 : vector<16x32xf32>
    %215 = vector.broadcast %19 : vector<1x32xf32> to vector<16x32xf32>
    %216 = arith.mulf %194, %215 : vector<16x32xf32>
    %cst_95 = arith.constant dense<0.000000e+00> : vector<16x16xf32>
    %217 = tpu.matmul %216, %195, %cst_95 {dimension_numbers = #tpu.dot_dimension_numbers<[1], [1], [0], [0], [0, 0, 1, 0], [], []>} : vector<16x32xf32>, vector<16x32xf32>, vector<16x16xf32> -> vector<16x16xf32>
    %218 = arith.addf %217, %0 : vector<16x16xf32>
    %cst_96 = arith.constant dense<0xFF800000> : vector<16xf32>
    %219 = vector.multi_reduction <maximumf>, %218, %cst_96 [1] : vector<16x16xf32> to vector<16xf32>
    %220 = vector.shape_cast %219 : vector<16xf32> to vector<16x1xf32>
    %221 = vector.broadcast %220 : vector<16x1xf32> to vector<16x16xf32>
    %222 = arith.subf %218, %221 : vector<16x16xf32>
    %223 = math.exp %222 : vector<16x16xf32>
    %cst_97 = arith.constant dense<0.000000e+00> : vector<16xf32>
    %224 = vector.multi_reduction <add>, %223, %cst_97 [1] : vector<16x16xf32> to vector<16xf32>
    %225 = vector.shape_cast %224 : vector<16xf32> to vector<16x1xf32>
    %226 = vector.broadcast %225 : vector<16x1xf32> to vector<16x16xf32>
    %227 = arith.divf %223, %226 : vector<16x16xf32>
    %cst_98 = arith.constant dense<0.000000e+00> : vector<16x32xf32>
    %228 = tpu.matmul %227, %196, %cst_98 {dimension_numbers = #tpu.dot_dimension_numbers<[1], [0], [0], [1], [0, 0, 1, 1], [], []>} : vector<16x16xf32>, vector<16x32xf32>, vector<16x32xf32> -> vector<16x32xf32>
    %229 = vector.broadcast %17 : vector<1x32xf32> to vector<16x32xf32>
    %230 = arith.mulf %228, %229 : vector<16x32xf32>
    %231 = arith.addf %214, %230 : vector<16x32xf32>
    %cst_99 = arith.constant dense<0.000000e+00> : vector<16x32xf32>
    %232 = tpu.matmul %231, %185, %cst_99 {dimension_numbers = #tpu.dot_dimension_numbers<[1], [0], [0], [1], [0, 0, 1, 1], [], []>} : vector<16x32xf32>, vector<32x32xf32>, vector<16x32xf32> -> vector<16x32xf32>
    %233 = vector.broadcast %187 : vector<1x32xf32> to vector<16x32xf32>
    %234 = arith.addf %232, %233 : vector<16x32xf32>
    %c0_100 = arith.constant 0 : index
    %c0_101 = arith.constant 0 : index
    %c0_102 = arith.constant 0 : index
    %235 = vector.load %arg12[%c0_100, %c0_101, %c0_102] : memref<2x1x32xf32, #tpu.memory_space<vmem>>, vector<1x1x32xf32>
    %236 = vector.shape_cast %235 : vector<1x1x32xf32> to vector<1x32xf32>
    %c0_103 = arith.constant 0 : index
    %c0_104 = arith.constant 0 : index
    %c0_105 = arith.constant 0 : index
    %237 = vector.load %arg13[%c0_103, %c0_104, %c0_105] : memref<2x1x32xf32, #tpu.memory_space<vmem>>, vector<1x1x32xf32>
    %238 = vector.shape_cast %237 : vector<1x1x32xf32> to vector<1x32xf32>
    %cst_106 = arith.constant dense<0.000000e+00> : vector<32xf32>
    %239 = vector.multi_reduction <add>, %234, %cst_106 [0] : vector<16x32xf32> to vector<32xf32>
    %240 = vector.shape_cast %239 : vector<32xf32> to vector<1x32xf32>
    %cst_107 = arith.constant 6.250000e-02 : f32
    %241 = vector.broadcast %cst_107 : f32 to vector<1x32xf32>
    %242 = arith.mulf %240, %241 : vector<1x32xf32>
    %243 = arith.mulf %234, %234 : vector<16x32xf32>
    %cst_108 = arith.constant dense<0.000000e+00> : vector<32xf32>
    %244 = vector.multi_reduction <add>, %243, %cst_108 [0] : vector<16x32xf32> to vector<32xf32>
    %245 = vector.shape_cast %244 : vector<32xf32> to vector<1x32xf32>
    %cst_109 = arith.constant 6.250000e-02 : f32
    %246 = vector.broadcast %cst_109 : f32 to vector<1x32xf32>
    %247 = arith.mulf %245, %246 : vector<1x32xf32>
    %248 = arith.mulf %242, %242 : vector<1x32xf32>
    %249 = arith.subf %247, %248 : vector<1x32xf32>
    %cst_110 = arith.constant 9.99999974E-6 : f32
    %250 = vector.broadcast %cst_110 : f32 to vector<1x32xf32>
    %251 = arith.addf %249, %250 : vector<1x32xf32>
    %252 = math.sqrt %251 : vector<1x32xf32>
    %253 = arith.divf %236, %252 : vector<1x32xf32>
    %254 = vector.broadcast %242 : vector<1x32xf32> to vector<16x32xf32>
    %255 = arith.subf %234, %254 : vector<16x32xf32>
    %256 = vector.broadcast %253 : vector<1x32xf32> to vector<16x32xf32>
    %257 = arith.mulf %255, %256 : vector<16x32xf32>
    %258 = vector.broadcast %238 : vector<1x32xf32> to vector<16x32xf32>
    %259 = arith.addf %258, %101 : vector<16x32xf32>
    %260 = arith.addf %257, %259 : vector<16x32xf32>
    %c1_111 = arith.constant 1 : index
    %c0_112 = arith.constant 0 : index
    %c0_113 = arith.constant 0 : index
    %261 = vector.load %arg8[%c1_111, %c0_112, %c0_113] : memref<2x32x96xf32, #tpu.memory_space<vmem>>, vector<1x32x96xf32>
    %262 = vector.shape_cast %261 : vector<1x32x96xf32> to vector<32x96xf32>
    %c1_114 = arith.constant 1 : index
    %c0_115 = arith.constant 0 : index
    %c0_116 = arith.constant 0 : index
    %263 = vector.load %arg9[%c1_114, %c0_115, %c0_116] : memref<2x1x96xf32, #tpu.memory_space<vmem>>, vector<1x1x96xf32>
    %264 = vector.shape_cast %263 : vector<1x1x96xf32> to vector<1x96xf32>
    %c1_117 = arith.constant 1 : index
    %c0_118 = arith.constant 0 : index
    %c0_119 = arith.constant 0 : index
    %265 = vector.load %arg10[%c1_117, %c0_118, %c0_119] : memref<2x32x32xf32, #tpu.memory_space<vmem>>, vector<1x32x32xf32>
    %266 = vector.shape_cast %265 : vector<1x32x32xf32> to vector<32x32xf32>
    %c1_120 = arith.constant 1 : index
    %c0_121 = arith.constant 0 : index
    %c0_122 = arith.constant 0 : index
    %267 = vector.load %arg11[%c1_120, %c0_121, %c0_122] : memref<2x1x32xf32, #tpu.memory_space<vmem>>, vector<1x1x32xf32>
    %268 = vector.shape_cast %267 : vector<1x1x32xf32> to vector<1x32xf32>
    %cst_123 = arith.constant dense<0.000000e+00> : vector<16x96xf32>
    %269 = tpu.matmul %179, %262, %cst_123 {dimension_numbers = #tpu.dot_dimension_numbers<[1], [0], [0], [1], [0, 0, 1, 1], [], []>} : vector<16x32xf32>, vector<32x96xf32>, vector<16x96xf32> -> vector<16x96xf32>
    %270 = vector.broadcast %264 : vector<1x96xf32> to vector<16x96xf32>
    %271 = arith.addf %269, %270 : vector<16x96xf32>
    %cst_124 = arith.constant dense<0.000000e+00> : vector<16x96xf32>
    %272 = tpu.matmul %101, %262, %cst_124 {dimension_numbers = #tpu.dot_dimension_numbers<[1], [0], [0], [1], [0, 0, 1, 1], [], []>} : vector<16x32xf32>, vector<32x96xf32>, vector<16x96xf32> -> vector<16x96xf32>
    %273 = vector.broadcast %264 : vector<1x96xf32> to vector<16x96xf32>
    %274 = arith.addf %272, %273 : vector<16x96xf32>
    %275 = vector.extract_strided_slice %271 {offsets = [0, 0], sizes = [16, 32], strides = [1, 1]} : vector<16x96xf32> to vector<16x32xf32>
    %276 = vector.extract_strided_slice %274 {offsets = [0, 32], sizes = [16, 32], strides = [1, 1]} : vector<16x96xf32> to vector<16x32xf32>
    %277 = vector.extract_strided_slice %274 {offsets = [0, 64], sizes = [16, 32], strides = [1, 1]} : vector<16x96xf32> to vector<16x32xf32>
    %cst_125 = arith.constant 0.000000e+00 : f32
    %278 = vector.broadcast %cst_125 : f32 to vector<16x32xf32>
    %279 = vector.broadcast %10 : vector<1x32xf32> to vector<16x32xf32>
    %280 = arith.mulf %275, %279 : vector<16x32xf32>
    %cst_126 = arith.constant dense<0.000000e+00> : vector<16x16xf32>
    %281 = tpu.matmul %280, %276, %cst_126 {dimension_numbers = #tpu.dot_dimension_numbers<[1], [1], [0], [0], [0, 0, 1, 0], [], []>} : vector<16x32xf32>, vector<16x32xf32>, vector<16x16xf32> -> vector<16x16xf32>
    %282 = arith.addf %281, %0 : vector<16x16xf32>
    %cst_127 = arith.constant dense<0xFF800000> : vector<16xf32>
    %283 = vector.multi_reduction <maximumf>, %282, %cst_127 [1] : vector<16x16xf32> to vector<16xf32>
    %284 = vector.shape_cast %283 : vector<16xf32> to vector<16x1xf32>
    %285 = vector.broadcast %284 : vector<16x1xf32> to vector<16x16xf32>
    %286 = arith.subf %282, %285 : vector<16x16xf32>
    %287 = math.exp %286 : vector<16x16xf32>
    %cst_128 = arith.constant dense<0.000000e+00> : vector<16xf32>
    %288 = vector.multi_reduction <add>, %287, %cst_128 [1] : vector<16x16xf32> to vector<16xf32>
    %289 = vector.shape_cast %288 : vector<16xf32> to vector<16x1xf32>
    %290 = vector.broadcast %289 : vector<16x1xf32> to vector<16x16xf32>
    %291 = arith.divf %287, %290 : vector<16x16xf32>
    %cst_129 = arith.constant dense<0.000000e+00> : vector<16x32xf32>
    %292 = tpu.matmul %291, %277, %cst_129 {dimension_numbers = #tpu.dot_dimension_numbers<[1], [0], [0], [1], [0, 0, 1, 1], [], []>} : vector<16x16xf32>, vector<16x32xf32>, vector<16x32xf32> -> vector<16x32xf32>
    %293 = vector.broadcast %8 : vector<1x32xf32> to vector<16x32xf32>
    %294 = arith.mulf %292, %293 : vector<16x32xf32>
    %295 = arith.addf %278, %294 : vector<16x32xf32>
    %296 = vector.broadcast %19 : vector<1x32xf32> to vector<16x32xf32>
    %297 = arith.mulf %275, %296 : vector<16x32xf32>
    %cst_130 = arith.constant dense<0.000000e+00> : vector<16x16xf32>
    %298 = tpu.matmul %297, %276, %cst_130 {dimension_numbers = #tpu.dot_dimension_numbers<[1], [1], [0], [0], [0, 0, 1, 0], [], []>} : vector<16x32xf32>, vector<16x32xf32>, vector<16x16xf32> -> vector<16x16xf32>
    %299 = arith.addf %298, %0 : vector<16x16xf32>
    %cst_131 = arith.constant dense<0xFF800000> : vector<16xf32>
    %300 = vector.multi_reduction <maximumf>, %299, %cst_131 [1] : vector<16x16xf32> to vector<16xf32>
    %301 = vector.shape_cast %300 : vector<16xf32> to vector<16x1xf32>
    %302 = vector.broadcast %301 : vector<16x1xf32> to vector<16x16xf32>
    %303 = arith.subf %299, %302 : vector<16x16xf32>
    %304 = math.exp %303 : vector<16x16xf32>
    %cst_132 = arith.constant dense<0.000000e+00> : vector<16xf32>
    %305 = vector.multi_reduction <add>, %304, %cst_132 [1] : vector<16x16xf32> to vector<16xf32>
    %306 = vector.shape_cast %305 : vector<16xf32> to vector<16x1xf32>
    %307 = vector.broadcast %306 : vector<16x1xf32> to vector<16x16xf32>
    %308 = arith.divf %304, %307 : vector<16x16xf32>
    %cst_133 = arith.constant dense<0.000000e+00> : vector<16x32xf32>
    %309 = tpu.matmul %308, %277, %cst_133 {dimension_numbers = #tpu.dot_dimension_numbers<[1], [0], [0], [1], [0, 0, 1, 1], [], []>} : vector<16x16xf32>, vector<16x32xf32>, vector<16x32xf32> -> vector<16x32xf32>
    %310 = vector.broadcast %17 : vector<1x32xf32> to vector<16x32xf32>
    %311 = arith.mulf %309, %310 : vector<16x32xf32>
    %312 = arith.addf %295, %311 : vector<16x32xf32>
    %cst_134 = arith.constant dense<0.000000e+00> : vector<16x32xf32>
    %313 = tpu.matmul %312, %266, %cst_134 {dimension_numbers = #tpu.dot_dimension_numbers<[1], [0], [0], [1], [0, 0, 1, 1], [], []>} : vector<16x32xf32>, vector<32x32xf32>, vector<16x32xf32> -> vector<16x32xf32>
    %314 = vector.broadcast %268 : vector<1x32xf32> to vector<16x32xf32>
    %315 = arith.addf %313, %314 : vector<16x32xf32>
    %c1_135 = arith.constant 1 : index
    %c0_136 = arith.constant 0 : index
    %c0_137 = arith.constant 0 : index
    %316 = vector.load %arg12[%c1_135, %c0_136, %c0_137] : memref<2x1x32xf32, #tpu.memory_space<vmem>>, vector<1x1x32xf32>
    %317 = vector.shape_cast %316 : vector<1x1x32xf32> to vector<1x32xf32>
    %c1_138 = arith.constant 1 : index
    %c0_139 = arith.constant 0 : index
    %c0_140 = arith.constant 0 : index
    %318 = vector.load %arg13[%c1_138, %c0_139, %c0_140] : memref<2x1x32xf32, #tpu.memory_space<vmem>>, vector<1x1x32xf32>
    %319 = vector.shape_cast %318 : vector<1x1x32xf32> to vector<1x32xf32>
    %cst_141 = arith.constant dense<0.000000e+00> : vector<32xf32>
    %320 = vector.multi_reduction <add>, %315, %cst_141 [0] : vector<16x32xf32> to vector<32xf32>
    %321 = vector.shape_cast %320 : vector<32xf32> to vector<1x32xf32>
    %cst_142 = arith.constant 6.250000e-02 : f32
    %322 = vector.broadcast %cst_142 : f32 to vector<1x32xf32>
    %323 = arith.mulf %321, %322 : vector<1x32xf32>
    %324 = arith.mulf %315, %315 : vector<16x32xf32>
    %cst_143 = arith.constant dense<0.000000e+00> : vector<32xf32>
    %325 = vector.multi_reduction <add>, %324, %cst_143 [0] : vector<16x32xf32> to vector<32xf32>
    %326 = vector.shape_cast %325 : vector<32xf32> to vector<1x32xf32>
    %cst_144 = arith.constant 6.250000e-02 : f32
    %327 = vector.broadcast %cst_144 : f32 to vector<1x32xf32>
    %328 = arith.mulf %326, %327 : vector<1x32xf32>
    %329 = arith.mulf %323, %323 : vector<1x32xf32>
    %330 = arith.subf %328, %329 : vector<1x32xf32>
    %cst_145 = arith.constant 9.99999974E-6 : f32
    %331 = vector.broadcast %cst_145 : f32 to vector<1x32xf32>
    %332 = arith.addf %330, %331 : vector<1x32xf32>
    %333 = math.sqrt %332 : vector<1x32xf32>
    %334 = arith.divf %317, %333 : vector<1x32xf32>
    %335 = vector.broadcast %323 : vector<1x32xf32> to vector<16x32xf32>
    %336 = arith.subf %315, %335 : vector<16x32xf32>
    %337 = vector.broadcast %334 : vector<1x32xf32> to vector<16x32xf32>
    %338 = arith.mulf %336, %337 : vector<16x32xf32>
    %339 = vector.broadcast %319 : vector<1x32xf32> to vector<16x32xf32>
    %340 = arith.addf %339, %179 : vector<16x32xf32>
    %341 = arith.addf %338, %340 : vector<16x32xf32>
    %c0_146 = arith.constant 0 : index
    %c0_147 = arith.constant 0 : index
    %c0_148 = arith.constant 0 : index
    %342 = vector.load %arg14[%c0_146, %c0_147, %c0_148] : memref<2x16x32xf32, #tpu.memory_space<vmem>>, vector<1x16x32xf32>
    %343 = vector.shape_cast %342 : vector<1x16x32xf32> to vector<16x32xf32>
    %344 = vector.shape_cast %260 : vector<16x32xf32> to vector<1x16x32xf32>
    tpu.vector_store %arg14[%c0_146, %c0_147, %c0_148], %344 {strides = array<i32>} : memref<2x16x32xf32, #tpu.memory_space<vmem>>, vector<1x16x32xf32>,
    %c1_149 = arith.constant 1 : index
    %c0_150 = arith.constant 0 : index
    %c0_151 = arith.constant 0 : index
    %345 = vector.load %arg14[%c1_149, %c0_150, %c0_151] : memref<2x16x32xf32, #tpu.memory_space<vmem>>, vector<1x16x32xf32>
    %346 = vector.shape_cast %345 : vector<1x16x32xf32> to vector<16x32xf32>
    %347 = vector.shape_cast %341 : vector<16x32xf32> to vector<1x16x32xf32>
    tpu.vector_store %arg14[%c1_149, %c0_150, %c0_151], %347 {strides = array<i32>} : memref<2x16x32xf32, #tpu.memory_space<vmem>>, vector<1x16x32xf32>,
    return
  }
}

</mosaic_0001>

<llo_original>
// kernel: attention_layer_forward.1
$region0: #{attention_layer_forward.1}
  #allocation0 [shape = 'u32[]', space=smem, size = 0x4, offset = 0x4, fixed_abs, tag = 'smem constant byte address 0x4 - core index']
  #allocation1 [shape = 'u32[144,128]{1,0:T(1,128)}', space=vmem, size = 0x12000, scoped, tag = 'internal scratch']
  %s0 = inlined_call_operand.vmem [shape: f32[2,16,32], index: 0, kind: input, shape index: {}]
  %s1 = inlined_call_operand.vmem [shape: f32[16,16], index: 1, kind: input, shape index: {}]
  %s2 = inlined_call_operand.vmem [shape: f32[2,32,96], index: 2, kind: input, shape index: {}]
  %s3 = inlined_call_operand.vmem [shape: f32[2,1,96], index: 3, kind: input, shape index: {}]
  %s4 = inlined_call_operand.hbm [shape: f32[2,32,32], index: 4, kind: input, shape index: {}]
  %s5 = inlined_call_operand.vmem [shape: f32[2,1,32], index: 5, kind: input, shape index: {}]
  %s6 = inlined_call_operand.vmem [shape: f32[2,1,32], index: 6, kind: input, shape index: {}]
  %s7 = inlined_call_operand.vmem [shape: f32[2,1,32], index: 7, kind: input, shape index: {}]
  %s8 = inlined_call_operand.hbm [shape: f32[2,32,96], index: 8, kind: input, shape index: {}]
  %s9 = inlined_call_operand.vmem [shape: f32[2,1,96], index: 9, kind: input, shape index: {}]
  %s10 = inlined_call_operand.hbm [shape: f32[2,32,32], index: 10, kind: input, shape index: {}]
  %s11 = inlined_call_operand.hbm [shape: f32[2,1,32], index: 11, kind: input, shape index: {}]
  %s12 = inlined_call_operand.hbm [shape: f32[2,1,32], index: 12, kind: input, shape index: {}]
  %s13 = inlined_call_operand.hbm [shape: f32[2,1,32], index: 13, kind: input, shape index: {}]
  %s14 = inlined_call_operand.vmem [shape: f32[2,16,32], index: 14, kind: output, shape index: {}]
  %s15 = sld [smem:[#allocation0]]
  $region90: #{attention_layer_forward.1} parent=0
    _
  %s17 = ssub.s32 1, %s15
  %s18 = scalar_select 0, %s17, %s15
  $region1: #{attention_layer_forward.1} parent=0
    #allocation2 [shape = 'u8[32768]{0}', space=vmem, size = 0x8000, scoped, tag = 'input window, operand 4, single buffered']
    #allocation3 [shape = 's32[1]{0}', space=sflag, size = 0x4, scoped, tag = 'scoped memory for attention_layer_forward.1']
    #allocation4 [shape = 'u8[32768]{0}', space=vmem, size = 0x8000, scoped, tag = 'input window, operand 8, single buffered']
    #allocation5 [shape = 's32[1]{0}', space=sflag, size = 0x4, scoped, tag = 'scoped memory for attention_layer_forward.1']
    #allocation6 [shape = 'u8[32768]{0}', space=vmem, size = 0x8000, scoped, tag = 'input window, operand 10, single buffered']
    #allocation7 [shape = 'u8[1024]{0}', space=vmem, size = 0x400, scoped, tag = 'input window, operand 11, single buffered']
    #allocation8 [shape = 's32[1]{0}', space=sflag, size = 0x4, scoped, tag = 'scoped memory for attention_layer_forward.1']
    #allocation9 [shape = 'u8[1024]{0}', space=vmem, size = 0x400, scoped, tag = 'input window, operand 12, single buffered']
    #allocation10 [shape = 'u8[1024]{0}', space=vmem, size = 0x400, scoped, tag = 'input window, operand 13, single buffered']
    #allocation11 [shape = 's32[1]{0}', space=sflag, size = 0x4, scoped, tag = 'scoped memory for attention_layer_forward.1']
    %19 = vsyncpa [#allocation3], 0
    %20 = vsyncpa [#allocation5], 0
    %21 = vsyncpa [#allocation8], 0
    %22 = vsyncpa [#allocation11], 0
    // Predicated region
    $region2: #{attention_layer_forward.1} parent=1 // pred_check
      _
    $region3: #{attention_layer_forward.1} parent=1 // pred_check_branch
      %24 = sbr.rel (0) target = $region5
    $region4: #{attention_layer_forward.1} parent=1 // pred_region
      _
    $region5: #{attention_layer_forward.1} parent=1 // pred_fallthru
      _
    // Predicated region
    $region6: #{attention_layer_forward.1} parent=1 // pred_check
      _
    $region7: #{attention_layer_forward.1} parent=1 // pred_check_branch
      %26 = sbr.rel (0) target = $region9
    $region8: #{attention_layer_forward.1} parent=1 // pred_region
      _
    $region9: #{attention_layer_forward.1} parent=1 // pred_fallthru
      _
    // Predicated region
    $region10: #{attention_layer_forward.1} parent=1 // pred_check
      _
    $region11: #{attention_layer_forward.1} parent=1 // pred_check_branch
      %28 = sbr.rel (0) target = $region13
    $region12: #{attention_layer_forward.1} parent=1 // pred_region
      _
    $region13: #{attention_layer_forward.1} parent=1 // pred_fallthru
      _
    // Predicated region
    $region14: #{attention_layer_forward.1} parent=1 // pred_check
      _
    $region15: #{attention_layer_forward.1} parent=1 // pred_check_branch
      %30 = sbr.rel (0) target = $region17
    $region16: #{attention_layer_forward.1} parent=1 // pred_region
      _
    $region17: #{attention_layer_forward.1} parent=1 // pred_fallthru
      _
    // Predicated region
    $region18: #{attention_layer_forward.1} parent=1 // pred_check
      _
    $region19: #{attention_layer_forward.1} parent=1 // pred_check_branch
      %32 = sbr.rel (0) target = $region21
    $region20: #{attention_layer_forward.1} parent=1 // pred_region
      %s34 = ssub.s32 1024, 1024
      %35 = vsyncadd [#allocation3], %s34
      %s36 = sshll.u32 [#allocation2], 4
      %s37 = int_to_ptr.vmem [resolvable:$true] %s36
      %42 = dma.hbm_to_vmem [thread:$0]  %s4, 1024, %s37, [#allocation3], 128, 128, 8
    $region21: #{attention_layer_forward.1} parent=1 // pred_fallthru
      _
    // Predicated region
    $region22: #{attention_layer_forward.1} parent=1 // pred_check
      _
    $region23: #{attention_layer_forward.1} parent=1 // pred_check_branch
      %44 = sbr.rel (0) target = $region25
    $region24: #{attention_layer_forward.1} parent=1 // pred_region
      _
    $region25: #{attention_layer_forward.1} parent=1 // pred_fallthru
      _
    // Predicated region
    $region26: #{attention_layer_forward.1} parent=1 // pred_check
      _
    $region27: #{attention_layer_forward.1} parent=1 // pred_check_branch
      %46 = sbr.rel (0) target = $region29
    $region28: #{attention_layer_forward.1} parent=1 // pred_region
      _
    $region29: #{attention_layer_forward.1} parent=1 // pred_fallthru
      _
    // Predicated region
    $region30: #{attention_layer_forward.1} parent=1 // pred_check
      _
    $region31: #{attention_layer_forward.1} parent=1 // pred_check_branch
      %48 = sbr.rel (0) target = $region33
    $region32: #{attention_layer_forward.1} parent=1 // pred_region
      _
    $region33: #{attention_layer_forward.1} parent=1 // pred_fallthru
      _
    // Predicated region
    $region34: #{attention_layer_forward.1} parent=1 // pred_check
      _
    $region35: #{attention_layer_forward.1} parent=1 // pred_check_branch
      %50 = sbr.rel (0) target = $region37
    $region36: #{attention_layer_forward.1} parent=1 // pred_region
      %s52 = ssub.s32 1024, 1024
      %53 = vsyncadd [#allocation5], %s52
      %s54 = sshll.u32 [#allocation4], 4
      %s55 = int_to_ptr.vmem [resolvable:$true] %s54
      %60 = dma.hbm_to_vmem [thread:$0]  %s8, 1024, %s55, [#allocation5], 128, 128, 8
    $region37: #{attention_layer_forward.1} parent=1 // pred_fallthru
      _
    // Predicated region
    $region38: #{attention_layer_forward.1} parent=1 // pred_check
      _
    $region39: #{attention_layer_forward.1} parent=1 // pred_check_branch
      %62 = sbr.rel (0) target = $region41
    $region40: #{attention_layer_forward.1} parent=1 // pred_region
      _
    $region41: #{attention_layer_forward.1} parent=1 // pred_fallthru
      _
    // Predicated region
    $region42: #{attention_layer_forward.1} parent=1 // pred_check
      _
    $region43: #{attention_layer_forward.1} parent=1 // pred_check_branch
      %64 = sbr.rel (0) target = $region45
    $region44: #{attention_layer_forward.1} parent=1 // pred_region
      %s66 = ssub.s32 1024, 1024
      %67 = vsyncadd [#allocation5], %s66
      %s68 = sshll.u32 [#allocation6], 4
      %s69 = int_to_ptr.vmem [resolvable:$true] %s68
      %74 = dma.hbm_to_vmem [thread:$0]  %s10, 1024, %s69, [#allocation5], 128, 128, 8
    $region45: #{attention_layer_forward.1} parent=1 // pred_fallthru
      _
    // Predicated region
    $region46: #{attention_layer_forward.1} parent=1 // pred_check
      _
    $region47: #{attention_layer_forward.1} parent=1 // pred_check_branch
      %76 = sbr.rel (0) target = $region49
    $region48: #{attention_layer_forward.1} parent=1 // pred_region
      %s78 = ssub.s32 32, 32
      %79 = vsyncadd [#allocation8], %s78
      %s80 = sshll.u32 [#allocation7], 4
      %s81 = int_to_ptr.vmem [resolvable:$true] %s80
      %86 = dma.hbm_to_vmem [thread:$0]  %s11, 32, %s81, [#allocation8], 16, 16, 1
    $region49: #{attention_layer_forward.1} parent=1 // pred_fallthru
      _
    // Predicated region
    $region50: #{attention_layer_forward.1} parent=1 // pred_check
      _
    $region51: #{attention_layer_forward.1} parent=1 // pred_check_branch
      %88 = sbr.rel (0) target = $region53
    $region52: #{attention_layer_forward.1} parent=1 // pred_region
      %s90 = ssub.s32 32, 32
      %91 = vsyncadd [#allocation8], %s90
      %s92 = sshll.u32 [#allocation9], 4
      %s93 = int_to_ptr.vmem [resolvable:$true] %s92
      %98 = dma.hbm_to_vmem [thread:$0]  %s12, 32, %s93, [#allocation8], 16, 16, 1
    $region53: #{attention_layer_forward.1} parent=1 // pred_fallthru
      _
    // Predicated region
    $region54: #{attention_layer_forward.1} parent=1 // pred_check
      _
    $region55: #{attention_layer_forward.1} parent=1 // pred_check_branch
      %100 = sbr.rel (0) target = $region57
    $region56: #{attention_layer_forward.1} parent=1 // pred_region
      %s102 = ssub.s32 32, 32
      %103 = vsyncadd [#allocation11], %s102
      %s104 = sshll.u32 [#allocation10], 4
      %s105 = int_to_ptr.vmem [resolvable:$true] %s104
      %110 = dma.hbm_to_vmem [thread:$0]  %s13, 32, %s105, [#allocation11], 16, 16, 1
    $region57: #{attention_layer_forward.1} parent=1 // pred_fallthru
      _
    // Predicated region
    $region58: #{attention_layer_forward.1} parent=1 // pred_check
      _
    $region59: #{attention_layer_forward.1} parent=1 // pred_check_branch
      %112 = sbr.rel (0) target = $region61
    $region60: #{attention_layer_forward.1} parent=1 // pred_region
      %113 = dma.done [#allocation3], 1024
    $region61: #{attention_layer_forward.1} parent=1 // pred_fallthru
      _
    // Predicated region
    $region62: #{attention_layer_forward.1} parent=1 // pred_check
      _
    $region63: #{attention_layer_forward.1} parent=1 // pred_check_branch
      %115 = sbr.rel (0) target = $region65
    $region64: #{attention_layer_forward.1} parent=1 // pred_region
      %116 = dma.done [#allocation5], 1024
    $region65: #{attention_layer_forward.1} parent=1 // pred_fallthru
      _
    // Predicated region
    $region66: #{attention_layer_forward.1} parent=1 // pred_check
      _
    $region67: #{attention_layer_forward.1} parent=1 // pred_check_branch
      %118 = sbr.rel (0) target = $region69
    $region68: #{attention_layer_forward.1} parent=1 // pred_region
      %119 = dma.done [#allocation5], 1024
    $region69: #{attention_layer_forward.1} parent=1 // pred_fallthru
      _
    // Predicated region
    $region70: #{attention_layer_forward.1} parent=1 // pred_check
      _
    $region71: #{attention_layer_forward.1} parent=1 // pred_check_branch
      %121 = sbr.rel (0) target = $region73
    $region72: #{attention_layer_forward.1} parent=1 // pred_region
      %122 = dma.done [#allocation8], 32
    $region73: #{attention_layer_forward.1} parent=1 // pred_fallthru
      _
    // Predicated region
    $region74: #{attention_layer_forward.1} parent=1 // pred_check
      _
    $region75: #{attention_layer_forward.1} parent=1 // pred_check_branch
      %124 = sbr.rel (0) target = $region77
    $region76: #{attention_layer_forward.1} parent=1 // pred_region
      %125 = dma.done [#allocation8], 32
    $region77: #{attention_layer_forward.1} parent=1 // pred_fallthru
      _
    // Predicated region
    $region78: #{attention_layer_forward.1} parent=1 // pred_check
      _
    $region79: #{attention_layer_forward.1} parent=1 // pred_check_branch
      %127 = sbr.rel (0) target = $region81
    $region80: #{attention_layer_forward.1} parent=1 // pred_region
      %128 = dma.done [#allocation11], 32
    $region81: #{attention_layer_forward.1} parent=1 // pred_fallthru
      _
    %v129 = vld [vmem:[%s1] sm:$0xff]
    %v130 = vld [vmem:[%s1 + $0x8] sm:$0xff]
    %v131 = vlaneseq
    %v132 = vand.u32 %v131, 127
    %vm133 = vcmp.ge.s32.totalorder %v132, 0
    %vm134 = vcmp.lt.s32.totalorder %v132, 16
    %vm135 = vmand %vm133, %vm134
    %v136 = vsel %vm135, 1, 0
    %v137 = vcvt.s32.f32 %v136
    %v138 = vmul.f32 %v137, 0.25
    %vm139 = vcmp.ge.s32.totalorder %v132, 16
    %vm140 = vcmp.lt.s32.totalorder %v132, 32
    %vm141 = vmand %vm139, %vm140
    %v142 = vsel %vm141, 1, 0
    %v143 = vcvt.s32.f32 %v142
    %v144 = vmul.f32 %v143, 0.25
    %v145 = vld [vmem:[%s0] sm:$0xff]
    %v146 = vld [vmem:[%s0 + $0x8] sm:$0xff]
    %s147 = scalar_lea.vmem %s0, 16
    %v148 = vld [vmem:[%s147] sm:$0xff]
    %v149 = vld [vmem:[%s147 + $0x8] sm:$0xff]
    %v150 = vld [vmem:[%s2] sm:$0xff]
    %v151 = vld [vmem:[%s2 + $0x8] sm:$0xff]
    %v152 = vld [vmem:[%s2 + $0x10] sm:$0xff]
    %v153 = vld [vmem:[%s2 + $0x18] sm:$0xff]
    %v154 = vld [vmem:[%s3] sm:$0x1]
    %v155 = vld [vmem:[#allocation2] sm:$0xff]
    %v156 = vld [vmem:[#allocation2 + $0x8] sm:$0xff]
    %v157 = vld [vmem:[#allocation2 + $0x10] sm:$0xff]
    %v158 = vld [vmem:[#allocation2 + $0x18] sm:$0xff]
    %v159 = vld [vmem:[%s5] sm:$0x1]
    %v161 = vlaneseq
    %v162 = vshrl.u32 %v161, 7
    %v163 = vsub.s32 0, %v162
    %v164 = vrot.slane %v154, %v163
    %vm166 = vcmask 261120
    %v168 = vsel %vm166, %v145, 0
    %v171 = vsel %vm166, %v146, 0
    %173 = vmatprep.subr.mxu0 0.0
    %174 = vmatpush1.msra.mxu0 0.0
    %175 = vmatprep.subr.mxu0 0.0
    %176 = vmatpush1.msra.mxu0 0.0
    %177 = vmatprep.subr.mxu0 0.0
    %178 = vmatpush1.msra.mxu0 0.0
    %179 = vmatprep.subr.mxu0 0.0
    %180 = vmatpush1.msra.mxu0 0.0
    %181 = vmatprep.subr.mxu0 0.0
    %182 = vmatpush1.msra.mxu0 0.0
    %183 = vmatprep.subr.mxu0 0.0
    %184 = vmatpush1.msra.mxu0 0.0
    %185 = vmatprep.subr.mxu0 0.0
    %186 = vmatpush1.msra.mxu0 0.0
    %187 = vmatprep.subr.mxu0 0.0
    %188 = vmatpush1.msra.mxu0 0.0
    %189 = vmatprep.subr.mxu0 0.0
    %190 = vmatpush1.msra.mxu0 0.0
    %191 = vmatprep.subr.mxu0 0.0
    %192 = vmatpush1.msra.mxu0 0.0
    %193 = vmatprep.subr.mxu0 0.0
    %194 = vmatpush1.msra.mxu0 0.0
    %195 = vmatprep.subr.mxu0 0.0
    %196 = vmatpush1.msra.mxu0 0.0
    %197 = vmatprep.subr.mxu0 0.0
    %198 = vmatpush1.msra.mxu0 %v153
    %199 = vmatprep.subr.mxu0 0.0
    %200 = vmatpush1.msra.mxu0 %v152
    %201 = vmatprep.subr.mxu0 0.0
    %202 = vmatpush1.msra.mxu0 %v151
    %203 = vmatprep.subr.mxu0 0.0
    %204 = vmatpush1.msra.mxu0 %v150
    %205 = vmatprep.subr.mxu0 0.0
    %206 = vmatpush2.msra.mxu0 0.0
    %207 = vmatprep.subr.mxu0 0.0
    %208 = vmatpush2.msra.mxu0 0.0
    %209 = vmatprep.subr.mxu0 0.0
    %210 = vmatpush2.msra.mxu0 0.0
    %211 = vmatprep.subr.mxu0 0.0
    %212 = vmatpush2.msra.mxu0 0.0
    %213 = vmatprep.subr.mxu0 0.0
    %214 = vmatpush2.msra.mxu0 0.0
    %215 = vmatprep.subr.mxu0 0.0
    %216 = vmatpush2.msra.mxu0 0.0
    %217 = vmatprep.subr.mxu0 0.0
    %218 = vmatpush2.msra.mxu0 0.0
    %219 = vmatprep.subr.mxu0 0.0
    %220 = vmatpush2.msra.mxu0 0.0
    %221 = vmatprep.subr.mxu0 0.0
    %222 = vmatpush2.msra.mxu0 0.0
    %223 = vmatprep.subr.mxu0 0.0
    %224 = vmatpush2.msra.mxu0 0.0
    %225 = vmatprep.subr.mxu0 0.0
    %226 = vmatpush2.msra.mxu0 0.0
    %227 = vmatprep.subr.mxu0 0.0
    %228 = vmatpush2.msra.mxu0 0.0
    %229 = vmatprep.subr.mxu0 0.0
    %230 = vmatpush2.msra.mxu0 0.0
    %231 = vmatprep.subr.mxu0 0.0
    %232 = vmatpush2.msra.mxu0 0.0
    %233 = vmatprep.subr.mxu0 0.0
    %234 = vmatpush2.msra.mxu0 0.0
    %235 = vmatprep.subr.mxu0 0.0
    %236 = vmatpush2.msra.mxu0 0.0
    %237 = vmatprep.mubr.f32.mxu0 0.0
    %238 = vmatmul.mubr.f32.gmra.mxu0 %v168
    %v239 = vpop.f32.mrf.mxu0
    %v240 = vadd.f32 %v164, %v239
    %v241 = vpop.f32.mrf.mxu0
    %242 = vmatprep.mubr.f32.mxu0 0.0
    %243 = vmatmul.mubr.f32.gmra.mxu0 %v171
    %v244 = vpop.f32.mrf.mxu0
    %v245 = vadd.f32 %v164, %v244
    %v246 = vpop.f32.mrf.mxu0
    %247 = vdwg.mxu0
    %v248 = vmul.f32 %v240, %v138
    %v249 = vmul.f32 %v245, %v138
    %252 = vrot.lane.b32.xlu0 %v240, 96
    %v253 = vpop.permute.xlu0 %252
    %254 = vrot.lane.b32.xlu0 %v245, 96
    %v255 = vpop.permute.xlu0 %254
    %v257 = vsel %vm166, %v248, 0
    %v260 = vsel %vm166, %v249, 0
    %v262 = vsel %vm166, %v253, 0
    %v264 = vsel %vm166, %v255, 0
    %266 = vmatprep.subr.mxu0 0.0
    %267 = vmatpush1.xpose.msra.mxu0 0.0
    %268 = vmatprep.subr.mxu0 0.0
    %269 = vmatpush1.xpose.msra.mxu0 0.0
    %270 = vmatprep.subr.mxu0 0.0
    %271 = vmatpush1.xpose.msra.mxu0 0.0
    %272 = vmatprep.subr.mxu0 0.0
    %273 = vmatpush1.xpose.msra.mxu0 0.0
    %274 = vmatprep.subr.mxu0 0.0
    %275 = vmatpush1.xpose.msra.mxu0 0.0
    %276 = vmatprep.subr.mxu0 0.0
    %277 = vmatpush1.xpose.msra.mxu0 0.0
    %278 = vmatprep.subr.mxu0 0.0
    %279 = vmatpush1.xpose.msra.mxu0 0.0
    %280 = vmatprep.subr.mxu0 0.0
    %281 = vmatpush1.xpose.msra.mxu0 0.0
    %282 = vmatprep.subr.mxu0 0.0
    %283 = vmatpush1.xpose.msra.mxu0 0.0
    %284 = vmatprep.subr.mxu0 0.0
    %285 = vmatpush1.xpose.msra.mxu0 0.0
    %286 = vmatprep.subr.mxu0 0.0
    %287 = vmatpush1.xpose.msra.mxu0 0.0
    %288 = vmatprep.subr.mxu0 0.0
    %289 = vmatpush1.xpose.msra.mxu0 0.0
    %290 = vmatprep.subr.mxu0 0.0
    %291 = vmatpush1.xpose.msra.mxu0 0.0
    %292 = vmatprep.subr.mxu0 0.0
    %293 = vmatpush1.xpose.msra.mxu0 0.0
    %294 = vmatprep.subr.mxu0 0.0
    %295 = vmatpush1.xpose.msra.mxu0 %v264
    %296 = vmatprep.subr.mxu0 0.0
    %297 = vmatpush1.xpose.msra.mxu0 %v262
    %298 = vmatprep.subr.mxu0 0.0
    %299 = vmatpush2.xpose.msra.mxu0 0.0
    %300 = vmatprep.subr.mxu0 0.0
    %301 = vmatpush2.xpose.msra.mxu0 0.0
    %302 = vmatprep.subr.mxu0 0.0
    %303 = vmatpush2.xpose.msra.mxu0 0.0
    %304 = vmatprep.subr.mxu0 0.0
    %305 = vmatpush2.xpose.msra.mxu0 0.0
    %306 = vmatprep.subr.mxu0 0.0
    %307 = vmatpush2.xpose.msra.mxu0 0.0
    %308 = vmatprep.subr.mxu0 0.0
    %309 = vmatpush2.xpose.msra.mxu0 0.0
    %310 = vmatprep.subr.mxu0 0.0
    %311 = vmatpush2.xpose.msra.mxu0 0.0
    %312 = vmatprep.subr.mxu0 0.0
    %313 = vmatpush2.xpose.msra.mxu0 0.0
    %314 = vmatprep.subr.mxu0 0.0
    %315 = vmatpush2.xpose.msra.mxu0 0.0
    %316 = vmatprep.subr.mxu0 0.0
    %317 = vmatpush2.xpose.msra.mxu0 0.0
    %318 = vmatprep.subr.mxu0 0.0
    %319 = vmatpush2.xpose.msra.mxu0 0.0
    %320 = vmatprep.subr.mxu0 0.0
    %321 = vmatpush2.xpose.msra.mxu0 0.0
    %322 = vmatprep.subr.mxu0 0.0
    %323 = vmatpush2.xpose.msra.mxu0 0.0
    %324 = vmatprep.subr.mxu0 0.0
    %325 = vmatpush2.xpose.msra.mxu0 0.0
    %326 = vmatprep.subr.mxu0 0.0
    %327 = vmatpush2.xpose.msra.mxu0 0.0
    %328 = vmatprep.subr.mxu0 0.0
    %329 = vmatpush2.xpose.msra.mxu0 0.0
    %330 = vmatprep.mubr.f32.mxu0 0.0
    %331 = vmatmul.mubr.f32.gmra.mxu0 %v257
    %v332 = vpop.f32.mrf.mxu0
    %v333 = vadd.f32 %v129, %v332
    %v334 = vpop.f32.mrf.mxu0
    %335 = vmatprep.mubr.f32.mxu0 0.0
    %336 = vmatmul.mubr.f32.gmra.mxu0 %v260
    %v337 = vpop.f32.mrf.mxu0
    %v338 = vadd.f32 %v130, %v337
    %v339 = vpop.f32.mrf.mxu0
    %340 = vdwg.mxu0
    %vm341 = vcmask 130048
    %v342 = vsel %vm341, %v333, -inf
    %343 = vmax.xlane.f32.xlu0 %v342
    %v344 = vpop.xlane.xlu0 %343
    %v345 = vsel %vm341, %v338, -inf
    %346 = vmax.xlane.f32.xlu0 %v345
    %v347 = vpop.xlane.xlu0 %346
    %v348 = vsub.f32 %v333, %v344
    %v349 = vsub.f32 %v338, %v347
    %v350 = vmul.f32 %v348, 1.442695
    %v351 = vpow.pop %v350
    %v352 = vmul.f32 %v349, 1.442695
    %v353 = vpow.pop %v352
    %v354 = vsel %vm341, %v351, 0.0
    %355 = vadd.xlane.f32.xlu0 %v354
    %v356 = vpop.xlane.xlu0 %355
    %v357 = vsel %vm341, %v353, 0.0
    %358 = vadd.xlane.f32.xlu0 %v357
    %v359 = vpop.xlane.xlu0 %358
    %v360 = vrcp.pop %v356
    %v361 = vmul.f32 %v351, %v360
    %v362 = vrcp.pop %v359
    %v363 = vmul.f32 %v353, %v362
    %364 = vrot.lane.b32.xlu0 %v240, 64
    %v365 = vpop.permute.xlu0 %364
    %366 = vrot.lane.b32.xlu0 %v245, 64
    %v367 = vpop.permute.xlu0 %366
    %v371 = vsel %vm341, %v361, 0
    %v374 = vsel %vm341, %v363, 0
    %376 = vmatprep.subr.mxu0 0.0
    %377 = vmatpush1.msra.mxu0 0.0
    %378 = vmatprep.subr.mxu0 0.0
    %379 = vmatpush1.msra.mxu0 0.0
    %380 = vmatprep.subr.mxu0 0.0
    %381 = vmatpush1.msra.mxu0 0.0
    %382 = vmatprep.subr.mxu0 0.0
    %383 = vmatpush1.msra.mxu0 0.0
    %384 = vmatprep.subr.mxu0 0.0
    %385 = vmatpush1.msra.mxu0 0.0
    %386 = vmatprep.subr.mxu0 0.0
    %387 = vmatpush1.msra.mxu0 0.0
    %388 = vmatprep.subr.mxu0 0.0
    %389 = vmatpush1.msra.mxu0 0.0
    %390 = vmatprep.subr.mxu0 0.0
    %391 = vmatpush1.msra.mxu0 0.0
    %392 = vmatprep.subr.mxu0 0.0
    %393 = vmatpush1.msra.mxu0 0.0
    %394 = vmatprep.subr.mxu0 0.0
    %395 = vmatpush1.msra.mxu0 0.0
    %396 = vmatprep.subr.mxu0 0.0
    %397 = vmatpush1.msra.mxu0 0.0
    %398 = vmatprep.subr.mxu0 0.0
    %399 = vmatpush1.msra.mxu0 0.0
    %400 = vmatprep.subr.mxu0 0.0
    %401 = vmatpush1.msra.mxu0 0.0
    %402 = vmatprep.subr.mxu0 0.0
    %403 = vmatpush1.msra.mxu0 0.0
    %404 = vmatprep.subr.mxu0 0.0
    %405 = vmatpush1.msra.mxu0 %v367
    %406 = vmatprep.subr.mxu0 0.0
    %407 = vmatpush1.msra.mxu0 %v365
    %408 = vmatprep.subr.mxu0 0.0
    %409 = vmatpush2.msra.mxu0 0.0
    %410 = vmatprep.subr.mxu0 0.0
    %411 = vmatpush2.msra.mxu0 0.0
    %412 = vmatprep.subr.mxu0 0.0
    %413 = vmatpush2.msra.mxu0 0.0
    %414 = vmatprep.subr.mxu0 0.0
    %415 = vmatpush2.msra.mxu0 0.0
    %416 = vmatprep.subr.mxu0 0.0
    %417 = vmatpush2.msra.mxu0 0.0
    %418 = vmatprep.subr.mxu0 0.0
    %419 = vmatpush2.msra.mxu0 0.0
    %420 = vmatprep.subr.mxu0 0.0
    %421 = vmatpush2.msra.mxu0 0.0
    %422 = vmatprep.subr.mxu0 0.0
    %423 = vmatpush2.msra.mxu0 0.0
    %424 = vmatprep.subr.mxu0 0.0
    %425 = vmatpush2.msra.mxu0 0.0
    %426 = vmatprep.subr.mxu0 0.0
    %427 = vmatpush2.msra.mxu0 0.0
    %428 = vmatprep.subr.mxu0 0.0
    %429 = vmatpush2.msra.mxu0 0.0
    %430 = vmatprep.subr.mxu0 0.0
    %431 = vmatpush2.msra.mxu0 0.0
    %432 = vmatprep.subr.mxu0 0.0
    %433 = vmatpush2.msra.mxu0 0.0
    %434 = vmatprep.subr.mxu0 0.0
    %435 = vmatpush2.msra.mxu0 0.0
    %436 = vmatprep.subr.mxu0 0.0
    %437 = vmatpush2.msra.mxu0 0.0
    %438 = vmatprep.subr.mxu0 0.0
    %439 = vmatpush2.msra.mxu0 0.0
    %440 = vmatprep.mubr.f32.mxu0 0.0
    %441 = vmatmul.mubr.f32.gmra.mxu0 %v371
    %v442 = vpop.f32.mrf.mxu0
    %v443 = vadd.f32 0.0, %v442
    %v444 = vpop.f32.mrf.mxu0
    %445 = vmatprep.mubr.f32.mxu0 0.0
    %446 = vmatmul.mubr.f32.gmra.mxu0 %v374
    %v447 = vpop.f32.mrf.mxu0
    %v448 = vadd.f32 0.0, %v447
    %v449 = vpop.f32.mrf.mxu0
    %450 = vdwg.mxu0
    %v451 = vmul.f32 %v443, %v137
    %v452 = vmul.f32 %v448, %v137
    %v453 = vadd.f32 %v451, 0.0
    %v454 = vadd.f32 %v452, 0.0
    %v455 = vmul.f32 %v240, %v144
    %v456 = vmul.f32 %v245, %v144
    %v458 = vsel %vm166, %v455, 0
    %v461 = vsel %vm166, %v456, 0
    %463 = vmatprep.subr.mxu0 0.0
    %464 = vmatpush1.xpose.msra.mxu0 0.0
    %465 = vmatprep.subr.mxu0 0.0
    %466 = vmatpush1.xpose.msra.mxu0 0.0
    %467 = vmatprep.subr.mxu0 0.0
    %468 = vmatpush1.xpose.msra.mxu0 0.0
    %469 = vmatprep.subr.mxu0 0.0
    %470 = vmatpush1.xpose.msra.mxu0 0.0
    %471 = vmatprep.subr.mxu0 0.0
    %472 = vmatpush1.xpose.msra.mxu0 0.0
    %473 = vmatprep.subr.mxu0 0.0
    %474 = vmatpush1.xpose.msra.mxu0 0.0
    %475 = vmatprep.subr.mxu0 0.0
    %476 = vmatpush1.xpose.msra.mxu0 0.0
    %477 = vmatprep.subr.mxu0 0.0
    %478 = vmatpush1.xpose.msra.mxu0 0.0
    %479 = vmatprep.subr.mxu0 0.0
    %480 = vmatpush1.xpose.msra.mxu0 0.0
    %481 = vmatprep.subr.mxu0 0.0
    %482 = vmatpush1.xpose.msra.mxu0 0.0
    %483 = vmatprep.subr.mxu0 0.0
    %484 = vmatpush1.xpose.msra.mxu0 0.0
    %485 = vmatprep.subr.mxu0 0.0
    %486 = vmatpush1.xpose.msra.mxu0 0.0
    %487 = vmatprep.subr.mxu0 0.0
    %488 = vmatpush1.xpose.msra.mxu0 0.0
    %489 = vmatprep.subr.mxu0 0.0
    %490 = vmatpush1.xpose.msra.mxu0 0.0
    %491 = vmatprep.subr.mxu0 0.0
    %492 = vmatpush1.xpose.msra.mxu0 %v264
    %493 = vmatprep.subr.mxu0 0.0
    %494 = vmatpush1.xpose.msra.mxu0 %v262
    %495 = vmatprep.subr.mxu0 0.0
    %496 = vmatpush2.xpose.msra.mxu0 0.0
    %497 = vmatprep.subr.mxu0 0.0
    %498 = vmatpush2.xpose.msra.mxu0 0.0
    %499 = vmatprep.subr.mxu0 0.0
    %500 = vmatpush2.xpose.msra.mxu0 0.0
    %501 = vmatprep.subr.mxu0 0.0
    %502 = vmatpush2.xpose.msra.mxu0 0.0
    %503 = vmatprep.subr.mxu0 0.0
    %504 = vmatpush2.xpose.msra.mxu0 0.0
    %505 = vmatprep.subr.mxu0 0.0
    %506 = vmatpush2.xpose.msra.mxu0 0.0
    %507 = vmatprep.subr.mxu0 0.0
    %508 = vmatpush2.xpose.msra.mxu0 0.0
    %509 = vmatprep.subr.mxu0 0.0
    %510 = vmatpush2.xpose.msra.mxu0 0.0
    %511 = vmatprep.subr.mxu0 0.0
    %512 = vmatpush2.xpose.msra.mxu0 0.0
    %513 = vmatprep.subr.mxu0 0.0
    %514 = vmatpush2.xpose.msra.mxu0 0.0
    %515 = vmatprep.subr.mxu0 0.0
    %516 = vmatpush2.xpose.msra.mxu0 0.0
    %517 = vmatprep.subr.mxu0 0.0
    %518 = vmatpush2.xpose.msra.mxu0 0.0
    %519 = vmatprep.subr.mxu0 0.0
    %520 = vmatpush2.xpose.msra.mxu0 0.0
    %521 = vmatprep.subr.mxu0 0.0
    %522 = vmatpush2.xpose.msra.mxu0 0.0
    %523 = vmatprep.subr.mxu0 0.0
    %524 = vmatpush2.xpose.msra.mxu0 0.0
    %525 = vmatprep.subr.mxu0 0.0
    %526 = vmatpush2.xpose.msra.mxu0 0.0
    %527 = vmatprep.mubr.f32.mxu0 0.0
    %528 = vmatmul.mubr.f32.gmra.mxu0 %v458
    %v529 = vpop.f32.mrf.mxu0
    %v530 = vadd.f32 %v129, %v529
    %v531 = vpop.f32.mrf.mxu0
    %532 = vmatprep.mubr.f32.mxu0 0.0
    %533 = vmatmul.mubr.f32.gmra.mxu0 %v461
    %v534 = vpop.f32.mrf.mxu0
    %v535 = vadd.f32 %v130, %v534
    %v536 = vpop.f32.mrf.mxu0
    %537 = vdwg.mxu0
    %v538 = vsel %vm341, %v530, -inf
    %539 = vmax.xlane.f32.xlu0 %v538
    %v540 = vpop.xlane.xlu0 %539
    %v541 = vsel %vm341, %v535, -inf
    %542 = vmax.xlane.f32.xlu0 %v541
    %v543 = vpop.xlane.xlu0 %542
    %v544 = vsub.f32 %v530, %v540
    %v545 = vsub.f32 %v535, %v543
    %v546 = vmul.f32 %v544, 1.442695
    %v547 = vpow.pop %v546
    %v548 = vmul.f32 %v545, 1.442695
    %v549 = vpow.pop %v548
    %v550 = vsel %vm341, %v547, 0.0
    %551 = vadd.xlane.f32.xlu0 %v550
    %v552 = vpop.xlane.xlu0 %551
    %v553 = vsel %vm341, %v549, 0.0
    %554 = vadd.xlane.f32.xlu0 %v553
    %v555 = vpop.xlane.xlu0 %554
    %v556 = vrcp.pop %v552
    %v557 = vmul.f32 %v547, %v556
    %v558 = vrcp.pop %v555
    %v559 = vmul.f32 %v549, %v558
    %v561 = vsel %vm341, %v557, 0
    %v564 = vsel %vm341, %v559, 0
    %566 = vmatprep.subr.mxu0 0.0
    %567 = vmatpush1.msra.mxu0 0.0
    %568 = vmatprep.subr.mxu0 0.0
    %569 = vmatpush1.msra.mxu0 0.0
    %570 = vmatprep.subr.mxu0 0.0
    %571 = vmatpush1.msra.mxu0 0.0
    %572 = vmatprep.subr.mxu0 0.0
    %573 = vmatpush1.msra.mxu0 0.0
    %574 = vmatprep.subr.mxu0 0.0
    %575 = vmatpush1.msra.mxu0 0.0
    %576 = vmatprep.subr.mxu0 0.0
    %577 = vmatpush1.msra.mxu0 0.0
    %578 = vmatprep.subr.mxu0 0.0
    %579 = vmatpush1.msra.mxu0 0.0
    %580 = vmatprep.subr.mxu0 0.0
    %581 = vmatpush1.msra.mxu0 0.0
    %582 = vmatprep.subr.mxu0 0.0
    %583 = vmatpush1.msra.mxu0 0.0
    %584 = vmatprep.subr.mxu0 0.0
    %585 = vmatpush1.msra.mxu0 0.0
    %586 = vmatprep.subr.mxu0 0.0
    %587 = vmatpush1.msra.mxu0 0.0
    %588 = vmatprep.subr.mxu0 0.0
    %589 = vmatpush1.msra.mxu0 0.0
    %590 = vmatprep.subr.mxu0 0.0
    %591 = vmatpush1.msra.mxu0 0.0
    %592 = vmatprep.subr.mxu0 0.0
    %593 = vmatpush1.msra.mxu0 0.0
    %594 = vmatprep.subr.mxu0 0.0
    %595 = vmatpush1.msra.mxu0 %v367
    %596 = vmatprep.subr.mxu0 0.0
    %597 = vmatpush1.msra.mxu0 %v365
    %598 = vmatprep.subr.mxu0 0.0
    %599 = vmatpush2.msra.mxu0 0.0
    %600 = vmatprep.subr.mxu0 0.0
    %601 = vmatpush2.msra.mxu0 0.0
    %602 = vmatprep.subr.mxu0 0.0
    %603 = vmatpush2.msra.mxu0 0.0
    %604 = vmatprep.subr.mxu0 0.0
    %605 = vmatpush2.msra.mxu0 0.0
    %606 = vmatprep.subr.mxu0 0.0
    %607 = vmatpush2.msra.mxu0 0.0
    %608 = vmatprep.subr.mxu0 0.0
    %609 = vmatpush2.msra.mxu0 0.0
    %610 = vmatprep.subr.mxu0 0.0
    %611 = vmatpush2.msra.mxu0 0.0
    %612 = vmatprep.subr.mxu0 0.0
    %613 = vmatpush2.msra.mxu0 0.0
    %614 = vmatprep.subr.mxu0 0.0
    %615 = vmatpush2.msra.mxu0 0.0
    %616 = vmatprep.subr.mxu0 0.0
    %617 = vmatpush2.msra.mxu0 0.0
    %618 = vmatprep.subr.mxu0 0.0
    %619 = vmatpush2.msra.mxu0 0.0
    %620 = vmatprep.subr.mxu0 0.0
    %621 = vmatpush2.msra.mxu0 0.0
    %622 = vmatprep.subr.mxu0 0.0
    %623 = vmatpush2.msra.mxu0 0.0
    %624 = vmatprep.subr.mxu0 0.0
    %625 = vmatpush2.msra.mxu0 0.0
    %626 = vmatprep.subr.mxu0 0.0
    %627 = vmatpush2.msra.mxu0 0.0
    %628 = vmatprep.subr.mxu0 0.0
    %629 = vmatpush2.msra.mxu0 0.0
    %630 = vmatprep.mubr.f32.mxu0 0.0
    %631 = vmatmul.mubr.f32.gmra.mxu0 %v561
    %v632 = vpop.f32.mrf.mxu0
    %v633 = vadd.f32 0.0, %v632
    %v634 = vpop.f32.mrf.mxu0
    %635 = vmatprep.mubr.f32.mxu0 0.0
    %636 = vmatmul.mubr.f32.gmra.mxu0 %v564
    %v637 = vpop.f32.mrf.mxu0
    %v638 = vadd.f32 0.0, %v637
    %v639 = vpop.f32.mrf.mxu0
    %640 = vdwg.mxu0
    %v641 = vmul.f32 %v633, %v143
    %v642 = vmul.f32 %v638, %v143
    %v643 = vadd.f32 %v453, %v641
    %v644 = vadd.f32 %v454, %v642
    %v646 = vlaneseq
    %v647 = vshrl.u32 %v646, 7
    %v648 = vsub.s32 0, %v647
    %v649 = vrot.slane %v159, %v648
    %v652 = vsel %vm166, %v643, 0
    %v655 = vsel %vm166, %v644, 0
    %657 = vmatprep.subr.mxu0 0.0
    %658 = vmatpush1.msra.mxu0 0.0
    %659 = vmatprep.subr.mxu0 0.0
    %660 = vmatpush1.msra.mxu0 0.0
    %661 = vmatprep.subr.mxu0 0.0
    %662 = vmatpush1.msra.mxu0 0.0
    %663 = vmatprep.subr.mxu0 0.0
    %664 = vmatpush1.msra.mxu0 0.0
    %665 = vmatprep.subr.mxu0 0.0
    %666 = vmatpush1.msra.mxu0 0.0
    %667 = vmatprep.subr.mxu0 0.0
    %668 = vmatpush1.msra.mxu0 0.0
    %669 = vmatprep.subr.mxu0 0.0
    %670 = vmatpush1.msra.mxu0 0.0
    %671 = vmatprep.subr.mxu0 0.0
    %672 = vmatpush1.msra.mxu0 0.0
    %673 = vmatprep.subr.mxu0 0.0
    %674 = vmatpush1.msra.mxu0 0.0
    %675 = vmatprep.subr.mxu0 0.0
    %676 = vmatpush1.msra.mxu0 0.0
    %677 = vmatprep.subr.mxu0 0.0
    %678 = vmatpush1.msra.mxu0 0.0
    %679 = vmatprep.subr.mxu0 0.0
    %680 = vmatpush1.msra.mxu0 0.0
    %681 = vmatprep.subr.mxu0 0.0
    %682 = vmatpush1.msra.mxu0 %v158
    %683 = vmatprep.subr.mxu0 0.0
    %684 = vmatpush1.msra.mxu0 %v157
    %685 = vmatprep.subr.mxu0 0.0
    %686 = vmatpush1.msra.mxu0 %v156
    %687 = vmatprep.subr.mxu0 0.0
    %688 = vmatpush1.msra.mxu0 %v155
    %689 = vmatprep.subr.mxu0 0.0
    %690 = vmatpush2.msra.mxu0 0.0
    %691 = vmatprep.subr.mxu0 0.0
    %692 = vmatpush2.msra.mxu0 0.0
    %693 = vmatprep.subr.mxu0 0.0
    %694 = vmatpush2.msra.mxu0 0.0
    %695 = vmatprep.subr.mxu0 0.0
    %696 = vmatpush2.msra.mxu0 0.0
    %697 = vmatprep.subr.mxu0 0.0
    %698 = vmatpush2.msra.mxu0 0.0
    %699 = vmatprep.subr.mxu0 0.0
    %700 = vmatpush2.msra.mxu0 0.0
    %701 = vmatprep.subr.mxu0 0.0
    %702 = vmatpush2.msra.mxu0 0.0
    %703 = vmatprep.subr.mxu0 0.0
    %704 = vmatpush2.msra.mxu0 0.0
    %705 = vmatprep.subr.mxu0 0.0
    %706 = vmatpush2.msra.mxu0 0.0
    %707 = vmatprep.subr.mxu0 0.0
    %708 = vmatpush2.msra.mxu0 0.0
    %709 = vmatprep.subr.mxu0 0.0
    %710 = vmatpush2.msra.mxu0 0.0
    %711 = vmatprep.subr.mxu0 0.0
    %712 = vmatpush2.msra.mxu0 0.0
    %713 = vmatprep.subr.mxu0 0.0
    %714 = vmatpush2.msra.mxu0 0.0
    %715 = vmatprep.subr.mxu0 0.0
    %716 = vmatpush2.msra.mxu0 0.0
    %717 = vmatprep.subr.mxu0 0.0
    %718 = vmatpush2.msra.mxu0 0.0
    %719 = vmatprep.subr.mxu0 0.0
    %720 = vmatpush2.msra.mxu0 0.0
    %721 = vmatprep.mubr.f32.mxu0 0.0
    %722 = vmatmul.mubr.f32.gmra.mxu0 %v652
    %v723 = vpop.f32.mrf.mxu0
    %v724 = vadd.f32 %v649, %v723
    %v725 = vpop.f32.mrf.mxu0
    %726 = vmatprep.mubr.f32.mxu0 0.0
    %727 = vmatmul.mubr.f32.gmra.mxu0 %v655
    %v728 = vpop.f32.mrf.mxu0
    %v729 = vadd.f32 %v649, %v728
    %v730 = vpop.f32.mrf.mxu0
    %731 = vdwg.mxu0
    %v732 = vld [vmem:[%s6] sm:$0x1]
    %v733 = vld [vmem:[%s7] sm:$0x1]
    %v734 = vsel %vm166, %v724, 0.0
    %v735 = vsel %vm166, %v729, 0.0
    %v736 = vadd.f32 %v734, %v735
    %v737 = vrot.slane %v736, 4
    %v738 = vadd.f32 %v736, %v737
    %v739 = vrot.slane %v738, 2
    %v740 = vadd.f32 %v738, %v739
    %v741 = vrot.slane %v740, 1
    %v742 = vadd.f32 %v740, %v741
    %v743 = vmul.f32 %v742, 0.0625
    %v744 = vmul.f32 %v724, %v724
    %v745 = vmul.f32 %v729, %v729
    %v746 = vsel %vm166, %v744, 0.0
    %v747 = vsel %vm166, %v745, 0.0
    %v748 = vadd.f32 %v746, %v747
    %v749 = vrot.slane %v748, 4
    %v750 = vadd.f32 %v748, %v749
    %v751 = vrot.slane %v750, 2
    %v752 = vadd.f32 %v750, %v751
    %v753 = vrot.slane %v752, 1
    %v754 = vadd.f32 %v752, %v753
    %v755 = vmul.f32 %v754, 0.0625
    %v756 = vmul.f32 %v743, %v743
    %v757 = vsub.f32 %v755, %v756
    %v758 = vadd.f32 %v757, 1e-05
    %v759 = vrsqrt.pop %v758
    %v760 = vmul.f32 %v758, %v759
    %vm761 = vcmp.eq.f32.partialorder %v758, inf
    %v762 = vsel %vm761, %v758, %v760
    %vm763 = vcmp.eq.f32.partialorder %v758, 0.0
    %v764 = vand.u32 %v758, 2147483648
    %v765 = vsel %vm763, %v764, %v762
    %v766 = vrcp.pop %v765
    %v767 = vmul.f32 %v732, %v766
    %v768 = vsub.f32 %v724, %v743
    %v769 = vsub.f32 %v729, %v743
    %v771 = vlaneseq
    %v772 = vshrl.u32 %v771, 7
    %v773 = vsub.s32 0, %v772
    %v774 = vrot.slane %v767, %v773
    %v776 = vmul.f32 %v768, %v774
    %v777 = vmul.f32 %v769, %v774
    %v779 = vlaneseq
    %v780 = vshrl.u32 %v779, 7
    %v781 = vsub.s32 0, %v780
    %v782 = vrot.slane %v733, %v781
    %v784 = vadd.f32 %v782, %v145
    %v785 = vadd.f32 %v782, %v146
    %v786 = vadd.f32 %v776, %v784
    %v787 = vadd.f32 %v777, %v785
    %s788 = scalar_lea.vmem %s2, 32
    %v789 = vld [vmem:[%s788] sm:$0xff]
    %v790 = vld [vmem:[%s788 + $0x8] sm:$0xff]
    %v791 = vld [vmem:[%s788 + $0x10] sm:$0xff]
    %v792 = vld [vmem:[%s788 + $0x18] sm:$0xff]
    %s793 = scalar_lea.vmem %s3, 1
    %v794 = vld [vmem:[%s793] sm:$0x1]
    %s795 = scalar_lea.vmem [#allocation2], 32
    %v796 = vld [vmem:[%s795] sm:$0xff]
    %v797 = vld [vmem:[%s795 + $0x8] sm:$0xff]
    %v798 = vld [vmem:[%s795 + $0x10] sm:$0xff]
    %v799 = vld [vmem:[%s795 + $0x18] sm:$0xff]
    %s800 = scalar_lea.vmem %s5, 1
    %v801 = vld [vmem:[%s800] sm:$0x1]
    %v803 = vlaneseq
    %v804 = vshrl.u32 %v803, 7
    %v805 = vsub.s32 0, %v804
    %v806 = vrot.slane %v794, %v805
    %v809 = vsel %vm166, %v148, 0
    %v812 = vsel %vm166, %v149, 0
    %814 = vmatprep.subr.mxu0 0.0
    %815 = vmatpush1.msra.mxu0 0.0
    %816 = vmatprep.subr.mxu0 0.0
    %817 = vmatpush1.msra.mxu0 0.0
    %818 = vmatprep.subr.mxu0 0.0
    %819 = vmatpush1.msra.mxu0 0.0
    %820 = vmatprep.subr.mxu0 0.0
    %821 = vmatpush1.msra.mxu0 0.0
    %822 = vmatprep.subr.mxu0 0.0
    %823 = vmatpush1.msra.mxu0 0.0
    %824 = vmatprep.subr.mxu0 0.0
    %825 = vmatpush1.msra.mxu0 0.0
    %826 = vmatprep.subr.mxu0 0.0
    %827 = vmatpush1.msra.mxu0 0.0
    %828 = vmatprep.subr.mxu0 0.0
    %829 = vmatpush1.msra.mxu0 0.0
    %830 = vmatprep.subr.mxu0 0.0
    %831 = vmatpush1.msra.mxu0 0.0
    %832 = vmatprep.subr.mxu0 0.0
    %833 = vmatpush1.msra.mxu0 0.0
    %834 = vmatprep.subr.mxu0 0.0
    %835 = vmatpush1.msra.mxu0 0.0
    %836 = vmatprep.subr.mxu0 0.0
    %837 = vmatpush1.msra.mxu0 0.0
    %838 = vmatprep.subr.mxu0 0.0
    %839 = vmatpush1.msra.mxu0 %v792
    %840 = vmatprep.subr.mxu0 0.0
    %841 = vmatpush1.msra.mxu0 %v791
    %842 = vmatprep.subr.mxu0 0.0
    %843 = vmatpush1.msra.mxu0 %v790
    %844 = vmatprep.subr.mxu0 0.0
    %845 = vmatpush1.msra.mxu0 %v789
    %846 = vmatprep.subr.mxu0 0.0
    %847 = vmatpush2.msra.mxu0 0.0
    %848 = vmatprep.subr.mxu0 0.0
    %849 = vmatpush2.msra.mxu0 0.0
    %850 = vmatprep.subr.mxu0 0.0
    %851 = vmatpush2.msra.mxu0 0.0
    %852 = vmatprep.subr.mxu0 0.0
    %853 = vmatpush2.msra.mxu0 0.0
    %854 = vmatprep.subr.mxu0 0.0
    %855 = vmatpush2.msra.mxu0 0.0
    %856 = vmatprep.subr.mxu0 0.0
    %857 = vmatpush2.msra.mxu0 0.0
    %858 = vmatprep.subr.mxu0 0.0
    %859 = vmatpush2.msra.mxu0 0.0
    %860 = vmatprep.subr.mxu0 0.0
    %861 = vmatpush2.msra.mxu0 0.0
    %862 = vmatprep.subr.mxu0 0.0
    %863 = vmatpush2.msra.mxu0 0.0
    %864 = vmatprep.subr.mxu0 0.0
    %865 = vmatpush2.msra.mxu0 0.0
    %866 = vmatprep.subr.mxu0 0.0
    %867 = vmatpush2.msra.mxu0 0.0
    %868 = vmatprep.subr.mxu0 0.0
    %869 = vmatpush2.msra.mxu0 0.0
    %870 = vmatprep.subr.mxu0 0.0
    %871 = vmatpush2.msra.mxu0 0.0
    %872 = vmatprep.subr.mxu0 0.0
    %873 = vmatpush2.msra.mxu0 0.0
    %874 = vmatprep.subr.mxu0 0.0
    %875 = vmatpush2.msra.mxu0 0.0
    %876 = vmatprep.subr.mxu0 0.0
    %877 = vmatpush2.msra.mxu0 0.0
    %878 = vmatprep.mubr.f32.mxu0 0.0
    %879 = vmatmul.mubr.f32.gmra.mxu0 %v809
    %v880 = vpop.f32.mrf.mxu0
    %v881 = vadd.f32 %v806, %v880
    %v882 = vpop.f32.mrf.mxu0
    %883 = vmatprep.mubr.f32.mxu0 0.0
    %884 = vmatmul.mubr.f32.gmra.mxu0 %v812
    %v885 = vpop.f32.mrf.mxu0
    %v886 = vadd.f32 %v806, %v885
    %v887 = vpop.f32.mrf.mxu0
    %888 = vdwg.mxu0
    %v889 = vmul.f32 %v881, %v138
    %v890 = vmul.f32 %v886, %v138
    %893 = vrot.lane.b32.xlu0 %v881, 96
    %v894 = vpop.permute.xlu0 %893
    %895 = vrot.lane.b32.xlu0 %v886, 96
    %v896 = vpop.permute.xlu0 %895
    %v898 = vsel %vm166, %v889, 0
    %v901 = vsel %vm166, %v890, 0
    %v903 = vsel %vm166, %v894, 0
    %v905 = vsel %vm166, %v896, 0
    %907 = vmatprep.subr.mxu0 0.0
    %908 = vmatpush1.xpose.msra.mxu0 0.0
    %909 = vmatprep.subr.mxu0 0.0
    %910 = vmatpush1.xpose.msra.mxu0 0.0
    %911 = vmatprep.subr.mxu0 0.0
    %912 = vmatpush1.xpose.msra.mxu0 0.0
    %913 = vmatprep.subr.mxu0 0.0
    %914 = vmatpush1.xpose.msra.mxu0 0.0
    %915 = vmatprep.subr.mxu0 0.0
    %916 = vmatpush1.xpose.msra.mxu0 0.0
    %917 = vmatprep.subr.mxu0 0.0
    %918 = vmatpush1.xpose.msra.mxu0 0.0
    %919 = vmatprep.subr.mxu0 0.0
    %920 = vmatpush1.xpose.msra.mxu0 0.0
    %921 = vmatprep.subr.mxu0 0.0
    %922 = vmatpush1.xpose.msra.mxu0 0.0
    %923 = vmatprep.subr.mxu0 0.0
    %924 = vmatpush1.xpose.msra.mxu0 0.0
    %925 = vmatprep.subr.mxu0 0.0
    %926 = vmatpush1.xpose.msra.mxu0 0.0
    %927 = vmatprep.subr.mxu0 0.0
    %928 = vmatpush1.xpose.msra.mxu0 0.0
    %929 = vmatprep.subr.mxu0 0.0
    %930 = vmatpush1.xpose.msra.mxu0 0.0
    %931 = vmatprep.subr.mxu0 0.0
    %932 = vmatpush1.xpose.msra.mxu0 0.0
    %933 = vmatprep.subr.mxu0 0.0
    %934 = vmatpush1.xpose.msra.mxu0 0.0
    %935 = vmatprep.subr.mxu0 0.0
    %936 = vmatpush1.xpose.msra.mxu0 %v905
    %937 = vmatprep.subr.mxu0 0.0
    %938 = vmatpush1.xpose.msra.mxu0 %v903
    %939 = vmatprep.subr.mxu0 0.0
    %940 = vmatpush2.xpose.msra.mxu0 0.0
    %941 = vmatprep.subr.mxu0 0.0
    %942 = vmatpush2.xpose.msra.mxu0 0.0
    %943 = vmatprep.subr.mxu0 0.0
    %944 = vmatpush2.xpose.msra.mxu0 0.0
    %945 = vmatprep.subr.mxu0 0.0
    %946 = vmatpush2.xpose.msra.mxu0 0.0
    %947 = vmatprep.subr.mxu0 0.0
    %948 = vmatpush2.xpose.msra.mxu0 0.0
    %949 = vmatprep.subr.mxu0 0.0
    %950 = vmatpush2.xpose.msra.mxu0 0.0
    %951 = vmatprep.subr.mxu0 0.0
    %952 = vmatpush2.xpose.msra.mxu0 0.0
    %953 = vmatprep.subr.mxu0 0.0
    %954 = vmatpush2.xpose.msra.mxu0 0.0
    %955 = vmatprep.subr.mxu0 0.0
    %956 = vmatpush2.xpose.msra.mxu0 0.0
    %957 = vmatprep.subr.mxu0 0.0
    %958 = vmatpush2.xpose.msra.mxu0 0.0
    %959 = vmatprep.subr.mxu0 0.0
    %960 = vmatpush2.xpose.msra.mxu0 0.0
    %961 = vmatprep.subr.mxu0 0.0
    %962 = vmatpush2.xpose.msra.mxu0 0.0
    %963 = vmatprep.subr.mxu0 0.0
    %964 = vmatpush2.xpose.msra.mxu0 0.0
    %965 = vmatprep.subr.mxu0 0.0
    %966 = vmatpush2.xpose.msra.mxu0 0.0
    %967 = vmatprep.subr.mxu0 0.0
    %968 = vmatpush2.xpose.msra.mxu0 0.0
    %969 = vmatprep.subr.mxu0 0.0
    %970 = vmatpush2.xpose.msra.mxu0 0.0
    %971 = vmatprep.mubr.f32.mxu0 0.0
    %972 = vmatmul.mubr.f32.gmra.mxu0 %v898
    %v973 = vpop.f32.mrf.mxu0
    %v974 = vadd.f32 %v129, %v973
    %v975 = vpop.f32.mrf.mxu0
    %976 = vmatprep.mubr.f32.mxu0 0.0
    %977 = vmatmul.mubr.f32.gmra.mxu0 %v901
    %v978 = vpop.f32.mrf.mxu0
    %v979 = vadd.f32 %v130, %v978
    %v980 = vpop.f32.mrf.mxu0
    %981 = vdwg.mxu0
    %v982 = vsel %vm341, %v974, -inf
    %983 = vmax.xlane.f32.xlu0 %v982
    %v984 = vpop.xlane.xlu0 %983
    %v985 = vsel %vm341, %v979, -inf
    %986 = vmax.xlane.f32.xlu0 %v985
    %v987 = vpop.xlane.xlu0 %986
    %v988 = vsub.f32 %v974, %v984
    %v989 = vsub.f32 %v979, %v987
    %v990 = vmul.f32 %v988, 1.442695
    %v991 = vpow.pop %v990
    %v992 = vmul.f32 %v989, 1.442695
    %v993 = vpow.pop %v992
    %v994 = vsel %vm341, %v991, 0.0
    %995 = vadd.xlane.f32.xlu0 %v994
    %v996 = vpop.xlane.xlu0 %995
    %v997 = vsel %vm341, %v993, 0.0
    %998 = vadd.xlane.f32.xlu0 %v997
    %v999 = vpop.xlane.xlu0 %998
    %v1000 = vrcp.pop %v996
    %v1001 = vmul.f32 %v991, %v1000
    %v1002 = vrcp.pop %v999
    %v1003 = vmul.f32 %v993, %v1002
    %1004 = vrot.lane.b32.xlu0 %v881, 64
    %v1005 = vpop.permute.xlu0 %1004
    %1006 = vrot.lane.b32.xlu0 %v886, 64
    %v1007 = vpop.permute.xlu0 %1006
    %v1011 = vsel %vm341, %v1001, 0
    %v1014 = vsel %vm341, %v1003, 0
    %1016 = vmatprep.subr.mxu0 0.0
    %1017 = vmatpush1.msra.mxu0 0.0
    %1018 = vmatprep.subr.mxu0 0.0
    %1019 = vmatpush1.msra.mxu0 0.0
    %1020 = vmatprep.subr.mxu0 0.0
    %1021 = vmatpush1.msra.mxu0 0.0
    %1022 = vmatprep.subr.mxu0 0.0
    %1023 = vmatpush1.msra.mxu0 0.0
    %1024 = vmatprep.subr.mxu0 0.0
    %1025 = vmatpush1.msra.mxu0 0.0
    %1026 = vmatprep.subr.mxu0 0.0
    %1027 = vmatpush1.msra.mxu0 0.0
    %1028 = vmatprep.subr.mxu0 0.0
    %1029 = vmatpush1.msra.mxu0 0.0
    %1030 = vmatprep.subr.mxu0 0.0
    %1031 = vmatpush1.msra.mxu0 0.0
    %1032 = vmatprep.subr.mxu0 0.0
    %1033 = vmatpush1.msra.mxu0 0.0
    %1034 = vmatprep.subr.mxu0 0.0
    %1035 = vmatpush1.msra.mxu0 0.0
    %1036 = vmatprep.subr.mxu0 0.0
    %1037 = vmatpush1.msra.mxu0 0.0
    %1038 = vmatprep.subr.mxu0 0.0
    %1039 = vmatpush1.msra.mxu0 0.0
    %1040 = vmatprep.subr.mxu0 0.0
    %1041 = vmatpush1.msra.mxu0 0.0
    %1042 = vmatprep.subr.mxu0 0.0
    %1043 = vmatpush1.msra.mxu0 0.0
    %1044 = vmatprep.subr.mxu0 0.0
    %1045 = vmatpush1.msra.mxu0 %v1007
    %1046 = vmatprep.subr.mxu0 0.0
    %1047 = vmatpush1.msra.mxu0 %v1005
    %1048 = vmatprep.subr.mxu0 0.0
    %1049 = vmatpush2.msra.mxu0 0.0
    %1050 = vmatprep.subr.mxu0 0.0
    %1051 = vmatpush2.msra.mxu0 0.0
    %1052 = vmatprep.subr.mxu0 0.0
    %1053 = vmatpush2.msra.mxu0 0.0
    %1054 = vmatprep.subr.mxu0 0.0
    %1055 = vmatpush2.msra.mxu0 0.0
    %1056 = vmatprep.subr.mxu0 0.0
    %1057 = vmatpush2.msra.mxu0 0.0
    %1058 = vmatprep.subr.mxu0 0.0
    %1059 = vmatpush2.msra.mxu0 0.0
    %1060 = vmatprep.subr.mxu0 0.0
    %1061 = vmatpush2.msra.mxu0 0.0
    %1062 = vmatprep.subr.mxu0 0.0
    %1063 = vmatpush2.msra.mxu0 0.0
    %1064 = vmatprep.subr.mxu0 0.0
    %1065 = vmatpush2.msra.mxu0 0.0
    %1066 = vmatprep.subr.mxu0 0.0
    %1067 = vmatpush2.msra.mxu0 0.0
    %1068 = vmatprep.subr.mxu0 0.0
    %1069 = vmatpush2.msra.mxu0 0.0
    %1070 = vmatprep.subr.mxu0 0.0
    %1071 = vmatpush2.msra.mxu0 0.0
    %1072 = vmatprep.subr.mxu0 0.0
    %1073 = vmatpush2.msra.mxu0 0.0
    %1074 = vmatprep.subr.mxu0 0.0
    %1075 = vmatpush2.msra.mxu0 0.0
    %1076 = vmatprep.subr.mxu0 0.0
    %1077 = vmatpush2.msra.mxu0 0.0
    %1078 = vmatprep.subr.mxu0 0.0
    %1079 = vmatpush2.msra.mxu0 0.0
    %1080 = vmatprep.mubr.f32.mxu0 0.0
    %1081 = vmatmul.mubr.f32.gmra.mxu0 %v1011
    %v1082 = vpop.f32.mrf.mxu0
    %v1083 = vadd.f32 0.0, %v1082
    %v1084 = vpop.f32.mrf.mxu0
    %1085 = vmatprep.mubr.f32.mxu0 0.0
    %1086 = vmatmul.mubr.f32.gmra.mxu0 %v1014
    %v1087 = vpop.f32.mrf.mxu0
    %v1088 = vadd.f32 0.0, %v1087
    %v1089 = vpop.f32.mrf.mxu0
    %1090 = vdwg.mxu0
    %v1091 = vmul.f32 %v1083, %v137
    %v1092 = vmul.f32 %v1088, %v137
    %v1093 = vadd.f32 %v1091, 0.0
    %v1094 = vadd.f32 %v1092, 0.0
    %v1095 = vmul.f32 %v881, %v144
    %v1096 = vmul.f32 %v886, %v144
    %v1098 = vsel %vm166, %v1095, 0
    %v1101 = vsel %vm166, %v1096, 0
    %1103 = vmatprep.subr.mxu0 0.0
    %1104 = vmatpush1.xpose.msra.mxu0 0.0
    %1105 = vmatprep.subr.mxu0 0.0
    %1106 = vmatpush1.xpose.msra.mxu0 0.0
    %1107 = vmatprep.subr.mxu0 0.0
    %1108 = vmatpush1.xpose.msra.mxu0 0.0
    %1109 = vmatprep.subr.mxu0 0.0
    %1110 = vmatpush1.xpose.msra.mxu0 0.0
    %1111 = vmatprep.subr.mxu0 0.0
    %1112 = vmatpush1.xpose.msra.mxu0 0.0
    %1113 = vmatprep.subr.mxu0 0.0
    %1114 = vmatpush1.xpose.msra.mxu0 0.0
    %1115 = vmatprep.subr.mxu0 0.0
    %1116 = vmatpush1.xpose.msra.mxu0 0.0
    %1117 = vmatprep.subr.mxu0 0.0
    %1118 = vmatpush1.xpose.msra.mxu0 0.0
    %1119 = vmatprep.subr.mxu0 0.0
    %1120 = vmatpush1.xpose.msra.mxu0 0.0
    %1121 = vmatprep.subr.mxu0 0.0
    %1122 = vmatpush1.xpose.msra.mxu0 0.0
    %1123 = vmatprep.subr.mxu0 0.0
    %1124 = vmatpush1.xpose.msra.mxu0 0.0
    %1125 = vmatprep.subr.mxu0 0.0
    %1126 = vmatpush1.xpose.msra.mxu0 0.0
    %1127 = vmatprep.subr.mxu0 0.0
    %1128 = vmatpush1.xpose.msra.mxu0 0.0
    %1129 = vmatprep.subr.mxu0 0.0
    %1130 = vmatpush1.xpose.msra.mxu0 0.0
    %1131 = vmatprep.subr.mxu0 0.0
    %1132 = vmatpush1.xpose.msra.mxu0 %v905
    %1133 = vmatprep.subr.mxu0 0.0
    %1134 = vmatpush1.xpose.msra.mxu0 %v903
    %1135 = vmatprep.subr.mxu0 0.0
    %1136 = vmatpush2.xpose.msra.mxu0 0.0
    %1137 = vmatprep.subr.mxu0 0.0
    %1138 = vmatpush2.xpose.msra.mxu0 0.0
    %1139 = vmatprep.subr.mxu0 0.0
    %1140 = vmatpush2.xpose.msra.mxu0 0.0
    %1141 = vmatprep.subr.mxu0 0.0
    %1142 = vmatpush2.xpose.msra.mxu0 0.0
    %1143 = vmatprep.subr.mxu0 0.0
    %1144 = vmatpush2.xpose.msra.mxu0 0.0
    %1145 = vmatprep.subr.mxu0 0.0
    %1146 = vmatpush2.xpose.msra.mxu0 0.0
    %1147 = vmatprep.subr.mxu0 0.0
    %1148 = vmatpush2.xpose.msra.mxu0 0.0
    %1149 = vmatprep.subr.mxu0 0.0
    %1150 = vmatpush2.xpose.msra.mxu0 0.0
    %1151 = vmatprep.subr.mxu0 0.0
    %1152 = vmatpush2.xpose.msra.mxu0 0.0
    %1153 = vmatprep.subr.mxu0 0.0
    %1154 = vmatpush2.xpose.msra.mxu0 0.0
    %1155 = vmatprep.subr.mxu0 0.0
    %1156 = vmatpush2.xpose.msra.mxu0 0.0
    %1157 = vmatprep.subr.mxu0 0.0
    %1158 = vmatpush2.xpose.msra.mxu0 0.0
    %1159 = vmatprep.subr.mxu0 0.0
    %1160 = vmatpush2.xpose.msra.mxu0 0.0
    %1161 = vmatprep.subr.mxu0 0.0
    %1162 = vmatpush2.xpose.msra.mxu0 0.0
    %1163 = vmatprep.subr.mxu0 0.0
    %1164 = vmatpush2.xpose.msra.mxu0 0.0
    %1165 = vmatprep.subr.mxu0 0.0
    %1166 = vmatpush2.xpose.msra.mxu0 0.0
    %1167 = vmatprep.mubr.f32.mxu0 0.0
    %1168 = vmatmul.mubr.f32.gmra.mxu0 %v1098
    %v1169 = vpop.f32.mrf.mxu0
    %v1170 = vadd.f32 %v129, %v1169
    %v1171 = vpop.f32.mrf.mxu0
    %1172 = vmatprep.mubr.f32.mxu0 0.0
    %1173 = vmatmul.mubr.f32.gmra.mxu0 %v1101
    %v1174 = vpop.f32.mrf.mxu0
    %v1175 = vadd.f32 %v130, %v1174
    %v1176 = vpop.f32.mrf.mxu0
    %1177 = vdwg.mxu0
    %v1178 = vsel %vm341, %v1170, -inf
    %1179 = vmax.xlane.f32.xlu0 %v1178
    %v1180 = vpop.xlane.xlu0 %1179
    %v1181 = vsel %vm341, %v1175, -inf
    %1182 = vmax.xlane.f32.xlu0 %v1181
    %v1183 = vpop.xlane.xlu0 %1182
    %v1184 = vsub.f32 %v1170, %v1180
    %v1185 = vsub.f32 %v1175, %v1183
    %v1186 = vmul.f32 %v1184, 1.442695
    %v1187 = vpow.pop %v1186
    %v1188 = vmul.f32 %v1185, 1.442695
    %v1189 = vpow.pop %v1188
    %v1190 = vsel %vm341, %v1187, 0.0
    %1191 = vadd.xlane.f32.xlu0 %v1190
    %v1192 = vpop.xlane.xlu0 %1191
    %v1193 = vsel %vm341, %v1189, 0.0
    %1194 = vadd.xlane.f32.xlu0 %v1193
    %v1195 = vpop.xlane.xlu0 %1194
    %v1196 = vrcp.pop %v1192
    %v1197 = vmul.f32 %v1187, %v1196
    %v1198 = vrcp.pop %v1195
    %v1199 = vmul.f32 %v1189, %v1198
    %v1201 = vsel %vm341, %v1197, 0
    %v1204 = vsel %vm341, %v1199, 0
    %1206 = vmatprep.subr.mxu0 0.0
    %1207 = vmatpush1.msra.mxu0 0.0
    %1208 = vmatprep.subr.mxu0 0.0
    %1209 = vmatpush1.msra.mxu0 0.0
    %1210 = vmatprep.subr.mxu0 0.0
    %1211 = vmatpush1.msra.mxu0 0.0
    %1212 = vmatprep.subr.mxu0 0.0
    %1213 = vmatpush1.msra.mxu0 0.0
    %1214 = vmatprep.subr.mxu0 0.0
    %1215 = vmatpush1.msra.mxu0 0.0
    %1216 = vmatprep.subr.mxu0 0.0
    %1217 = vmatpush1.msra.mxu0 0.0
    %1218 = vmatprep.subr.mxu0 0.0
    %1219 = vmatpush1.msra.mxu0 0.0
    %1220 = vmatprep.subr.mxu0 0.0
    %1221 = vmatpush1.msra.mxu0 0.0
    %1222 = vmatprep.subr.mxu0 0.0
    %1223 = vmatpush1.msra.mxu0 0.0
    %1224 = vmatprep.subr.mxu0 0.0
    %1225 = vmatpush1.msra.mxu0 0.0
    %1226 = vmatprep.subr.mxu0 0.0
    %1227 = vmatpush1.msra.mxu0 0.0
    %1228 = vmatprep.subr.mxu0 0.0
    %1229 = vmatpush1.msra.mxu0 0.0
    %1230 = vmatprep.subr.mxu0 0.0
    %1231 = vmatpush1.msra.mxu0 0.0
    %1232 = vmatprep.subr.mxu0 0.0
    %1233 = vmatpush1.msra.mxu0 0.0
    %1234 = vmatprep.subr.mxu0 0.0
    %1235 = vmatpush1.msra.mxu0 %v1007
    %1236 = vmatprep.subr.mxu0 0.0
    %1237 = vmatpush1.msra.mxu0 %v1005
    %1238 = vmatprep.subr.mxu0 0.0
    %1239 = vmatpush2.msra.mxu0 0.0
    %1240 = vmatprep.subr.mxu0 0.0
    %1241 = vmatpush2.msra.mxu0 0.0
    %1242 = vmatprep.subr.mxu0 0.0
    %1243 = vmatpush2.msra.mxu0 0.0
    %1244 = vmatprep.subr.mxu0 0.0
    %1245 = vmatpush2.msra.mxu0 0.0
    %1246 = vmatprep.subr.mxu0 0.0
    %1247 = vmatpush2.msra.mxu0 0.0
    %1248 = vmatprep.subr.mxu0 0.0
    %1249 = vmatpush2.msra.mxu0 0.0
    %1250 = vmatprep.subr.mxu0 0.0
    %1251 = vmatpush2.msra.mxu0 0.0
    %1252 = vmatprep.subr.mxu0 0.0
    %1253 = vmatpush2.msra.mxu0 0.0
    %1254 = vmatprep.subr.mxu0 0.0
    %1255 = vmatpush2.msra.mxu0 0.0
    %1256 = vmatprep.subr.mxu0 0.0
    %1257 = vmatpush2.msra.mxu0 0.0
    %1258 = vmatprep.subr.mxu0 0.0
    %1259 = vmatpush2.msra.mxu0 0.0
    %1260 = vmatprep.subr.mxu0 0.0
    %1261 = vmatpush2.msra.mxu0 0.0
    %1262 = vmatprep.subr.mxu0 0.0
    %1263 = vmatpush2.msra.mxu0 0.0
    %1264 = vmatprep.subr.mxu0 0.0
    %1265 = vmatpush2.msra.mxu0 0.0
    %1266 = vmatprep.subr.mxu0 0.0
    %1267 = vmatpush2.msra.mxu0 0.0
    %1268 = vmatprep.subr.mxu0 0.0
    %1269 = vmatpush2.msra.mxu0 0.0
    %1270 = vmatprep.mubr.f32.mxu0 0.0
    %1271 = vmatmul.mubr.f32.gmra.mxu0 %v1201
    %v1272 = vpop.f32.mrf.mxu0
    %v1273 = vadd.f32 0.0, %v1272
    %v1274 = vpop.f32.mrf.mxu0
    %1275 = vmatprep.mubr.f32.mxu0 0.0
    %1276 = vmatmul.mubr.f32.gmra.mxu0 %v1204
    %v1277 = vpop.f32.mrf.mxu0
    %v1278 = vadd.f32 0.0, %v1277
    %v1279 = vpop.f32.mrf.mxu0
    %1280 = vdwg.mxu0
    %v1281 = vmul.f32 %v1273, %v143
    %v1282 = vmul.f32 %v1278, %v143
    %v1283 = vadd.f32 %v1093, %v1281
    %v1284 = vadd.f32 %v1094, %v1282
    %v1286 = vlaneseq
    %v1287 = vshrl.u32 %v1286, 7
    %v1288 = vsub.s32 0, %v1287
    %v1289 = vrot.slane %v801, %v1288
    %v1292 = vsel %vm166, %v1283, 0
    %v1295 = vsel %vm166, %v1284, 0
    %1297 = vmatprep.subr.mxu0 0.0
    %1298 = vmatpush1.msra.mxu0 0.0
    %1299 = vmatprep.subr.mxu0 0.0
    %1300 = vmatpush1.msra.mxu0 0.0
    %1301 = vmatprep.subr.mxu0 0.0
    %1302 = vmatpush1.msra.mxu0 0.0
    %1303 = vmatprep.subr.mxu0 0.0
    %1304 = vmatpush1.msra.mxu0 0.0
    %1305 = vmatprep.subr.mxu0 0.0
    %1306 = vmatpush1.msra.mxu0 0.0
    %1307 = vmatprep.subr.mxu0 0.0
    %1308 = vmatpush1.msra.mxu0 0.0
    %1309 = vmatprep.subr.mxu0 0.0
    %1310 = vmatpush1.msra.mxu0 0.0
    %1311 = vmatprep.subr.mxu0 0.0
    %1312 = vmatpush1.msra.mxu0 0.0
    %1313 = vmatprep.subr.mxu0 0.0
    %1314 = vmatpush1.msra.mxu0 0.0
    %1315 = vmatprep.subr.mxu0 0.0
    %1316 = vmatpush1.msra.mxu0 0.0
    %1317 = vmatprep.subr.mxu0 0.0
    %1318 = vmatpush1.msra.mxu0 0.0
    %1319 = vmatprep.subr.mxu0 0.0
    %1320 = vmatpush1.msra.mxu0 0.0
    %1321 = vmatprep.subr.mxu0 0.0
    %1322 = vmatpush1.msra.mxu0 %v799
    %1323 = vmatprep.subr.mxu0 0.0
    %1324 = vmatpush1.msra.mxu0 %v798
    %1325 = vmatprep.subr.mxu0 0.0
    %1326 = vmatpush1.msra.mxu0 %v797
    %1327 = vmatprep.subr.mxu0 0.0
    %1328 = vmatpush1.msra.mxu0 %v796
    %1329 = vmatprep.subr.mxu0 0.0
    %1330 = vmatpush2.msra.mxu0 0.0
    %1331 = vmatprep.subr.mxu0 0.0
    %1332 = vmatpush2.msra.mxu0 0.0
    %1333 = vmatprep.subr.mxu0 0.0
    %1334 = vmatpush2.msra.mxu0 0.0
    %1335 = vmatprep.subr.mxu0 0.0
    %1336 = vmatpush2.msra.mxu0 0.0
    %1337 = vmatprep.subr.mxu0 0.0
    %1338 = vmatpush2.msra.mxu0 0.0
    %1339 = vmatprep.subr.mxu0 0.0
    %1340 = vmatpush2.msra.mxu0 0.0
    %1341 = vmatprep.subr.mxu0 0.0
    %1342 = vmatpush2.msra.mxu0 0.0
    %1343 = vmatprep.subr.mxu0 0.0
    %1344 = vmatpush2.msra.mxu0 0.0
    %1345 = vmatprep.subr.mxu0 0.0
    %1346 = vmatpush2.msra.mxu0 0.0
    %1347 = vmatprep.subr.mxu0 0.0
    %1348 = vmatpush2.msra.mxu0 0.0
    %1349 = vmatprep.subr.mxu0 0.0
    %1350 = vmatpush2.msra.mxu0 0.0
    %1351 = vmatprep.subr.mxu0 0.0
    %1352 = vmatpush2.msra.mxu0 0.0
    %1353 = vmatprep.subr.mxu0 0.0
    %1354 = vmatpush2.msra.mxu0 0.0
    %1355 = vmatprep.subr.mxu0 0.0
    %1356 = vmatpush2.msra.mxu0 0.0
    %1357 = vmatprep.subr.mxu0 0.0
    %1358 = vmatpush2.msra.mxu0 0.0
    %1359 = vmatprep.subr.mxu0 0.0
    %1360 = vmatpush2.msra.mxu0 0.0
    %1361 = vmatprep.mubr.f32.mxu0 0.0
    %1362 = vmatmul.mubr.f32.gmra.mxu0 %v1292
    %v1363 = vpop.f32.mrf.mxu0
    %v1364 = vadd.f32 %v1289, %v1363
    %v1365 = vpop.f32.mrf.mxu0
    %1366 = vmatprep.mubr.f32.mxu0 0.0
    %1367 = vmatmul.mubr.f32.gmra.mxu0 %v1295
    %v1368 = vpop.f32.mrf.mxu0
    %v1369 = vadd.f32 %v1289, %v1368
    %v1370 = vpop.f32.mrf.mxu0
    %1371 = vdwg.mxu0
    %s1372 = scalar_lea.vmem %s6, 1
    %v1373 = vld [vmem:[%s1372] sm:$0x1]
    %s1374 = scalar_lea.vmem %s7, 1
    %v1375 = vld [vmem:[%s1374] sm:$0x1]
    %v1376 = vsel %vm166, %v1364, 0.0
    %v1377 = vsel %vm166, %v1369, 0.0
    %v1378 = vadd.f32 %v1376, %v1377
    %v1379 = vrot.slane %v1378, 4
    %v1380 = vadd.f32 %v1378, %v1379
    %v1381 = vrot.slane %v1380, 2
    %v1382 = vadd.f32 %v1380, %v1381
    %v1383 = vrot.slane %v1382, 1
    %v1384 = vadd.f32 %v1382, %v1383
    %v1385 = vmul.f32 %v1384, 0.0625
    %v1386 = vmul.f32 %v1364, %v1364
    %v1387 = vmul.f32 %v1369, %v1369
    %v1388 = vsel %vm166, %v1386, 0.0
    %v1389 = vsel %vm166, %v1387, 0.0
    %v1390 = vadd.f32 %v1388, %v1389
    %v1391 = vrot.slane %v1390, 4
    %v1392 = vadd.f32 %v1390, %v1391
    %v1393 = vrot.slane %v1392, 2
    %v1394 = vadd.f32 %v1392, %v1393
    %v1395 = vrot.slane %v1394, 1
    %v1396 = vadd.f32 %v1394, %v1395
    %v1397 = vmul.f32 %v1396, 0.0625
    %v1398 = vmul.f32 %v1385, %v1385
    %v1399 = vsub.f32 %v1397, %v1398
    %v1400 = vadd.f32 %v1399, 1e-05
    %v1401 = vrsqrt.pop %v1400
    %v1402 = vmul.f32 %v1400, %v1401
    %vm1403 = vcmp.eq.f32.partialorder %v1400, inf
    %v1404 = vsel %vm1403, %v1400, %v1402
    %vm1405 = vcmp.eq.f32.partialorder %v1400, 0.0
    %v1406 = vand.u32 %v1400, 2147483648
    %v1407 = vsel %vm1405, %v1406, %v1404
    %v1408 = vrcp.pop %v1407
    %v1409 = vmul.f32 %v1373, %v1408
    %v1410 = vsub.f32 %v1364, %v1385
    %v1411 = vsub.f32 %v1369, %v1385
    %v1413 = vlaneseq
    %v1414 = vshrl.u32 %v1413, 7
    %v1415 = vsub.s32 0, %v1414
    %v1416 = vrot.slane %v1409, %v1415
    %v1418 = vmul.f32 %v1410, %v1416
    %v1419 = vmul.f32 %v1411, %v1416
    %v1421 = vlaneseq
    %v1422 = vshrl.u32 %v1421, 7
    %v1423 = vsub.s32 0, %v1422
    %v1424 = vrot.slane %v1375, %v1423
    %v1426 = vadd.f32 %v1424, %v148
    %v1427 = vadd.f32 %v1424, %v149
    %v1428 = vadd.f32 %v1418, %v1426
    %v1429 = vadd.f32 %v1419, %v1427
    %v1430 = vld [vmem:[#allocation4] sm:$0xff]
    %v1431 = vld [vmem:[#allocation4 + $0x8] sm:$0xff]
    %v1432 = vld [vmem:[#allocation4 + $0x10] sm:$0xff]
    %v1433 = vld [vmem:[#allocation4 + $0x18] sm:$0xff]
    %v1434 = vld [vmem:[%s9] sm:$0x1]
    %v1435 = vld [vmem:[#allocation6] sm:$0xff]
    %v1436 = vld [vmem:[#allocation6 + $0x8] sm:$0xff]
    %v1437 = vld [vmem:[#allocation6 + $0x10] sm:$0xff]
    %v1438 = vld [vmem:[#allocation6 + $0x18] sm:$0xff]
    %v1439 = vld [vmem:[#allocation7] sm:$0x1]
    %v1441 = vlaneseq
    %v1442 = vshrl.u32 %v1441, 7
    %v1443 = vsub.s32 0, %v1442
    %v1444 = vrot.slane %v1434, %v1443
    %v1447 = vsel %vm166, %v786, 0
    %v1450 = vsel %vm166, %v787, 0
    %1452 = vmatprep.subr.mxu0 0.0
    %1453 = vmatpush1.msra.mxu0 0.0
    %1454 = vmatprep.subr.mxu0 0.0
    %1455 = vmatpush1.msra.mxu0 0.0
    %1456 = vmatprep.subr.mxu0 0.0
    %1457 = vmatpush1.msra.mxu0 0.0
    %1458 = vmatprep.subr.mxu0 0.0
    %1459 = vmatpush1.msra.mxu0 0.0
    %1460 = vmatprep.subr.mxu0 0.0
    %1461 = vmatpush1.msra.mxu0 0.0
    %1462 = vmatprep.subr.mxu0 0.0
    %1463 = vmatpush1.msra.mxu0 0.0
    %1464 = vmatprep.subr.mxu0 0.0
    %1465 = vmatpush1.msra.mxu0 0.0
    %1466 = vmatprep.subr.mxu0 0.0
    %1467 = vmatpush1.msra.mxu0 0.0
    %1468 = vmatprep.subr.mxu0 0.0
    %1469 = vmatpush1.msra.mxu0 0.0
    %1470 = vmatprep.subr.mxu0 0.0
    %1471 = vmatpush1.msra.mxu0 0.0
    %1472 = vmatprep.subr.mxu0 0.0
    %1473 = vmatpush1.msra.mxu0 0.0
    %1474 = vmatprep.subr.mxu0 0.0
    %1475 = vmatpush1.msra.mxu0 0.0
    %1476 = vmatprep.subr.mxu0 0.0
    %1477 = vmatpush1.msra.mxu0 %v1433
    %1478 = vmatprep.subr.mxu0 0.0
    %1479 = vmatpush1.msra.mxu0 %v1432
    %1480 = vmatprep.subr.mxu0 0.0
    %1481 = vmatpush1.msra.mxu0 %v1431
    %1482 = vmatprep.subr.mxu0 0.0
    %1483 = vmatpush1.msra.mxu0 %v1430
    %1484 = vmatprep.subr.mxu0 0.0
    %1485 = vmatpush2.msra.mxu0 0.0
    %1486 = vmatprep.subr.mxu0 0.0
    %1487 = vmatpush2.msra.mxu0 0.0
    %1488 = vmatprep.subr.mxu0 0.0
    %1489 = vmatpush2.msra.mxu0 0.0
    %1490 = vmatprep.subr.mxu0 0.0
    %1491 = vmatpush2.msra.mxu0 0.0
    %1492 = vmatprep.subr.mxu0 0.0
    %1493 = vmatpush2.msra.mxu0 0.0
    %1494 = vmatprep.subr.mxu0 0.0
    %1495 = vmatpush2.msra.mxu0 0.0
    %1496 = vmatprep.subr.mxu0 0.0
    %1497 = vmatpush2.msra.mxu0 0.0
    %1498 = vmatprep.subr.mxu0 0.0
    %1499 = vmatpush2.msra.mxu0 0.0
    %1500 = vmatprep.subr.mxu0 0.0
    %1501 = vmatpush2.msra.mxu0 0.0
    %1502 = vmatprep.subr.mxu0 0.0
    %1503 = vmatpush2.msra.mxu0 0.0
    %1504 = vmatprep.subr.mxu0 0.0
    %1505 = vmatpush2.msra.mxu0 0.0
    %1506 = vmatprep.subr.mxu0 0.0
    %1507 = vmatpush2.msra.mxu0 0.0
    %1508 = vmatprep.subr.mxu0 0.0
    %1509 = vmatpush2.msra.mxu0 0.0
    %1510 = vmatprep.subr.mxu0 0.0
    %1511 = vmatpush2.msra.mxu0 0.0
    %1512 = vmatprep.subr.mxu0 0.0
    %1513 = vmatpush2.msra.mxu0 0.0
    %1514 = vmatprep.subr.mxu0 0.0
    %1515 = vmatpush2.msra.mxu0 0.0
    %1516 = vmatprep.mubr.f32.mxu0 0.0
    %1517 = vmatmul.mubr.f32.gmra.mxu0 %v1447
    %v1518 = vpop.f32.mrf.mxu0
    %v1519 = vadd.f32 %v1444, %v1518
    %v1520 = vpop.f32.mrf.mxu0
    %1521 = vmatprep.mubr.f32.mxu0 0.0
    %1522 = vmatmul.mubr.f32.gmra.mxu0 %v1450
    %v1523 = vpop.f32.mrf.mxu0
    %v1524 = vadd.f32 %v1444, %v1523
    %v1525 = vpop.f32.mrf.mxu0
    %1526 = vdwg.mxu0
    %v1528 = vsel %vm166, %v1428, 0
    %v1531 = vsel %vm166, %v1429, 0
    %1533 = vmatprep.subr.mxu0 0.0
    %1534 = vmatpush1.msra.mxu0 0.0
    %1535 = vmatprep.subr.mxu0 0.0
    %1536 = vmatpush1.msra.mxu0 0.0
    %1537 = vmatprep.subr.mxu0 0.0
    %1538 = vmatpush1.msra.mxu0 0.0
    %1539 = vmatprep.subr.mxu0 0.0
    %1540 = vmatpush1.msra.mxu0 0.0
    %1541 = vmatprep.subr.mxu0 0.0
    %1542 = vmatpush1.msra.mxu0 0.0
    %1543 = vmatprep.subr.mxu0 0.0
    %1544 = vmatpush1.msra.mxu0 0.0
    %1545 = vmatprep.subr.mxu0 0.0
    %1546 = vmatpush1.msra.mxu0 0.0
    %1547 = vmatprep.subr.mxu0 0.0
    %1548 = vmatpush1.msra.mxu0 0.0
    %1549 = vmatprep.subr.mxu0 0.0
    %1550 = vmatpush1.msra.mxu0 0.0
    %1551 = vmatprep.subr.mxu0 0.0
    %1552 = vmatpush1.msra.mxu0 0.0
    %1553 = vmatprep.subr.mxu0 0.0
    %1554 = vmatpush1.msra.mxu0 0.0
    %1555 = vmatprep.subr.mxu0 0.0
    %1556 = vmatpush1.msra.mxu0 0.0
    %1557 = vmatprep.subr.mxu0 0.0
    %1558 = vmatpush1.msra.mxu0 %v1433
    %1559 = vmatprep.subr.mxu0 0.0
    %1560 = vmatpush1.msra.mxu0 %v1432
    %1561 = vmatprep.subr.mxu0 0.0
    %1562 = vmatpush1.msra.mxu0 %v1431
    %1563 = vmatprep.subr.mxu0 0.0
    %1564 = vmatpush1.msra.mxu0 %v1430
    %1565 = vmatprep.subr.mxu0 0.0
    %1566 = vmatpush2.msra.mxu0 0.0
    %1567 = vmatprep.subr.mxu0 0.0
    %1568 = vmatpush2.msra.mxu0 0.0
    %1569 = vmatprep.subr.mxu0 0.0
    %1570 = vmatpush2.msra.mxu0 0.0
    %1571 = vmatprep.subr.mxu0 0.0
    %1572 = vmatpush2.msra.mxu0 0.0
    %1573 = vmatprep.subr.mxu0 0.0
    %1574 = vmatpush2.msra.mxu0 0.0
    %1575 = vmatprep.subr.mxu0 0.0
    %1576 = vmatpush2.msra.mxu0 0.0
    %1577 = vmatprep.subr.mxu0 0.0
    %1578 = vmatpush2.msra.mxu0 0.0
    %1579 = vmatprep.subr.mxu0 0.0
    %1580 = vmatpush2.msra.mxu0 0.0
    %1581 = vmatprep.subr.mxu0 0.0
    %1582 = vmatpush2.msra.mxu0 0.0
    %1583 = vmatprep.subr.mxu0 0.0
    %1584 = vmatpush2.msra.mxu0 0.0
    %1585 = vmatprep.subr.mxu0 0.0
    %1586 = vmatpush2.msra.mxu0 0.0
    %1587 = vmatprep.subr.mxu0 0.0
    %1588 = vmatpush2.msra.mxu0 0.0
    %1589 = vmatprep.subr.mxu0 0.0
    %1590 = vmatpush2.msra.mxu0 0.0
    %1591 = vmatprep.subr.mxu0 0.0
    %1592 = vmatpush2.msra.mxu0 0.0
    %1593 = vmatprep.subr.mxu0 0.0
    %1594 = vmatpush2.msra.mxu0 0.0
    %1595 = vmatprep.subr.mxu0 0.0
    %1596 = vmatpush2.msra.mxu0 0.0
    %1597 = vmatprep.mubr.f32.mxu0 0.0
    %1598 = vmatmul.mubr.f32.gmra.mxu0 %v1528
    %v1599 = vpop.f32.mrf.mxu0
    %v1600 = vadd.f32 %v1444, %v1599
    %v1601 = vpop.f32.mrf.mxu0
    %1602 = vmatprep.mubr.f32.mxu0 0.0
    %1603 = vmatmul.mubr.f32.gmra.mxu0 %v1531
    %v1604 = vpop.f32.mrf.mxu0
    %v1605 = vadd.f32 %v1444, %v1604
    %v1606 = vpop.f32.mrf.mxu0
    %1607 = vdwg.mxu0
    %v1608 = vmul.f32 %v1519, %v138
    %v1609 = vmul.f32 %v1524, %v138
    %1612 = vrot.lane.b32.xlu0 %v1600, 96
    %v1613 = vpop.permute.xlu0 %1612
    %1614 = vrot.lane.b32.xlu0 %v1605, 96
    %v1615 = vpop.permute.xlu0 %1614
    %v1617 = vsel %vm166, %v1608, 0
    %v1620 = vsel %vm166, %v1609, 0
    %v1622 = vsel %vm166, %v1613, 0
    %v1624 = vsel %vm166, %v1615, 0
    %1626 = vmatprep.subr.mxu0 0.0
    %1627 = vmatpush1.xpose.msra.mxu0 0.0
    %1628 = vmatprep.subr.mxu0 0.0
    %1629 = vmatpush1.xpose.msra.mxu0 0.0
    %1630 = vmatprep.subr.mxu0 0.0
    %1631 = vmatpush1.xpose.msra.mxu0 0.0
    %1632 = vmatprep.subr.mxu0 0.0
    %1633 = vmatpush1.xpose.msra.mxu0 0.0
    %1634 = vmatprep.subr.mxu0 0.0
    %1635 = vmatpush1.xpose.msra.mxu0 0.0
    %1636 = vmatprep.subr.mxu0 0.0
    %1637 = vmatpush1.xpose.msra.mxu0 0.0
    %1638 = vmatprep.subr.mxu0 0.0
    %1639 = vmatpush1.xpose.msra.mxu0 0.0
    %1640 = vmatprep.subr.mxu0 0.0
    %1641 = vmatpush1.xpose.msra.mxu0 0.0
    %1642 = vmatprep.subr.mxu0 0.0
    %1643 = vmatpush1.xpose.msra.mxu0 0.0
    %1644 = vmatprep.subr.mxu0 0.0
    %1645 = vmatpush1.xpose.msra.mxu0 0.0
    %1646 = vmatprep.subr.mxu0 0.0
    %1647 = vmatpush1.xpose.msra.mxu0 0.0
    %1648 = vmatprep.subr.mxu0 0.0
    %1649 = vmatpush1.xpose.msra.mxu0 0.0
    %1650 = vmatprep.subr.mxu0 0.0
    %1651 = vmatpush1.xpose.msra.mxu0 0.0
    %1652 = vmatprep.subr.mxu0 0.0
    %1653 = vmatpush1.xpose.msra.mxu0 0.0
    %1654 = vmatprep.subr.mxu0 0.0
    %1655 = vmatpush1.xpose.msra.mxu0 %v1624
    %1656 = vmatprep.subr.mxu0 0.0
    %1657 = vmatpush1.xpose.msra.mxu0 %v1622
    %1658 = vmatprep.subr.mxu0 0.0
    %1659 = vmatpush2.xpose.msra.mxu0 0.0
    %1660 = vmatprep.subr.mxu0 0.0
    %1661 = vmatpush2.xpose.msra.mxu0 0.0
    %1662 = vmatprep.subr.mxu0 0.0
    %1663 = vmatpush2.xpose.msra.mxu0 0.0
    %1664 = vmatprep.subr.mxu0 0.0
    %1665 = vmatpush2.xpose.msra.mxu0 0.0
    %1666 = vmatprep.subr.mxu0 0.0
    %1667 = vmatpush2.xpose.msra.mxu0 0.0
    %1668 = vmatprep.subr.mxu0 0.0
    %1669 = vmatpush2.xpose.msra.mxu0 0.0
    %1670 = vmatprep.subr.mxu0 0.0
    %1671 = vmatpush2.xpose.msra.mxu0 0.0
    %1672 = vmatprep.subr.mxu0 0.0
    %1673 = vmatpush2.xpose.msra.mxu0 0.0
    %1674 = vmatprep.subr.mxu0 0.0
    %1675 = vmatpush2.xpose.msra.mxu0 0.0
    %1676 = vmatprep.subr.mxu0 0.0
    %1677 = vmatpush2.xpose.msra.mxu0 0.0
    %1678 = vmatprep.subr.mxu0 0.0
    %1679 = vmatpush2.xpose.msra.mxu0 0.0
    %1680 = vmatprep.subr.mxu0 0.0
    %1681 = vmatpush2.xpose.msra.mxu0 0.0
    %1682 = vmatprep.subr.mxu0 0.0
    %1683 = vmatpush2.xpose.msra.mxu0 0.0
    %1684 = vmatprep.subr.mxu0 0.0
    %1685 = vmatpush2.xpose.msra.mxu0 0.0
    %1686 = vmatprep.subr.mxu0 0.0
    %1687 = vmatpush2.xpose.msra.mxu0 0.0
    %1688 = vmatprep.subr.mxu0 0.0
    %1689 = vmatpush2.xpose.msra.mxu0 0.0
    %1690 = vmatprep.mubr.f32.mxu0 0.0
    %1691 = vmatmul.mubr.f32.gmra.mxu0 %v1617
    %v1692 = vpop.f32.mrf.mxu0
    %v1693 = vadd.f32 %v129, %v1692
    %v1694 = vpop.f32.mrf.mxu0
    %1695 = vmatprep.mubr.f32.mxu0 0.0
    %1696 = vmatmul.mubr.f32.gmra.mxu0 %v1620
    %v1697 = vpop.f32.mrf.mxu0
    %v1698 = vadd.f32 %v130, %v1697
    %v1699 = vpop.f32.mrf.mxu0
    %1700 = vdwg.mxu0
    %v1701 = vsel %vm341, %v1693, -inf
    %1702 = vmax.xlane.f32.xlu0 %v1701
    %v1703 = vpop.xlane.xlu0 %1702
    %v1704 = vsel %vm341, %v1698, -inf
    %1705 = vmax.xlane.f32.xlu0 %v1704
    %v1706 = vpop.xlane.xlu0 %1705
    %v1707 = vsub.f32 %v1693, %v1703
    %v1708 = vsub.f32 %v1698, %v1706
    %v1709 = vmul.f32 %v1707, 1.442695
    %v1710 = vpow.pop %v1709
    %v1711 = vmul.f32 %v1708, 1.442695
    %v1712 = vpow.pop %v1711
    %v1713 = vsel %vm341, %v1710, 0.0
    %1714 = vadd.xlane.f32.xlu0 %v1713
    %v1715 = vpop.xlane.xlu0 %1714
    %v1716 = vsel %vm341, %v1712, 0.0
    %1717 = vadd.xlane.f32.xlu0 %v1716
    %v1718 = vpop.xlane.xlu0 %1717
    %v1719 = vrcp.pop %v1715
    %v1720 = vmul.f32 %v1710, %v1719
    %v1721 = vrcp.pop %v1718
    %v1722 = vmul.f32 %v1712, %v1721
    %1723 = vrot.lane.b32.xlu0 %v1600, 64
    %v1724 = vpop.permute.xlu0 %1723
    %1725 = vrot.lane.b32.xlu0 %v1605, 64
    %v1726 = vpop.permute.xlu0 %1725
    %v1730 = vsel %vm341, %v1720, 0
    %v1733 = vsel %vm341, %v1722, 0
    %1735 = vmatprep.subr.mxu0 0.0
    %1736 = vmatpush1.msra.mxu0 0.0
    %1737 = vmatprep.subr.mxu0 0.0
    %1738 = vmatpush1.msra.mxu0 0.0
    %1739 = vmatprep.subr.mxu0 0.0
    %1740 = vmatpush1.msra.mxu0 0.0
    %1741 = vmatprep.subr.mxu0 0.0
    %1742 = vmatpush1.msra.mxu0 0.0
    %1743 = vmatprep.subr.mxu0 0.0
    %1744 = vmatpush1.msra.mxu0 0.0
    %1745 = vmatprep.subr.mxu0 0.0
    %1746 = vmatpush1.msra.mxu0 0.0
    %1747 = vmatprep.subr.mxu0 0.0
    %1748 = vmatpush1.msra.mxu0 0.0
    %1749 = vmatprep.subr.mxu0 0.0
    %1750 = vmatpush1.msra.mxu0 0.0
    %1751 = vmatprep.subr.mxu0 0.0
    %1752 = vmatpush1.msra.mxu0 0.0
    %1753 = vmatprep.subr.mxu0 0.0
    %1754 = vmatpush1.msra.mxu0 0.0
    %1755 = vmatprep.subr.mxu0 0.0
    %1756 = vmatpush1.msra.mxu0 0.0
    %1757 = vmatprep.subr.mxu0 0.0
    %1758 = vmatpush1.msra.mxu0 0.0
    %1759 = vmatprep.subr.mxu0 0.0
    %1760 = vmatpush1.msra.mxu0 0.0
    %1761 = vmatprep.subr.mxu0 0.0
    %1762 = vmatpush1.msra.mxu0 0.0
    %1763 = vmatprep.subr.mxu0 0.0
    %1764 = vmatpush1.msra.mxu0 %v1726
    %1765 = vmatprep.subr.mxu0 0.0
    %1766 = vmatpush1.msra.mxu0 %v1724
    %1767 = vmatprep.subr.mxu0 0.0
    %1768 = vmatpush2.msra.mxu0 0.0
    %1769 = vmatprep.subr.mxu0 0.0
    %1770 = vmatpush2.msra.mxu0 0.0
    %1771 = vmatprep.subr.mxu0 0.0
    %1772 = vmatpush2.msra.mxu0 0.0
    %1773 = vmatprep.subr.mxu0 0.0
    %1774 = vmatpush2.msra.mxu0 0.0
    %1775 = vmatprep.subr.mxu0 0.0
    %1776 = vmatpush2.msra.mxu0 0.0
    %1777 = vmatprep.subr.mxu0 0.0
    %1778 = vmatpush2.msra.mxu0 0.0
    %1779 = vmatprep.subr.mxu0 0.0
    %1780 = vmatpush2.msra.mxu0 0.0
    %1781 = vmatprep.subr.mxu0 0.0
    %1782 = vmatpush2.msra.mxu0 0.0
    %1783 = vmatprep.subr.mxu0 0.0
    %1784 = vmatpush2.msra.mxu0 0.0
    %1785 = vmatprep.subr.mxu0 0.0
    %1786 = vmatpush2.msra.mxu0 0.0
    %1787 = vmatprep.subr.mxu0 0.0
    %1788 = vmatpush2.msra.mxu0 0.0
    %1789 = vmatprep.subr.mxu0 0.0
    %1790 = vmatpush2.msra.mxu0 0.0
    %1791 = vmatprep.subr.mxu0 0.0
    %1792 = vmatpush2.msra.mxu0 0.0
    %1793 = vmatprep.subr.mxu0 0.0
    %1794 = vmatpush2.msra.mxu0 0.0
    %1795 = vmatprep.subr.mxu0 0.0
    %1796 = vmatpush2.msra.mxu0 0.0
    %1797 = vmatprep.subr.mxu0 0.0
    %1798 = vmatpush2.msra.mxu0 0.0
    %1799 = vmatprep.mubr.f32.mxu0 0.0
    %1800 = vmatmul.mubr.f32.gmra.mxu0 %v1730
    %v1801 = vpop.f32.mrf.mxu0
    %v1802 = vadd.f32 0.0, %v1801
    %v1803 = vpop.f32.mrf.mxu0
    %1804 = vmatprep.mubr.f32.mxu0 0.0
    %1805 = vmatmul.mubr.f32.gmra.mxu0 %v1733
    %v1806 = vpop.f32.mrf.mxu0
    %v1807 = vadd.f32 0.0, %v1806
    %v1808 = vpop.f32.mrf.mxu0
    %1809 = vdwg.mxu0
    %v1810 = vmul.f32 %v1802, %v137
    %v1811 = vmul.f32 %v1807, %v137
    %v1812 = vadd.f32 %v1810, 0.0
    %v1813 = vadd.f32 %v1811, 0.0
    %v1814 = vmul.f32 %v1519, %v144
    %v1815 = vmul.f32 %v1524, %v144
    %v1817 = vsel %vm166, %v1814, 0
    %v1820 = vsel %vm166, %v1815, 0
    %1822 = vmatprep.subr.mxu0 0.0
    %1823 = vmatpush1.xpose.msra.mxu0 0.0
    %1824 = vmatprep.subr.mxu0 0.0
    %1825 = vmatpush1.xpose.msra.mxu0 0.0
    %1826 = vmatprep.subr.mxu0 0.0
    %1827 = vmatpush1.xpose.msra.mxu0 0.0
    %1828 = vmatprep.subr.mxu0 0.0
    %1829 = vmatpush1.xpose.msra.mxu0 0.0
    %1830 = vmatprep.subr.mxu0 0.0
    %1831 = vmatpush1.xpose.msra.mxu0 0.0
    %1832 = vmatprep.subr.mxu0 0.0
    %1833 = vmatpush1.xpose.msra.mxu0 0.0
    %1834 = vmatprep.subr.mxu0 0.0
    %1835 = vmatpush1.xpose.msra.mxu0 0.0
    %1836 = vmatprep.subr.mxu0 0.0
    %1837 = vmatpush1.xpose.msra.mxu0 0.0
    %1838 = vmatprep.subr.mxu0 0.0
    %1839 = vmatpush1.xpose.msra.mxu0 0.0
    %1840 = vmatprep.subr.mxu0 0.0
    %1841 = vmatpush1.xpose.msra.mxu0 0.0
    %1842 = vmatprep.subr.mxu0 0.0
    %1843 = vmatpush1.xpose.msra.mxu0 0.0
    %1844 = vmatprep.subr.mxu0 0.0
    %1845 = vmatpush1.xpose.msra.mxu0 0.0
    %1846 = vmatprep.subr.mxu0 0.0
    %1847 = vmatpush1.xpose.msra.mxu0 0.0
    %1848 = vmatprep.subr.mxu0 0.0
    %1849 = vmatpush1.xpose.msra.mxu0 0.0
    %1850 = vmatprep.subr.mxu0 0.0
    %1851 = vmatpush1.xpose.msra.mxu0 %v1624
    %1852 = vmatprep.subr.mxu0 0.0
    %1853 = vmatpush1.xpose.msra.mxu0 %v1622
    %1854 = vmatprep.subr.mxu0 0.0
    %1855 = vmatpush2.xpose.msra.mxu0 0.0
    %1856 = vmatprep.subr.mxu0 0.0
    %1857 = vmatpush2.xpose.msra.mxu0 0.0
    %1858 = vmatprep.subr.mxu0 0.0
    %1859 = vmatpush2.xpose.msra.mxu0 0.0
    %1860 = vmatprep.subr.mxu0 0.0
    %1861 = vmatpush2.xpose.msra.mxu0 0.0
    %1862 = vmatprep.subr.mxu0 0.0
    %1863 = vmatpush2.xpose.msra.mxu0 0.0
    %1864 = vmatprep.subr.mxu0 0.0
    %1865 = vmatpush2.xpose.msra.mxu0 0.0
    %1866 = vmatprep.subr.mxu0 0.0
    %1867 = vmatpush2.xpose.msra.mxu0 0.0
    %1868 = vmatprep.subr.mxu0 0.0
    %1869 = vmatpush2.xpose.msra.mxu0 0.0
    %1870 = vmatprep.subr.mxu0 0.0
    %1871 = vmatpush2.xpose.msra.mxu0 0.0
    %1872 = vmatprep.subr.mxu0 0.0
    %1873 = vmatpush2.xpose.msra.mxu0 0.0
    %1874 = vmatprep.subr.mxu0 0.0
    %1875 = vmatpush2.xpose.msra.mxu0 0.0
    %1876 = vmatprep.subr.mxu0 0.0
    %1877 = vmatpush2.xpose.msra.mxu0 0.0
    %1878 = vmatprep.subr.mxu0 0.0
    %1879 = vmatpush2.xpose.msra.mxu0 0.0
    %1880 = vmatprep.subr.mxu0 0.0
    %1881 = vmatpush2.xpose.msra.mxu0 0.0
    %1882 = vmatprep.subr.mxu0 0.0
    %1883 = vmatpush2.xpose.msra.mxu0 0.0
    %1884 = vmatprep.subr.mxu0 0.0
    %1885 = vmatpush2.xpose.msra.mxu0 0.0
    %1886 = vmatprep.mubr.f32.mxu0 0.0
    %1887 = vmatmul.mubr.f32.gmra.mxu0 %v1817
    %v1888 = vpop.f32.mrf.mxu0
    %v1889 = vadd.f32 %v129, %v1888
    %v1890 = vpop.f32.mrf.mxu0
    %1891 = vmatprep.mubr.f32.mxu0 0.0
    %1892 = vmatmul.mubr.f32.gmra.mxu0 %v1820
    %v1893 = vpop.f32.mrf.mxu0
    %v1894 = vadd.f32 %v130, %v1893
    %v1895 = vpop.f32.mrf.mxu0
    %1896 = vdwg.mxu0
    %v1897 = vsel %vm341, %v1889, -inf
    %1898 = vmax.xlane.f32.xlu0 %v1897
    %v1899 = vpop.xlane.xlu0 %1898
    %v1900 = vsel %vm341, %v1894, -inf
    %1901 = vmax.xlane.f32.xlu0 %v1900
    %v1902 = vpop.xlane.xlu0 %1901
    %v1903 = vsub.f32 %v1889, %v1899
    %v1904 = vsub.f32 %v1894, %v1902
    %v1905 = vmul.f32 %v1903, 1.442695
    %v1906 = vpow.pop %v1905
    %v1907 = vmul.f32 %v1904, 1.442695
    %v1908 = vpow.pop %v1907
    %v1909 = vsel %vm341, %v1906, 0.0
    %1910 = vadd.xlane.f32.xlu0 %v1909
    %v1911 = vpop.xlane.xlu0 %1910
    %v1912 = vsel %vm341, %v1908, 0.0
    %1913 = vadd.xlane.f32.xlu0 %v1912
    %v1914 = vpop.xlane.xlu0 %1913
    %v1915 = vrcp.pop %v1911
    %v1916 = vmul.f32 %v1906, %v1915
    %v1917 = vrcp.pop %v1914
    %v1918 = vmul.f32 %v1908, %v1917
    %v1920 = vsel %vm341, %v1916, 0
    %v1923 = vsel %vm341, %v1918, 0
    %1925 = vmatprep.subr.mxu0 0.0
    %1926 = vmatpush1.msra.mxu0 0.0
    %1927 = vmatprep.subr.mxu0 0.0
    %1928 = vmatpush1.msra.mxu0 0.0
    %1929 = vmatprep.subr.mxu0 0.0
    %1930 = vmatpush1.msra.mxu0 0.0
    %1931 = vmatprep.subr.mxu0 0.0
    %1932 = vmatpush1.msra.mxu0 0.0
    %1933 = vmatprep.subr.mxu0 0.0
    %1934 = vmatpush1.msra.mxu0 0.0
    %1935 = vmatprep.subr.mxu0 0.0
    %1936 = vmatpush1.msra.mxu0 0.0
    %1937 = vmatprep.subr.mxu0 0.0
    %1938 = vmatpush1.msra.mxu0 0.0
    %1939 = vmatprep.subr.mxu0 0.0
    %1940 = vmatpush1.msra.mxu0 0.0
    %1941 = vmatprep.subr.mxu0 0.0
    %1942 = vmatpush1.msra.mxu0 0.0
    %1943 = vmatprep.subr.mxu0 0.0
    %1944 = vmatpush1.msra.mxu0 0.0
    %1945 = vmatprep.subr.mxu0 0.0
    %1946 = vmatpush1.msra.mxu0 0.0
    %1947 = vmatprep.subr.mxu0 0.0
    %1948 = vmatpush1.msra.mxu0 0.0
    %1949 = vmatprep.subr.mxu0 0.0
    %1950 = vmatpush1.msra.mxu0 0.0
    %1951 = vmatprep.subr.mxu0 0.0
    %1952 = vmatpush1.msra.mxu0 0.0
    %1953 = vmatprep.subr.mxu0 0.0
    %1954 = vmatpush1.msra.mxu0 %v1726
    %1955 = vmatprep.subr.mxu0 0.0
    %1956 = vmatpush1.msra.mxu0 %v1724
    %1957 = vmatprep.subr.mxu0 0.0
    %1958 = vmatpush2.msra.mxu0 0.0
    %1959 = vmatprep.subr.mxu0 0.0
    %1960 = vmatpush2.msra.mxu0 0.0
    %1961 = vmatprep.subr.mxu0 0.0
    %1962 = vmatpush2.msra.mxu0 0.0
    %1963 = vmatprep.subr.mxu0 0.0
    %1964 = vmatpush2.msra.mxu0 0.0
    %1965 = vmatprep.subr.mxu0 0.0
    %1966 = vmatpush2.msra.mxu0 0.0
    %1967 = vmatprep.subr.mxu0 0.0
    %1968 = vmatpush2.msra.mxu0 0.0
    %1969 = vmatprep.subr.mxu0 0.0
    %1970 = vmatpush2.msra.mxu0 0.0
    %1971 = vmatprep.subr.mxu0 0.0
    %1972 = vmatpush2.msra.mxu0 0.0
    %1973 = vmatprep.subr.mxu0 0.0
    %1974 = vmatpush2.msra.mxu0 0.0
    %1975 = vmatprep.subr.mxu0 0.0
    %1976 = vmatpush2.msra.mxu0 0.0
    %1977 = vmatprep.subr.mxu0 0.0
    %1978 = vmatpush2.msra.mxu0 0.0
    %1979 = vmatprep.subr.mxu0 0.0
    %1980 = vmatpush2.msra.mxu0 0.0
    %1981 = vmatprep.subr.mxu0 0.0
    %1982 = vmatpush2.msra.mxu0 0.0
    %1983 = vmatprep.subr.mxu0 0.0
    %1984 = vmatpush2.msra.mxu0 0.0
    %1985 = vmatprep.subr.mxu0 0.0
    %1986 = vmatpush2.msra.mxu0 0.0
    %1987 = vmatprep.subr.mxu0 0.0
    %1988 = vmatpush2.msra.mxu0 0.0
    %1989 = vmatprep.mubr.f32.mxu0 0.0
    %1990 = vmatmul.mubr.f32.gmra.mxu0 %v1920
    %v1991 = vpop.f32.mrf.mxu0
    %v1992 = vadd.f32 0.0, %v1991
    %v1993 = vpop.f32.mrf.mxu0
    %1994 = vmatprep.mubr.f32.mxu0 0.0
    %1995 = vmatmul.mubr.f32.gmra.mxu0 %v1923
    %v1996 = vpop.f32.mrf.mxu0
    %v1997 = vadd.f32 0.0, %v1996
    %v1998 = vpop.f32.mrf.mxu0
    %1999 = vdwg.mxu0
    %v2000 = vmul.f32 %v1992, %v143
    %v2001 = vmul.f32 %v1997, %v143
    %v2002 = vadd.f32 %v1812, %v2000
    %v2003 = vadd.f32 %v1813, %v2001
    %v2005 = vlaneseq
    %v2006 = vshrl.u32 %v2005, 7
    %v2007 = vsub.s32 0, %v2006
    %v2008 = vrot.slane %v1439, %v2007
    %v2011 = vsel %vm166, %v2002, 0
    %v2014 = vsel %vm166, %v2003, 0
    %2016 = vmatprep.subr.mxu0 0.0
    %2017 = vmatpush1.msra.mxu0 0.0
    %2018 = vmatprep.subr.mxu0 0.0
    %2019 = vmatpush1.msra.mxu0 0.0
    %2020 = vmatprep.subr.mxu0 0.0
    %2021 = vmatpush1.msra.mxu0 0.0
    %2022 = vmatprep.subr.mxu0 0.0
    %2023 = vmatpush1.msra.mxu0 0.0
    %2024 = vmatprep.subr.mxu0 0.0
    %2025 = vmatpush1.msra.mxu0 0.0
    %2026 = vmatprep.subr.mxu0 0.0
    %2027 = vmatpush1.msra.mxu0 0.0
    %2028 = vmatprep.subr.mxu0 0.0
    %2029 = vmatpush1.msra.mxu0 0.0
    %2030 = vmatprep.subr.mxu0 0.0
    %2031 = vmatpush1.msra.mxu0 0.0
    %2032 = vmatprep.subr.mxu0 0.0
    %2033 = vmatpush1.msra.mxu0 0.0
    %2034 = vmatprep.subr.mxu0 0.0
    %2035 = vmatpush1.msra.mxu0 0.0
    %2036 = vmatprep.subr.mxu0 0.0
    %2037 = vmatpush1.msra.mxu0 0.0
    %2038 = vmatprep.subr.mxu0 0.0
    %2039 = vmatpush1.msra.mxu0 0.0
    %2040 = vmatprep.subr.mxu0 0.0
    %2041 = vmatpush1.msra.mxu0 %v1438
    %2042 = vmatprep.subr.mxu0 0.0
    %2043 = vmatpush1.msra.mxu0 %v1437
    %2044 = vmatprep.subr.mxu0 0.0
    %2045 = vmatpush1.msra.mxu0 %v1436
    %2046 = vmatprep.subr.mxu0 0.0
    %2047 = vmatpush1.msra.mxu0 %v1435
    %2048 = vmatprep.subr.mxu0 0.0
    %2049 = vmatpush2.msra.mxu0 0.0
    %2050 = vmatprep.subr.mxu0 0.0
    %2051 = vmatpush2.msra.mxu0 0.0
    %2052 = vmatprep.subr.mxu0 0.0
    %2053 = vmatpush2.msra.mxu0 0.0
    %2054 = vmatprep.subr.mxu0 0.0
    %2055 = vmatpush2.msra.mxu0 0.0
    %2056 = vmatprep.subr.mxu0 0.0
    %2057 = vmatpush2.msra.mxu0 0.0
    %2058 = vmatprep.subr.mxu0 0.0
    %2059 = vmatpush2.msra.mxu0 0.0
    %2060 = vmatprep.subr.mxu0 0.0
    %2061 = vmatpush2.msra.mxu0 0.0
    %2062 = vmatprep.subr.mxu0 0.0
    %2063 = vmatpush2.msra.mxu0 0.0
    %2064 = vmatprep.subr.mxu0 0.0
    %2065 = vmatpush2.msra.mxu0 0.0
    %2066 = vmatprep.subr.mxu0 0.0
    %2067 = vmatpush2.msra.mxu0 0.0
    %2068 = vmatprep.subr.mxu0 0.0
    %2069 = vmatpush2.msra.mxu0 0.0
    %2070 = vmatprep.subr.mxu0 0.0
    %2071 = vmatpush2.msra.mxu0 0.0
    %2072 = vmatprep.subr.mxu0 0.0
    %2073 = vmatpush2.msra.mxu0 0.0
    %2074 = vmatprep.subr.mxu0 0.0
    %2075 = vmatpush2.msra.mxu0 0.0
    %2076 = vmatprep.subr.mxu0 0.0
    %2077 = vmatpush2.msra.mxu0 0.0
    %2078 = vmatprep.subr.mxu0 0.0
    %2079 = vmatpush2.msra.mxu0 0.0
    %2080 = vmatprep.mubr.f32.mxu0 0.0
    %2081 = vmatmul.mubr.f32.gmra.mxu0 %v2011
    %v2082 = vpop.f32.mrf.mxu0
    %v2083 = vadd.f32 %v2008, %v2082
    %v2084 = vpop.f32.mrf.mxu0
    %2085 = vmatprep.mubr.f32.mxu0 0.0
    %2086 = vmatmul.mubr.f32.gmra.mxu0 %v2014
    %v2087 = vpop.f32.mrf.mxu0
    %v2088 = vadd.f32 %v2008, %v2087
    %v2089 = vpop.f32.mrf.mxu0
    %2090 = vdwg.mxu0
    %v2091 = vld [vmem:[#allocation9] sm:$0x1]
    %v2092 = vld [vmem:[#allocation10] sm:$0x1]
    %v2093 = vsel %vm166, %v2083, 0.0
    %v2094 = vsel %vm166, %v2088, 0.0
    %v2095 = vadd.f32 %v2093, %v2094
    %v2096 = vrot.slane %v2095, 4
    %v2097 = vadd.f32 %v2095, %v2096
    %v2098 = vrot.slane %v2097, 2
    %v2099 = vadd.f32 %v2097, %v2098
    %v2100 = vrot.slane %v2099, 1
    %v2101 = vadd.f32 %v2099, %v2100
    %v2102 = vmul.f32 %v2101, 0.0625
    %v2103 = vmul.f32 %v2083, %v2083
    %v2104 = vmul.f32 %v2088, %v2088
    %v2105 = vsel %vm166, %v2103, 0.0
    %v2106 = vsel %vm166, %v2104, 0.0
    %v2107 = vadd.f32 %v2105, %v2106
    %v2108 = vrot.slane %v2107, 4
    %v2109 = vadd.f32 %v2107, %v2108
    %v2110 = vrot.slane %v2109, 2
    %v2111 = vadd.f32 %v2109, %v2110
    %v2112 = vrot.slane %v2111, 1
    %v2113 = vadd.f32 %v2111, %v2112
    %v2114 = vmul.f32 %v2113, 0.0625
    %v2115 = vmul.f32 %v2102, %v2102
    %v2116 = vsub.f32 %v2114, %v2115
    %v2117 = vadd.f32 %v2116, 1e-05
    %v2118 = vrsqrt.pop %v2117
    %v2119 = vmul.f32 %v2117, %v2118
    %vm2120 = vcmp.eq.f32.partialorder %v2117, inf
    %v2121 = vsel %vm2120, %v2117, %v2119
    %vm2122 = vcmp.eq.f32.partialorder %v2117, 0.0
    %v2123 = vand.u32 %v2117, 2147483648
    %v2124 = vsel %vm2122, %v2123, %v2121
    %v2125 = vrcp.pop %v2124
    %v2126 = vmul.f32 %v2091, %v2125
    %v2127 = vsub.f32 %v2083, %v2102
    %v2128 = vsub.f32 %v2088, %v2102
    %v2130 = vlaneseq
    %v2131 = vshrl.u32 %v2130, 7
    %v2132 = vsub.s32 0, %v2131
    %v2133 = vrot.slane %v2126, %v2132
    %v2135 = vmul.f32 %v2127, %v2133
    %v2136 = vmul.f32 %v2128, %v2133
    %v2138 = vlaneseq
    %v2139 = vshrl.u32 %v2138, 7
    %v2140 = vsub.s32 0, %v2139
    %v2141 = vrot.slane %v2092, %v2140
    %v2143 = vadd.f32 %v2141, %v786
    %v2144 = vadd.f32 %v2141, %v787
    %v2145 = vadd.f32 %v2135, %v2143
    %v2146 = vadd.f32 %v2136, %v2144
    %s2147 = scalar_lea.vmem [#allocation4], 32
    %v2148 = vld [vmem:[%s2147] sm:$0xff]
    %v2149 = vld [vmem:[%s2147 + $0x8] sm:$0xff]
    %v2150 = vld [vmem:[%s2147 + $0x10] sm:$0xff]
    %v2151 = vld [vmem:[%s2147 + $0x18] sm:$0xff]
    %s2152 = scalar_lea.vmem %s9, 1
    %v2153 = vld [vmem:[%s2152] sm:$0x1]
    %s2154 = scalar_lea.vmem [#allocation6], 32
    %v2155 = vld [vmem:[%s2154] sm:$0xff]
    %v2156 = vld [vmem:[%s2154 + $0x8] sm:$0xff]
    %v2157 = vld [vmem:[%s2154 + $0x10] sm:$0xff]
    %v2158 = vld [vmem:[%s2154 + $0x18] sm:$0xff]
    %s2159 = scalar_lea.vmem [#allocation7], 1
    %v2160 = vld [vmem:[%s2159] sm:$0x1]
    %v2162 = vlaneseq
    %v2163 = vshrl.u32 %v2162, 7
    %v2164 = vsub.s32 0, %v2163
    %v2165 = vrot.slane %v2153, %v2164
    %2167 = vmatprep.subr.mxu0 0.0
    %2168 = vmatpush1.msra.mxu0 0.0
    %2169 = vmatprep.subr.mxu0 0.0
    %2170 = vmatpush1.msra.mxu0 0.0
    %2171 = vmatprep.subr.mxu0 0.0
    %2172 = vmatpush1.msra.mxu0 0.0
    %2173 = vmatprep.subr.mxu0 0.0
    %2174 = vmatpush1.msra.mxu0 0.0
    %2175 = vmatprep.subr.mxu0 0.0
    %2176 = vmatpush1.msra.mxu0 0.0
    %2177 = vmatprep.subr.mxu0 0.0
    %2178 = vmatpush1.msra.mxu0 0.0
    %2179 = vmatprep.subr.mxu0 0.0
    %2180 = vmatpush1.msra.mxu0 0.0
    %2181 = vmatprep.subr.mxu0 0.0
    %2182 = vmatpush1.msra.mxu0 0.0
    %2183 = vmatprep.subr.mxu0 0.0
    %2184 = vmatpush1.msra.mxu0 0.0
    %2185 = vmatprep.subr.mxu0 0.0
    %2186 = vmatpush1.msra.mxu0 0.0
    %2187 = vmatprep.subr.mxu0 0.0
    %2188 = vmatpush1.msra.mxu0 0.0
    %2189 = vmatprep.subr.mxu0 0.0
    %2190 = vmatpush1.msra.mxu0 0.0
    %2191 = vmatprep.subr.mxu0 0.0
    %2192 = vmatpush1.msra.mxu0 %v2151
    %2193 = vmatprep.subr.mxu0 0.0
    %2194 = vmatpush1.msra.mxu0 %v2150
    %2195 = vmatprep.subr.mxu0 0.0
    %2196 = vmatpush1.msra.mxu0 %v2149
    %2197 = vmatprep.subr.mxu0 0.0
    %2198 = vmatpush1.msra.mxu0 %v2148
    %2199 = vmatprep.subr.mxu0 0.0
    %2200 = vmatpush2.msra.mxu0 0.0
    %2201 = vmatprep.subr.mxu0 0.0
    %2202 = vmatpush2.msra.mxu0 0.0
    %2203 = vmatprep.subr.mxu0 0.0
    %2204 = vmatpush2.msra.mxu0 0.0
    %2205 = vmatprep.subr.mxu0 0.0
    %2206 = vmatpush2.msra.mxu0 0.0
    %2207 = vmatprep.subr.mxu0 0.0
    %2208 = vmatpush2.msra.mxu0 0.0
    %2209 = vmatprep.subr.mxu0 0.0
    %2210 = vmatpush2.msra.mxu0 0.0
    %2211 = vmatprep.subr.mxu0 0.0
    %2212 = vmatpush2.msra.mxu0 0.0
    %2213 = vmatprep.subr.mxu0 0.0
    %2214 = vmatpush2.msra.mxu0 0.0
    %2215 = vmatprep.subr.mxu0 0.0
    %2216 = vmatpush2.msra.mxu0 0.0
    %2217 = vmatprep.subr.mxu0 0.0
    %2218 = vmatpush2.msra.mxu0 0.0
    %2219 = vmatprep.subr.mxu0 0.0
    %2220 = vmatpush2.msra.mxu0 0.0
    %2221 = vmatprep.subr.mxu0 0.0
    %2222 = vmatpush2.msra.mxu0 0.0
    %2223 = vmatprep.subr.mxu0 0.0
    %2224 = vmatpush2.msra.mxu0 0.0
    %2225 = vmatprep.subr.mxu0 0.0
    %2226 = vmatpush2.msra.mxu0 0.0
    %2227 = vmatprep.subr.mxu0 0.0
    %2228 = vmatpush2.msra.mxu0 0.0
    %2229 = vmatprep.subr.mxu0 0.0
    %2230 = vmatpush2.msra.mxu0 0.0
    %2231 = vmatprep.mubr.f32.mxu0 0.0
    %2232 = vmatmul.mubr.f32.gmra.mxu0 %v1528
    %v2233 = vpop.f32.mrf.mxu0
    %v2234 = vadd.f32 %v2165, %v2233
    %v2235 = vpop.f32.mrf.mxu0
    %2236 = vmatprep.mubr.f32.mxu0 0.0
    %2237 = vmatmul.mubr.f32.gmra.mxu0 %v1531
    %v2238 = vpop.f32.mrf.mxu0
    %v2239 = vadd.f32 %v2165, %v2238
    %v2240 = vpop.f32.mrf.mxu0
    %2241 = vdwg.mxu0
    %2242 = vmatprep.subr.mxu0 0.0
    %2243 = vmatpush1.msra.mxu0 0.0
    %2244 = vmatprep.subr.mxu0 0.0
    %2245 = vmatpush1.msra.mxu0 0.0
    %2246 = vmatprep.subr.mxu0 0.0
    %2247 = vmatpush1.msra.mxu0 0.0
    %2248 = vmatprep.subr.mxu0 0.0
    %2249 = vmatpush1.msra.mxu0 0.0
    %2250 = vmatprep.subr.mxu0 0.0
    %2251 = vmatpush1.msra.mxu0 0.0
    %2252 = vmatprep.subr.mxu0 0.0
    %2253 = vmatpush1.msra.mxu0 0.0
    %2254 = vmatprep.subr.mxu0 0.0
    %2255 = vmatpush1.msra.mxu0 0.0
    %2256 = vmatprep.subr.mxu0 0.0
    %2257 = vmatpush1.msra.mxu0 0.0
    %2258 = vmatprep.subr.mxu0 0.0
    %2259 = vmatpush1.msra.mxu0 0.0
    %2260 = vmatprep.subr.mxu0 0.0
    %2261 = vmatpush1.msra.mxu0 0.0
    %2262 = vmatprep.subr.mxu0 0.0
    %2263 = vmatpush1.msra.mxu0 0.0
    %2264 = vmatprep.subr.mxu0 0.0
    %2265 = vmatpush1.msra.mxu0 0.0
    %2266 = vmatprep.subr.mxu0 0.0
    %2267 = vmatpush1.msra.mxu0 %v2151
    %2268 = vmatprep.subr.mxu0 0.0
    %2269 = vmatpush1.msra.mxu0 %v2150
    %2270 = vmatprep.subr.mxu0 0.0
    %2271 = vmatpush1.msra.mxu0 %v2149
    %2272 = vmatprep.subr.mxu0 0.0
    %2273 = vmatpush1.msra.mxu0 %v2148
    %2274 = vmatprep.subr.mxu0 0.0
    %2275 = vmatpush2.msra.mxu0 0.0
    %2276 = vmatprep.subr.mxu0 0.0
    %2277 = vmatpush2.msra.mxu0 0.0
    %2278 = vmatprep.subr.mxu0 0.0
    %2279 = vmatpush2.msra.mxu0 0.0
    %2280 = vmatprep.subr.mxu0 0.0
    %2281 = vmatpush2.msra.mxu0 0.0
    %2282 = vmatprep.subr.mxu0 0.0
    %2283 = vmatpush2.msra.mxu0 0.0
    %2284 = vmatprep.subr.mxu0 0.0
    %2285 = vmatpush2.msra.mxu0 0.0
    %2286 = vmatprep.subr.mxu0 0.0
    %2287 = vmatpush2.msra.mxu0 0.0
    %2288 = vmatprep.subr.mxu0 0.0
    %2289 = vmatpush2.msra.mxu0 0.0
    %2290 = vmatprep.subr.mxu0 0.0
    %2291 = vmatpush2.msra.mxu0 0.0
    %2292 = vmatprep.subr.mxu0 0.0
    %2293 = vmatpush2.msra.mxu0 0.0
    %2294 = vmatprep.subr.mxu0 0.0
    %2295 = vmatpush2.msra.mxu0 0.0
    %2296 = vmatprep.subr.mxu0 0.0
    %2297 = vmatpush2.msra.mxu0 0.0
    %2298 = vmatprep.subr.mxu0 0.0
    %2299 = vmatpush2.msra.mxu0 0.0
    %2300 = vmatprep.subr.mxu0 0.0
    %2301 = vmatpush2.msra.mxu0 0.0
    %2302 = vmatprep.subr.mxu0 0.0
    %2303 = vmatpush2.msra.mxu0 0.0
    %2304 = vmatprep.subr.mxu0 0.0
    %2305 = vmatpush2.msra.mxu0 0.0
    %2306 = vmatprep.mubr.f32.mxu0 0.0
    %2307 = vmatmul.mubr.f32.gmra.mxu0 %v1447
    %v2308 = vpop.f32.mrf.mxu0
    %v2309 = vadd.f32 %v2165, %v2308
    %v2310 = vpop.f32.mrf.mxu0
    %2311 = vmatprep.mubr.f32.mxu0 0.0
    %2312 = vmatmul.mubr.f32.gmra.mxu0 %v1450
    %v2313 = vpop.f32.mrf.mxu0
    %v2314 = vadd.f32 %v2165, %v2313
    %v2315 = vpop.f32.mrf.mxu0
    %2316 = vdwg.mxu0
    %v2317 = vmul.f32 %v2234, %v138
    %v2318 = vmul.f32 %v2239, %v138
    %2321 = vrot.lane.b32.xlu0 %v2309, 96
    %v2322 = vpop.permute.xlu0 %2321
    %2323 = vrot.lane.b32.xlu0 %v2314, 96
    %v2324 = vpop.permute.xlu0 %2323
    %v2326 = vsel %vm166, %v2317, 0
    %v2329 = vsel %vm166, %v2318, 0
    %v2331 = vsel %vm166, %v2322, 0
    %v2333 = vsel %vm166, %v2324, 0
    %2335 = vmatprep.subr.mxu0 0.0
    %2336 = vmatpush1.xpose.msra.mxu0 0.0
    %2337 = vmatprep.subr.mxu0 0.0
    %2338 = vmatpush1.xpose.msra.mxu0 0.0
    %2339 = vmatprep.subr.mxu0 0.0
    %2340 = vmatpush1.xpose.msra.mxu0 0.0
    %2341 = vmatprep.subr.mxu0 0.0
    %2342 = vmatpush1.xpose.msra.mxu0 0.0
    %2343 = vmatprep.subr.mxu0 0.0
    %2344 = vmatpush1.xpose.msra.mxu0 0.0
    %2345 = vmatprep.subr.mxu0 0.0
    %2346 = vmatpush1.xpose.msra.mxu0 0.0
    %2347 = vmatprep.subr.mxu0 0.0
    %2348 = vmatpush1.xpose.msra.mxu0 0.0
    %2349 = vmatprep.subr.mxu0 0.0
    %2350 = vmatpush1.xpose.msra.mxu0 0.0
    %2351 = vmatprep.subr.mxu0 0.0
    %2352 = vmatpush1.xpose.msra.mxu0 0.0
    %2353 = vmatprep.subr.mxu0 0.0
    %2354 = vmatpush1.xpose.msra.mxu0 0.0
    %2355 = vmatprep.subr.mxu0 0.0
    %2356 = vmatpush1.xpose.msra.mxu0 0.0
    %2357 = vmatprep.subr.mxu0 0.0
    %2358 = vmatpush1.xpose.msra.mxu0 0.0
    %2359 = vmatprep.subr.mxu0 0.0
    %2360 = vmatpush1.xpose.msra.mxu0 0.0
    %2361 = vmatprep.subr.mxu0 0.0
    %2362 = vmatpush1.xpose.msra.mxu0 0.0
    %2363 = vmatprep.subr.mxu0 0.0
    %2364 = vmatpush1.xpose.msra.mxu0 %v2333
    %2365 = vmatprep.subr.mxu0 0.0
    %2366 = vmatpush1.xpose.msra.mxu0 %v2331
    %2367 = vmatprep.subr.mxu0 0.0
    %2368 = vmatpush2.xpose.msra.mxu0 0.0
    %2369 = vmatprep.subr.mxu0 0.0
    %2370 = vmatpush2.xpose.msra.mxu0 0.0
    %2371 = vmatprep.subr.mxu0 0.0
    %2372 = vmatpush2.xpose.msra.mxu0 0.0
    %2373 = vmatprep.subr.mxu0 0.0
    %2374 = vmatpush2.xpose.msra.mxu0 0.0
    %2375 = vmatprep.subr.mxu0 0.0
    %2376 = vmatpush2.xpose.msra.mxu0 0.0
    %2377 = vmatprep.subr.mxu0 0.0
    %2378 = vmatpush2.xpose.msra.mxu0 0.0
    %2379 = vmatprep.subr.mxu0 0.0
    %2380 = vmatpush2.xpose.msra.mxu0 0.0
    %2381 = vmatprep.subr.mxu0 0.0
    %2382 = vmatpush2.xpose.msra.mxu0 0.0
    %2383 = vmatprep.subr.mxu0 0.0
    %2384 = vmatpush2.xpose.msra.mxu0 0.0
    %2385 = vmatprep.subr.mxu0 0.0
    %2386 = vmatpush2.xpose.msra.mxu0 0.0
    %2387 = vmatprep.subr.mxu0 0.0
    %2388 = vmatpush2.xpose.msra.mxu0 0.0
    %2389 = vmatprep.subr.mxu0 0.0
    %2390 = vmatpush2.xpose.msra.mxu0 0.0
    %2391 = vmatprep.subr.mxu0 0.0
    %2392 = vmatpush2.xpose.msra.mxu0 0.0
    %2393 = vmatprep.subr.mxu0 0.0
    %2394 = vmatpush2.xpose.msra.mxu0 0.0
    %2395 = vmatprep.subr.mxu0 0.0
    %2396 = vmatpush2.xpose.msra.mxu0 0.0
    %2397 = vmatprep.subr.mxu0 0.0
    %2398 = vmatpush2.xpose.msra.mxu0 0.0
    %2399 = vmatprep.mubr.f32.mxu0 0.0
    %2400 = vmatmul.mubr.f32.gmra.mxu0 %v2326
    %v2401 = vpop.f32.mrf.mxu0
    %v2402 = vadd.f32 %v129, %v2401
    %v2403 = vpop.f32.mrf.mxu0
    %2404 = vmatprep.mubr.f32.mxu0 0.0
    %2405 = vmatmul.mubr.f32.gmra.mxu0 %v2329
    %v2406 = vpop.f32.mrf.mxu0
    %v2407 = vadd.f32 %v130, %v2406
    %v2408 = vpop.f32.mrf.mxu0
    %2409 = vdwg.mxu0
    %v2410 = vsel %vm341, %v2402, -inf
    %2411 = vmax.xlane.f32.xlu0 %v2410
    %v2412 = vpop.xlane.xlu0 %2411
    %v2413 = vsel %vm341, %v2407, -inf
    %2414 = vmax.xlane.f32.xlu0 %v2413
    %v2415 = vpop.xlane.xlu0 %2414
    %v2416 = vsub.f32 %v2402, %v2412
    %v2417 = vsub.f32 %v2407, %v2415
    %v2418 = vmul.f32 %v2416, 1.442695
    %v2419 = vpow.pop %v2418
    %v2420 = vmul.f32 %v2417, 1.442695
    %v2421 = vpow.pop %v2420
    %v2422 = vsel %vm341, %v2419, 0.0
    %2423 = vadd.xlane.f32.xlu0 %v2422
    %v2424 = vpop.xlane.xlu0 %2423
    %v2425 = vsel %vm341, %v2421, 0.0
    %2426 = vadd.xlane.f32.xlu0 %v2425
    %v2427 = vpop.xlane.xlu0 %2426
    %v2428 = vrcp.pop %v2424
    %v2429 = vmul.f32 %v2419, %v2428
    %v2430 = vrcp.pop %v2427
    %v2431 = vmul.f32 %v2421, %v2430
    %2432 = vrot.lane.b32.xlu0 %v2309, 64
    %v2433 = vpop.permute.xlu0 %2432
    %2434 = vrot.lane.b32.xlu0 %v2314, 64
    %v2435 = vpop.permute.xlu0 %2434
    %v2439 = vsel %vm341, %v2429, 0
    %v2442 = vsel %vm341, %v2431, 0
    %2444 = vmatprep.subr.mxu0 0.0
    %2445 = vmatpush1.msra.mxu0 0.0
    %2446 = vmatprep.subr.mxu0 0.0
    %2447 = vmatpush1.msra.mxu0 0.0
    %2448 = vmatprep.subr.mxu0 0.0
    %2449 = vmatpush1.msra.mxu0 0.0
    %2450 = vmatprep.subr.mxu0 0.0
    %2451 = vmatpush1.msra.mxu0 0.0
    %2452 = vmatprep.subr.mxu0 0.0
    %2453 = vmatpush1.msra.mxu0 0.0
    %2454 = vmatprep.subr.mxu0 0.0
    %2455 = vmatpush1.msra.mxu0 0.0
    %2456 = vmatprep.subr.mxu0 0.0
    %2457 = vmatpush1.msra.mxu0 0.0
    %2458 = vmatprep.subr.mxu0 0.0
    %2459 = vmatpush1.msra.mxu0 0.0
    %2460 = vmatprep.subr.mxu0 0.0
    %2461 = vmatpush1.msra.mxu0 0.0
    %2462 = vmatprep.subr.mxu0 0.0
    %2463 = vmatpush1.msra.mxu0 0.0
    %2464 = vmatprep.subr.mxu0 0.0
    %2465 = vmatpush1.msra.mxu0 0.0
    %2466 = vmatprep.subr.mxu0 0.0
    %2467 = vmatpush1.msra.mxu0 0.0
    %2468 = vmatprep.subr.mxu0 0.0
    %2469 = vmatpush1.msra.mxu0 0.0
    %2470 = vmatprep.subr.mxu0 0.0
    %2471 = vmatpush1.msra.mxu0 0.0
    %2472 = vmatprep.subr.mxu0 0.0
    %2473 = vmatpush1.msra.mxu0 %v2435
    %2474 = vmatprep.subr.mxu0 0.0
    %2475 = vmatpush1.msra.mxu0 %v2433
    %2476 = vmatprep.subr.mxu0 0.0
    %2477 = vmatpush2.msra.mxu0 0.0
    %2478 = vmatprep.subr.mxu0 0.0
    %2479 = vmatpush2.msra.mxu0 0.0
    %2480 = vmatprep.subr.mxu0 0.0
    %2481 = vmatpush2.msra.mxu0 0.0
    %2482 = vmatprep.subr.mxu0 0.0
    %2483 = vmatpush2.msra.mxu0 0.0
    %2484 = vmatprep.subr.mxu0 0.0
    %2485 = vmatpush2.msra.mxu0 0.0
    %2486 = vmatprep.subr.mxu0 0.0
    %2487 = vmatpush2.msra.mxu0 0.0
    %2488 = vmatprep.subr.mxu0 0.0
    %2489 = vmatpush2.msra.mxu0 0.0
    %2490 = vmatprep.subr.mxu0 0.0
    %2491 = vmatpush2.msra.mxu0 0.0
    %2492 = vmatprep.subr.mxu0 0.0
    %2493 = vmatpush2.msra.mxu0 0.0
    %2494 = vmatprep.subr.mxu0 0.0
    %2495 = vmatpush2.msra.mxu0 0.0
    %2496 = vmatprep.subr.mxu0 0.0
    %2497 = vmatpush2.msra.mxu0 0.0
    %2498 = vmatprep.subr.mxu0 0.0
    %2499 = vmatpush2.msra.mxu0 0.0
    %2500 = vmatprep.subr.mxu0 0.0
    %2501 = vmatpush2.msra.mxu0 0.0
    %2502 = vmatprep.subr.mxu0 0.0
    %2503 = vmatpush2.msra.mxu0 0.0
    %2504 = vmatprep.subr.mxu0 0.0
    %2505 = vmatpush2.msra.mxu0 0.0
    %2506 = vmatprep.subr.mxu0 0.0
    %2507 = vmatpush2.msra.mxu0 0.0
    %2508 = vmatprep.mubr.f32.mxu0 0.0
    %2509 = vmatmul.mubr.f32.gmra.mxu0 %v2439
    %v2510 = vpop.f32.mrf.mxu0
    %v2511 = vadd.f32 0.0, %v2510
    %v2512 = vpop.f32.mrf.mxu0
    %2513 = vmatprep.mubr.f32.mxu0 0.0
    %2514 = vmatmul.mubr.f32.gmra.mxu0 %v2442
    %v2515 = vpop.f32.mrf.mxu0
    %v2516 = vadd.f32 0.0, %v2515
    %v2517 = vpop.f32.mrf.mxu0
    %2518 = vdwg.mxu0
    %v2519 = vmul.f32 %v2511, %v137
    %v2520 = vmul.f32 %v2516, %v137
    %v2521 = vadd.f32 %v2519, 0.0
    %v2522 = vadd.f32 %v2520, 0.0
    %v2523 = vmul.f32 %v2234, %v144
    %v2524 = vmul.f32 %v2239, %v144
    %v2526 = vsel %vm166, %v2523, 0
    %v2529 = vsel %vm166, %v2524, 0
    %2531 = vmatprep.subr.mxu0 0.0
    %2532 = vmatpush1.xpose.msra.mxu0 0.0
    %2533 = vmatprep.subr.mxu0 0.0
    %2534 = vmatpush1.xpose.msra.mxu0 0.0
    %2535 = vmatprep.subr.mxu0 0.0
    %2536 = vmatpush1.xpose.msra.mxu0 0.0
    %2537 = vmatprep.subr.mxu0 0.0
    %2538 = vmatpush1.xpose.msra.mxu0 0.0
    %2539 = vmatprep.subr.mxu0 0.0
    %2540 = vmatpush1.xpose.msra.mxu0 0.0
    %2541 = vmatprep.subr.mxu0 0.0
    %2542 = vmatpush1.xpose.msra.mxu0 0.0
    %2543 = vmatprep.subr.mxu0 0.0
    %2544 = vmatpush1.xpose.msra.mxu0 0.0
    %2545 = vmatprep.subr.mxu0 0.0
    %2546 = vmatpush1.xpose.msra.mxu0 0.0
    %2547 = vmatprep.subr.mxu0 0.0
    %2548 = vmatpush1.xpose.msra.mxu0 0.0
    %2549 = vmatprep.subr.mxu0 0.0
    %2550 = vmatpush1.xpose.msra.mxu0 0.0
    %2551 = vmatprep.subr.mxu0 0.0
    %2552 = vmatpush1.xpose.msra.mxu0 0.0
    %2553 = vmatprep.subr.mxu0 0.0
    %2554 = vmatpush1.xpose.msra.mxu0 0.0
    %2555 = vmatprep.subr.mxu0 0.0
    %2556 = vmatpush1.xpose.msra.mxu0 0.0
    %2557 = vmatprep.subr.mxu0 0.0
    %2558 = vmatpush1.xpose.msra.mxu0 0.0
    %2559 = vmatprep.subr.mxu0 0.0
    %2560 = vmatpush1.xpose.msra.mxu0 %v2333
    %2561 = vmatprep.subr.mxu0 0.0
    %2562 = vmatpush1.xpose.msra.mxu0 %v2331
    %2563 = vmatprep.subr.mxu0 0.0
    %2564 = vmatpush2.xpose.msra.mxu0 0.0
    %2565 = vmatprep.subr.mxu0 0.0
    %2566 = vmatpush2.xpose.msra.mxu0 0.0
    %2567 = vmatprep.subr.mxu0 0.0
    %2568 = vmatpush2.xpose.msra.mxu0 0.0
    %2569 = vmatprep.subr.mxu0 0.0
    %2570 = vmatpush2.xpose.msra.mxu0 0.0
    %2571 = vmatprep.subr.mxu0 0.0
    %2572 = vmatpush2.xpose.msra.mxu0 0.0
    %2573 = vmatprep.subr.mxu0 0.0
    %2574 = vmatpush2.xpose.msra.mxu0 0.0
    %2575 = vmatprep.subr.mxu0 0.0
    %2576 = vmatpush2.xpose.msra.mxu0 0.0
    %2577 = vmatprep.subr.mxu0 0.0
    %2578 = vmatpush2.xpose.msra.mxu0 0.0
    %2579 = vmatprep.subr.mxu0 0.0
    %2580 = vmatpush2.xpose.msra.mxu0 0.0
    %2581 = vmatprep.subr.mxu0 0.0
    %2582 = vmatpush2.xpose.msra.mxu0 0.0
    %2583 = vmatprep.subr.mxu0 0.0
    %2584 = vmatpush2.xpose.msra.mxu0 0.0
    %2585 = vmatprep.subr.mxu0 0.0
    %2586 = vmatpush2.xpose.msra.mxu0 0.0
    %2587 = vmatprep.subr.mxu0 0.0
    %2588 = vmatpush2.xpose.msra.mxu0 0.0
    %2589 = vmatprep.subr.mxu0 0.0
    %2590 = vmatpush2.xpose.msra.mxu0 0.0
    %2591 = vmatprep.subr.mxu0 0.0
    %2592 = vmatpush2.xpose.msra.mxu0 0.0
    %2593 = vmatprep.subr.mxu0 0.0
    %2594 = vmatpush2.xpose.msra.mxu0 0.0
    %2595 = vmatprep.mubr.f32.mxu0 0.0
    %2596 = vmatmul.mubr.f32.gmra.mxu0 %v2526
    %v2597 = vpop.f32.mrf.mxu0
    %v2598 = vadd.f32 %v129, %v2597
    %v2599 = vpop.f32.mrf.mxu0
    %2600 = vmatprep.mubr.f32.mxu0 0.0
    %2601 = vmatmul.mubr.f32.gmra.mxu0 %v2529
    %v2602 = vpop.f32.mrf.mxu0
    %v2603 = vadd.f32 %v130, %v2602
    %v2604 = vpop.f32.mrf.mxu0
    %2605 = vdwg.mxu0
    %v2606 = vsel %vm341, %v2598, -inf
    %2607 = vmax.xlane.f32.xlu0 %v2606
    %v2608 = vpop.xlane.xlu0 %2607
    %v2609 = vsel %vm341, %v2603, -inf
    %2610 = vmax.xlane.f32.xlu0 %v2609
    %v2611 = vpop.xlane.xlu0 %2610
    %v2612 = vsub.f32 %v2598, %v2608
    %v2613 = vsub.f32 %v2603, %v2611
    %v2614 = vmul.f32 %v2612, 1.442695
    %v2615 = vpow.pop %v2614
    %v2616 = vmul.f32 %v2613, 1.442695
    %v2617 = vpow.pop %v2616
    %v2618 = vsel %vm341, %v2615, 0.0
    %2619 = vadd.xlane.f32.xlu0 %v2618
    %v2620 = vpop.xlane.xlu0 %2619
    %v2621 = vsel %vm341, %v2617, 0.0
    %2622 = vadd.xlane.f32.xlu0 %v2621
    %v2623 = vpop.xlane.xlu0 %2622
    %v2624 = vrcp.pop %v2620
    %v2625 = vmul.f32 %v2615, %v2624
    %v2626 = vrcp.pop %v2623
    %v2627 = vmul.f32 %v2617, %v2626
    %v2629 = vsel %vm341, %v2625, 0
    %v2632 = vsel %vm341, %v2627, 0
    %2634 = vmatprep.subr.mxu0 0.0
    %2635 = vmatpush1.msra.mxu0 0.0
    %2636 = vmatprep.subr.mxu0 0.0
    %2637 = vmatpush1.msra.mxu0 0.0
    %2638 = vmatprep.subr.mxu0 0.0
    %2639 = vmatpush1.msra.mxu0 0.0
    %2640 = vmatprep.subr.mxu0 0.0
    %2641 = vmatpush1.msra.mxu0 0.0
    %2642 = vmatprep.subr.mxu0 0.0
    %2643 = vmatpush1.msra.mxu0 0.0
    %2644 = vmatprep.subr.mxu0 0.0
    %2645 = vmatpush1.msra.mxu0 0.0
    %2646 = vmatprep.subr.mxu0 0.0
    %2647 = vmatpush1.msra.mxu0 0.0
    %2648 = vmatprep.subr.mxu0 0.0
    %2649 = vmatpush1.msra.mxu0 0.0
    %2650 = vmatprep.subr.mxu0 0.0
    %2651 = vmatpush1.msra.mxu0 0.0
    %2652 = vmatprep.subr.mxu0 0.0
    %2653 = vmatpush1.msra.mxu0 0.0
    %2654 = vmatprep.subr.mxu0 0.0
    %2655 = vmatpush1.msra.mxu0 0.0
    %2656 = vmatprep.subr.mxu0 0.0
    %2657 = vmatpush1.msra.mxu0 0.0
    %2658 = vmatprep.subr.mxu0 0.0
    %2659 = vmatpush1.msra.mxu0 0.0
    %2660 = vmatprep.subr.mxu0 0.0
    %2661 = vmatpush1.msra.mxu0 0.0
    %2662 = vmatprep.subr.mxu0 0.0
    %2663 = vmatpush1.msra.mxu0 %v2435
    %2664 = vmatprep.subr.mxu0 0.0
    %2665 = vmatpush1.msra.mxu0 %v2433
    %2666 = vmatprep.subr.mxu0 0.0
    %2667 = vmatpush2.msra.mxu0 0.0
    %2668 = vmatprep.subr.mxu0 0.0
    %2669 = vmatpush2.msra.mxu0 0.0
    %2670 = vmatprep.subr.mxu0 0.0
    %2671 = vmatpush2.msra.mxu0 0.0
    %2672 = vmatprep.subr.mxu0 0.0
    %2673 = vmatpush2.msra.mxu0 0.0
    %2674 = vmatprep.subr.mxu0 0.0
    %2675 = vmatpush2.msra.mxu0 0.0
    %2676 = vmatprep.subr.mxu0 0.0
    %2677 = vmatpush2.msra.mxu0 0.0
    %2678 = vmatprep.subr.mxu0 0.0
    %2679 = vmatpush2.msra.mxu0 0.0
    %2680 = vmatprep.subr.mxu0 0.0
    %2681 = vmatpush2.msra.mxu0 0.0
    %2682 = vmatprep.subr.mxu0 0.0
    %2683 = vmatpush2.msra.mxu0 0.0
    %2684 = vmatprep.subr.mxu0 0.0
    %2685 = vmatpush2.msra.mxu0 0.0
    %2686 = vmatprep.subr.mxu0 0.0
    %2687 = vmatpush2.msra.mxu0 0.0
    %2688 = vmatprep.subr.mxu0 0.0
    %2689 = vmatpush2.msra.mxu0 0.0
    %2690 = vmatprep.subr.mxu0 0.0
    %2691 = vmatpush2.msra.mxu0 0.0
    %2692 = vmatprep.subr.mxu0 0.0
    %2693 = vmatpush2.msra.mxu0 0.0
    %2694 = vmatprep.subr.mxu0 0.0
    %2695 = vmatpush2.msra.mxu0 0.0
    %2696 = vmatprep.subr.mxu0 0.0
    %2697 = vmatpush2.msra.mxu0 0.0
    %2698 = vmatprep.mubr.f32.mxu0 0.0
    %2699 = vmatmul.mubr.f32.gmra.mxu0 %v2629
    %v2700 = vpop.f32.mrf.mxu0
    %v2701 = vadd.f32 0.0, %v2700
    %v2702 = vpop.f32.mrf.mxu0
    %2703 = vmatprep.mubr.f32.mxu0 0.0
    %2704 = vmatmul.mubr.f32.gmra.mxu0 %v2632
    %v2705 = vpop.f32.mrf.mxu0
    %v2706 = vadd.f32 0.0, %v2705
    %v2707 = vpop.f32.mrf.mxu0
    %2708 = vdwg.mxu0
    %v2709 = vmul.f32 %v2701, %v143
    %v2710 = vmul.f32 %v2706, %v143
    %v2711 = vadd.f32 %v2521, %v2709
    %v2712 = vadd.f32 %v2522, %v2710
    %v2714 = vlaneseq
    %v2715 = vshrl.u32 %v2714, 7
    %v2716 = vsub.s32 0, %v2715
    %v2717 = vrot.slane %v2160, %v2716
    %v2720 = vsel %vm166, %v2711, 0
    %v2723 = vsel %vm166, %v2712, 0
    %2725 = vmatprep.subr.mxu0 0.0
    %2726 = vmatpush1.msra.mxu0 0.0
    %2727 = vmatprep.subr.mxu0 0.0
    %2728 = vmatpush1.msra.mxu0 0.0
    %2729 = vmatprep.subr.mxu0 0.0
    %2730 = vmatpush1.msra.mxu0 0.0
    %2731 = vmatprep.subr.mxu0 0.0
    %2732 = vmatpush1.msra.mxu0 0.0
    %2733 = vmatprep.subr.mxu0 0.0
    %2734 = vmatpush1.msra.mxu0 0.0
    %2735 = vmatprep.subr.mxu0 0.0
    %2736 = vmatpush1.msra.mxu0 0.0
    %2737 = vmatprep.subr.mxu0 0.0
    %2738 = vmatpush1.msra.mxu0 0.0
    %2739 = vmatprep.subr.mxu0 0.0
    %2740 = vmatpush1.msra.mxu0 0.0
    %2741 = vmatprep.subr.mxu0 0.0
    %2742 = vmatpush1.msra.mxu0 0.0
    %2743 = vmatprep.subr.mxu0 0.0
    %2744 = vmatpush1.msra.mxu0 0.0
    %2745 = vmatprep.subr.mxu0 0.0
    %2746 = vmatpush1.msra.mxu0 0.0
    %2747 = vmatprep.subr.mxu0 0.0
    %2748 = vmatpush1.msra.mxu0 0.0
    %2749 = vmatprep.subr.mxu0 0.0
    %2750 = vmatpush1.msra.mxu0 %v2158
    %2751 = vmatprep.subr.mxu0 0.0
    %2752 = vmatpush1.msra.mxu0 %v2157
    %2753 = vmatprep.subr.mxu0 0.0
    %2754 = vmatpush1.msra.mxu0 %v2156
    %2755 = vmatprep.subr.mxu0 0.0
    %2756 = vmatpush1.msra.mxu0 %v2155
    %2757 = vmatprep.subr.mxu0 0.0
    %2758 = vmatpush2.msra.mxu0 0.0
    %2759 = vmatprep.subr.mxu0 0.0
    %2760 = vmatpush2.msra.mxu0 0.0
    %2761 = vmatprep.subr.mxu0 0.0
    %2762 = vmatpush2.msra.mxu0 0.0
    %2763 = vmatprep.subr.mxu0 0.0
    %2764 = vmatpush2.msra.mxu0 0.0
    %2765 = vmatprep.subr.mxu0 0.0
    %2766 = vmatpush2.msra.mxu0 0.0
    %2767 = vmatprep.subr.mxu0 0.0
    %2768 = vmatpush2.msra.mxu0 0.0
    %2769 = vmatprep.subr.mxu0 0.0
    %2770 = vmatpush2.msra.mxu0 0.0
    %2771 = vmatprep.subr.mxu0 0.0
    %2772 = vmatpush2.msra.mxu0 0.0
    %2773 = vmatprep.subr.mxu0 0.0
    %2774 = vmatpush2.msra.mxu0 0.0
    %2775 = vmatprep.subr.mxu0 0.0
    %2776 = vmatpush2.msra.mxu0 0.0
    %2777 = vmatprep.subr.mxu0 0.0
    %2778 = vmatpush2.msra.mxu0 0.0
    %2779 = vmatprep.subr.mxu0 0.0
    %2780 = vmatpush2.msra.mxu0 0.0
    %2781 = vmatprep.subr.mxu0 0.0
    %2782 = vmatpush2.msra.mxu0 0.0
    %2783 = vmatprep.subr.mxu0 0.0
    %2784 = vmatpush2.msra.mxu0 0.0
    %2785 = vmatprep.subr.mxu0 0.0
    %2786 = vmatpush2.msra.mxu0 0.0
    %2787 = vmatprep.subr.mxu0 0.0
    %2788 = vmatpush2.msra.mxu0 0.0
    %2789 = vmatprep.mubr.f32.mxu0 0.0
    %2790 = vmatmul.mubr.f32.gmra.mxu0 %v2720
    %v2791 = vpop.f32.mrf.mxu0
    %v2792 = vadd.f32 %v2717, %v2791
    %v2793 = vpop.f32.mrf.mxu0
    %2794 = vmatprep.mubr.f32.mxu0 0.0
    %2795 = vmatmul.mubr.f32.gmra.mxu0 %v2723
    %v2796 = vpop.f32.mrf.mxu0
    %v2797 = vadd.f32 %v2717, %v2796
    %v2798 = vpop.f32.mrf.mxu0
    %2799 = vdwg.mxu0
    %s2800 = scalar_lea.vmem [#allocation9], 1
    %v2801 = vld [vmem:[%s2800] sm:$0x1]
    %s2802 = scalar_lea.vmem [#allocation10], 1
    %v2803 = vld [vmem:[%s2802] sm:$0x1]
    %v2804 = vsel %vm166, %v2792, 0.0
    %v2805 = vsel %vm166, %v2797, 0.0
    %v2806 = vadd.f32 %v2804, %v2805
    %v2807 = vrot.slane %v2806, 4
    %v2808 = vadd.f32 %v2806, %v2807
    %v2809 = vrot.slane %v2808, 2
    %v2810 = vadd.f32 %v2808, %v2809
    %v2811 = vrot.slane %v2810, 1
    %v2812 = vadd.f32 %v2810, %v2811
    %v2813 = vmul.f32 %v2812, 0.0625
    %v2814 = vmul.f32 %v2792, %v2792
    %v2815 = vmul.f32 %v2797, %v2797
    %v2816 = vsel %vm166, %v2814, 0.0
    %v2817 = vsel %vm166, %v2815, 0.0
    %v2818 = vadd.f32 %v2816, %v2817
    %v2819 = vrot.slane %v2818, 4
    %v2820 = vadd.f32 %v2818, %v2819
    %v2821 = vrot.slane %v2820, 2
    %v2822 = vadd.f32 %v2820, %v2821
    %v2823 = vrot.slane %v2822, 1
    %v2824 = vadd.f32 %v2822, %v2823
    %v2825 = vmul.f32 %v2824, 0.0625
    %v2826 = vmul.f32 %v2813, %v2813
    %v2827 = vsub.f32 %v2825, %v2826
    %v2828 = vadd.f32 %v2827, 1e-05
    %v2829 = vrsqrt.pop %v2828
    %v2830 = vmul.f32 %v2828, %v2829
    %vm2831 = vcmp.eq.f32.partialorder %v2828, inf
    %v2832 = vsel %vm2831, %v2828, %v2830
    %vm2833 = vcmp.eq.f32.partialorder %v2828, 0.0
    %v2834 = vand.u32 %v2828, 2147483648
    %v2835 = vsel %vm2833, %v2834, %v2832
    %v2836 = vrcp.pop %v2835
    %v2837 = vmul.f32 %v2801, %v2836
    %v2838 = vsub.f32 %v2792, %v2813
    %v2839 = vsub.f32 %v2797, %v2813
    %v2841 = vlaneseq
    %v2842 = vshrl.u32 %v2841, 7
    %v2843 = vsub.s32 0, %v2842
    %v2844 = vrot.slane %v2837, %v2843
    %v2846 = vmul.f32 %v2838, %v2844
    %v2847 = vmul.f32 %v2839, %v2844
    %v2849 = vlaneseq
    %v2850 = vshrl.u32 %v2849, 7
    %v2851 = vsub.s32 0, %v2850
    %v2852 = vrot.slane %v2803, %v2851
    %v2854 = vadd.f32 %v2852, %v1428
    %v2855 = vadd.f32 %v2852, %v1429
    %v2856 = vadd.f32 %v2846, %v2854
    %v2857 = vadd.f32 %v2847, %v2855
    %2858 = vst.msk [vmem:[%s14] sm:$0xff] %vm166, %v2145
    %2859 = vst.msk [vmem:[%s14 + $0x8] sm:$0xff] %vm166, %v2146
    %s2860 = scalar_lea.vmem %s14, 16
    %2861 = vst.msk [vmem:[%s2860] sm:$0xff] %vm166, %v2856
    %2862 = vst.msk [vmem:[%s2860 + $0x8] sm:$0xff] %vm166, %v2857
    // Predicated region
    $region82: #{attention_layer_forward.1} parent=1 // pred_check
      _
    $region83: #{attention_layer_forward.1} parent=1 // pred_check_branch
      %2864 = sbr.rel (0) target = $region85
    $region84: #{attention_layer_forward.1} parent=1 // pred_region
      _
    $region85: #{attention_layer_forward.1} parent=1 // pred_fallthru
      _
    // Predicated region
    $region86: #{attention_layer_forward.1} parent=1 // pred_check
      _
    $region87: #{attention_layer_forward.1} parent=1 // pred_check_branch
      %2866 = sbr.rel (0) target = $region89
    $region88: #{attention_layer_forward.1} parent=1 // pred_region
      _
    $region89: #{attention_layer_forward.1} parent=1 // pred_fallthru
      _
    %2867 = vsyncpa [#allocation3], 1
    %2868 = vsyncpa [#allocation5], 1
    %2869 = vsyncpa [#allocation8], 1
    %2870 = vsyncpa [#allocation11], 1

</llo_original>
